<compile_context>
chip_gen: v6e
topology: v6e:2x2x1
jax: 0.10.0
libtpu: 0.0.40
codegen_flags: <defaults>
</compile_context>

<pallas_src>
import functools

import jax
import jax.numpy as jnp
from jax.experimental import pallas as pl
from jax.experimental.pallas import tpu as pltpu


def _round_up(x, m):
    return (x + m - 1) // m * m


def _padded_bytes(shape, bytes_per_elem=4):
    """Rough VMEM footprint of an f32 buffer with (8,128) layout padding."""
    s = list(shape)
    s[-1] = _round_up(s[-1], 128)
    if len(s) >= 2:
        s[-2] = _round_up(s[-2], 8)
    n = 1
    for d in s:
        n *= d
    return bytes_per_elem * n


def _conv2d_block_kernel(x_ref, w_ref, o_ref, *scratch,
                         C_in, H, W, KH, KW, stride, padding,
                         H_out, W_out, C_out_pad, norm, activation,
                         eps=1e-5, neg_slope=0.2):
    """One grid step == one chunk of NB batch elements.

    x_ref    : (NB, H, W, C_in)              NHWC input chunk (VMEM)
    w_ref    : (KH*KW*C_in, C_out_pad)       im2col weight, lane-dense (VMEM)
    o_ref    : (NB, H_out*W_out, C_out_pad)  lane-dense output chunk (VMEM)
    scratch  : optional (NB, H_pad, W_pad, C_in) zero-padded input scratch
    """
    NB = x_ref.shape[0]
    M = NB * H_out * W_out

    # ---- in-kernel zero padding (no wrapper-side jnp.pad HBM pass) --------
    if padding > 0:
        xpad_ref = scratch[0]
        xpad_ref[...] = jnp.zeros(xpad_ref.shape, xpad_ref.dtype)
        xpad_ref[:, padding:padding + H, padding:padding + W, :] = x_ref[...]
        src = xpad_ref
    else:
        src = x_ref

    # ---- im2col: slice the Ref per tap, fold all taps into the K axis -----
    pieces = []
    for kh in range(KH):
        for kw in range(KW):
            if stride == 1:
                patch = src[:, kh:kh + H_out, kw:kw + W_out, :]
            else:
                patch = src[:, pl.ds(kh, H_out, stride),
                            pl.ds(kw, W_out, stride), :]
            pieces.append(patch.reshape(M, C_in))          # (M, C_in)
    col = pieces[0] if len(pieces) == 1 else jnp.concatenate(pieces, axis=-1)

    # ---- single MXU matmul: (M, KH*KW*C_in) @ (KH*KW*C_in, 128), f32 acc --
    out = jnp.dot(col, w_ref[...], preferred_element_type=jnp.float32)
    out = out.reshape(NB, H_out * W_out, C_out_pad)

    # ---- normalization (f32 epilogue; padded channels stay harmless) ------
    if norm == "instance_norm":
        # InstanceNorm2d(affine=False): per-(n, c) stats over H*W, biased var.
        mean = jnp.mean(out, axis=1, keepdims=True)
        var = jnp.mean((out - mean) ** 2, axis=1, keepdims=True)
        out = (out - mean) * jax.lax.rsqrt(var + eps)
    elif norm == "batch_norm":
        # BatchNorm2d training-mode batch statistics (gamma=1, beta=0 init).
        mean = jnp.mean(out, axis=(0, 1), keepdims=True)
        var = jnp.mean((out - mean) ** 2, axis=(0, 1), keepdims=True)
        out = (out - mean) * jax.lax.rsqrt(var + eps)

    # ---- activation --------------------------------------------------------
    if activation == "relu":
        out = jnp.maximum(out, 0.0)
    elif activation == "leakyReLU":
        out = jnp.where(out > 0, out, neg_slope * out)
    elif activation == "sigmoid":
        out = jax.nn.sigmoid(out)

    # Lane-dense store: last dim is a full 128-lane multiple.
    o_ref[...] = out.astype(o_ref.dtype)


def conv2d_block(x_nchw, weight_oihw, *, stride=1, padding=0,
                 norm="none", activation="none"):
    """Pallas implementation of Conv2dBlock.forward (bias=False)."""
    x = x_nchw.astype(jnp.float32)                     # matches y = x.float()
    N, C_in, H, W = x.shape
    C_out, _, KH, KW = weight_oihw.shape

    H_pad, W_pad = H + 2 * padding, W + 2 * padding
    H_out = (H_pad - KH) // stride + 1
    W_out = (W_pad - KW) // stride + 1
    C_out_pad = _round_up(max(C_out, 128), 128)        # lane-dense output
    K = KH * KW * C_in

    if norm == "none":
        norm_kind = "none"
    elif norm == "instance_norm":
        norm_kind = "instance_norm"
    else:
        norm_kind = "batch_norm"   # module maps any other string to BatchNorm2d

    # NCHW -> NHWC so channels ride the 128-lane axis inside the kernel.
    # TODO(synk): express this relayout via strided DMA / in-kernel transpose
    # to save one HBM pass on large inputs.
    x_nhwc = jnp.transpose(x, (0, 2, 3, 1))

    # OIHW -> (KH*KW*C_in, C_out_pad) im2col weight, zero-padded to 128 lanes
    # (tiny one-time prep; flatten order matches the kernel's tap order).
    w_mat = jnp.transpose(weight_oihw.astype(jnp.float32), (2, 3, 1, 0))
    w_mat = w_mat.reshape(K, C_out)
    w_mat = jnp.pad(w_mat, ((0, 0), (0, C_out_pad - C_out)))

    # ---- batch-chunk size: fold as much batch as fits a portable budget ---
    def step_bytes(nb):
        b = 0
        b += 2 * _padded_bytes((nb, H, W, C_in))              # input (dbl-buf)
        b += 2 * _padded_bytes((K, C_out_pad))                # weight
        b += 2 * _padded_bytes((nb, H_out * W_out, C_out_pad))  # output
        b += _padded_bytes((nb, H_pad, W_pad, C_in))          # pad scratch
        b += 2 * _padded_bytes((nb * H_out * W_out, K))       # im2col value
        b += _padded_bytes((nb * H_out * W_out, C_out_pad))   # matmul result
        return b

    budget = 24 * 2 ** 20                 # conservative (v7x: 64 MiB physical)
    NB = N
    if norm_kind != "batch_norm":         # batch stats need the whole batch
        while NB > 1 and (N % NB != 0 or step_bytes(NB) > budget):
            NB -= 1
    # TODO(synk): batch_norm with a batch too large for one VMEM step needs a
    # two-pass cross-step statistics accumulator; spatial/C_out tiling for very
    # large H*W*C (v7x 64 MiB VMEM) is likewise left out of this kernel.

    grid = (N // NB,)
    kernel = functools.partial(
        _conv2d_block_kernel,
        C_in=C_in, H=H, W=W, KH=KH, KW=KW, stride=stride, padding=padding,
        H_out=H_out, W_out=W_out, C_out_pad=C_out_pad,
        norm=norm_kind, activation=activation)

    scratch_shapes = []
    if padding > 0:
        scratch_shapes.append(pltpu.VMEM((NB, H_pad, W_pad, C_in), jnp.float32))

    cost = pl.CostEstimate(
        flops=2 * N * H_out * W_out * K * C_out,
        transcendentals=(N * H_out * W_out * C_out
                         if activation == "sigmoid" else 0),
        bytes_accessed=4 * (int(x.size) + int(w_mat.size)
                            + N * H_out * W_out * C_out_pad))

    vmem_limit = int(min(40 * 2 ** 20, max(16 * 2 ** 20, 2 * step_bytes(NB))))

    out_flat = pl.pallas_call(
        kernel,
        out_shape=jax.ShapeDtypeStruct((N, H_out * W_out, C_out_pad),
                                       jnp.float32),
        grid_spec=pltpu.PrefetchScalarGridSpec(
            num_scalar_prefetch=0,
            grid=grid,
            in_specs=[
                pl.BlockSpec((NB, H, W, C_in), lambda b: (b, 0, 0, 0)),
                pl.BlockSpec((K, C_out_pad), lambda b: (0, 0)),
            ],
            out_specs=pl.BlockSpec((NB, H_out * W_out, C_out_pad),
                                   lambda b: (b, 0, 0)),
            scratch_shapes=scratch_shapes,
        ),
        compiler_params=pltpu.CompilerParams(
            dimension_semantics=("parallel",),
            vmem_limit_bytes=vmem_limit),
        cost_estimate=cost,
    )(x_nhwc, w_mat)

    out = out_flat.reshape(N, H_out, W_out, C_out_pad)[..., :C_out]
    return jnp.transpose(out, (0, 3, 1, 2))            # NHWC -> NCHW


def _reference(x, weight, *, stride, padding, norm, activation):
    out = jax.lax.conv_general_dilated(
        x.astype(jnp.float32), weight.astype(jnp.float32),
        window_strides=(stride, stride),
        padding=((padding, padding), (padding, padding)),
        dimension_numbers=("NCHW", "OIHW", "NCHW"))
    if norm == "instance_norm":
        mean = out.mean(axis=(2, 3), keepdims=True)
        var = ((out - mean) ** 2).mean(axis=(2, 3), keepdims=True)
        out = (out - mean) / jnp.sqrt(var + 1e-5)
    elif norm != "none":
        mean = out.mean(axis=(0, 2, 3), keepdims=True)
        var = ((out - mean) ** 2).mean(axis=(0, 2, 3), keepdims=True)
        out = (out - mean) / jnp.sqrt(var + 1e-5)
    if activation == "relu":
        out = jnp.maximum(out, 0.0)
    elif activation == "leakyReLU":
        out = jnp.where(out > 0, out, 0.2 * out)
    elif activation == "sigmoid":
        out = jax.nn.sigmoid(out)
    return out


if __name__ == "__main__":
    # Conv2dBlock(input_dim=4, output_dim=8, kernel_size=3, stride=1,
    #             padding=1, norm='instance_norm', activation='leakyReLU')
    N, C_in, H, W = 2, 4, 16, 16
    C_out, Ksz, stride, padding = 8, 3, 1, 1
    norm, activation = "instance_norm", "leakyReLU"

    key = jax.random.PRNGKey(0)
    kx, kw = jax.random.split(key)
    x = jax.random.normal(kx, (N, C_in, H, W), dtype=jnp.float32)
    weight = 0.1 * jax.random.normal(kw, (C_out, C_in, Ksz, Ksz),
                                     dtype=jnp.float32)

    out = conv2d_block(x, weight, stride=stride, padding=padding,
                       norm=norm, activation=activation)
    out = jax.block_until_ready(out)

    ref = _reference(x, weight, stride=stride, padding=padding,
                     norm=norm, activation=activation)
    assert out.shape == ref.shape == (N, C_out, H, W)
    err = float(jnp.max(jnp.abs(out - ref)))
    assert err < 1e-3, err

    print("KERNEL_OK")
</pallas_src>

<mosaic_0001>
module attributes {stable_mosaic.version = 11 : i64} {
  func.func @_conv2d_block_kernel(%arg0: i32, %arg1: memref<2x16x16x4xf32, #tpu.memory_space<vmem>>, %arg2: memref<36x128xf32, #tpu.memory_space<vmem>>, %arg3: memref<2x256x128xf32, #tpu.memory_space<vmem>>, %arg4: memref<2x18x18x4xf32, #tpu.memory_space<vmem>>) attributes {dimension_semantics = [#tpu.dimension_semantics<parallel>], iteration_bounds = array<i64: 1>, scalar_prefetch = 0 : i64, scratch_operands = 1 : i64, tpu.core_type = #tpu.core_type<tc>, window_params = [{transform_indices = @transform_0, window_bounds = array<i64: 2, 16, 16, 4>}, {pipeline_mode = #tpu.pipeline_mode<synchronous>, transform_indices = @transform_1, window_bounds = array<i64: 36, 128>}, {transform_indices = @transform_2, window_bounds = array<i64: 2, 256, 128>}]} {
    %cst = arith.constant 0.000000e+00 : f32
    %0 = vector.broadcast %cst : f32 to vector<2x18x18x4xf32>
    %c0 = arith.constant 0 : index
    %c0_0 = arith.constant 0 : index
    %c0_1 = arith.constant 0 : index
    %c0_2 = arith.constant 0 : index
    %1 = vector.load %arg4[%c0, %c0_0, %c0_1, %c0_2] : memref<2x18x18x4xf32, #tpu.memory_space<vmem>>, vector<2x18x18x4xf32>
    tpu.vector_store %arg4[%c0, %c0_0, %c0_1, %c0_2], %0 {strides = array<i32>} : memref<2x18x18x4xf32, #tpu.memory_space<vmem>>, vector<2x18x18x4xf32>,
    %c0_3 = arith.constant 0 : index
    %c0_4 = arith.constant 0 : index
    %c0_5 = arith.constant 0 : index
    %c0_6 = arith.constant 0 : index
    %2 = vector.load %arg1[%c0_3, %c0_4, %c0_5, %c0_6] : memref<2x16x16x4xf32, #tpu.memory_space<vmem>>, vector<2x16x16x4xf32>
    %c0_7 = arith.constant 0 : index
    %c1 = arith.constant 1 : index
    %c1_8 = arith.constant 1 : index
    %c0_9 = arith.constant 0 : index
    %3 = vector.load %arg4[%c0_7, %c1, %c1_8, %c0_9] : memref<2x18x18x4xf32, #tpu.memory_space<vmem>>, vector<2x16x16x4xf32>
    tpu.vector_store %arg4[%c0_7, %c1, %c1_8, %c0_9], %2 {strides = array<i32>} : memref<2x18x18x4xf32, #tpu.memory_space<vmem>>, vector<2x16x16x4xf32>,
    %c0_10 = arith.constant 0 : index
    %c0_11 = arith.constant 0 : index
    %c0_12 = arith.constant 0 : index
    %c0_13 = arith.constant 0 : index
    %4 = vector.load %arg4[%c0_10, %c0_11, %c0_12, %c0_13] : memref<2x18x18x4xf32, #tpu.memory_space<vmem>>, vector<2x16x16x4xf32>
    %5 = vector.shape_cast %4 : vector<2x16x16x4xf32> to vector<512x4xf32>
    %c0_14 = arith.constant 0 : index
    %c0_15 = arith.constant 0 : index
    %c1_16 = arith.constant 1 : index
    %c0_17 = arith.constant 0 : index
    %6 = vector.load %arg4[%c0_14, %c0_15, %c1_16, %c0_17] : memref<2x18x18x4xf32, #tpu.memory_space<vmem>>, vector<2x16x16x4xf32>
    %7 = vector.shape_cast %6 : vector<2x16x16x4xf32> to vector<512x4xf32>
    %c0_18 = arith.constant 0 : index
    %c0_19 = arith.constant 0 : index
    %c2 = arith.constant 2 : index
    %c0_20 = arith.constant 0 : index
    %8 = vector.load %arg4[%c0_18, %c0_19, %c2, %c0_20] : memref<2x18x18x4xf32, #tpu.memory_space<vmem>>, vector<2x16x16x4xf32>
    %9 = vector.shape_cast %8 : vector<2x16x16x4xf32> to vector<512x4xf32>
    %c0_21 = arith.constant 0 : index
    %c1_22 = arith.constant 1 : index
    %c0_23 = arith.constant 0 : index
    %c0_24 = arith.constant 0 : index
    %10 = vector.load %arg4[%c0_21, %c1_22, %c0_23, %c0_24] : memref<2x18x18x4xf32, #tpu.memory_space<vmem>>, vector<2x16x16x4xf32>
    %11 = vector.shape_cast %10 : vector<2x16x16x4xf32> to vector<512x4xf32>
    %c0_25 = arith.constant 0 : index
    %c1_26 = arith.constant 1 : index
    %c1_27 = arith.constant 1 : index
    %c0_28 = arith.constant 0 : index
    %12 = vector.load %arg4[%c0_25, %c1_26, %c1_27, %c0_28] : memref<2x18x18x4xf32, #tpu.memory_space<vmem>>, vector<2x16x16x4xf32>
    %13 = vector.shape_cast %12 : vector<2x16x16x4xf32> to vector<512x4xf32>
    %c0_29 = arith.constant 0 : index
    %c1_30 = arith.constant 1 : index
    %c2_31 = arith.constant 2 : index
    %c0_32 = arith.constant 0 : index
    %14 = vector.load %arg4[%c0_29, %c1_30, %c2_31, %c0_32] : memref<2x18x18x4xf32, #tpu.memory_space<vmem>>, vector<2x16x16x4xf32>
    %15 = vector.shape_cast %14 : vector<2x16x16x4xf32> to vector<512x4xf32>
    %c0_33 = arith.constant 0 : index
    %c2_34 = arith.constant 2 : index
    %c0_35 = arith.constant 0 : index
    %c0_36 = arith.constant 0 : index
    %16 = vector.load %arg4[%c0_33, %c2_34, %c0_35, %c0_36] : memref<2x18x18x4xf32, #tpu.memory_space<vmem>>, vector<2x16x16x4xf32>
    %17 = vector.shape_cast %16 : vector<2x16x16x4xf32> to vector<512x4xf32>
    %c0_37 = arith.constant 0 : index
    %c2_38 = arith.constant 2 : index
    %c1_39 = arith.constant 1 : index
    %c0_40 = arith.constant 0 : index
    %18 = vector.load %arg4[%c0_37, %c2_38, %c1_39, %c0_40] : memref<2x18x18x4xf32, #tpu.memory_space<vmem>>, vector<2x16x16x4xf32>
    %19 = vector.shape_cast %18 : vector<2x16x16x4xf32> to vector<512x4xf32>
    %c0_41 = arith.constant 0 : index
    %c2_42 = arith.constant 2 : index
    %c2_43 = arith.constant 2 : index
    %c0_44 = arith.constant 0 : index
    %20 = vector.load %arg4[%c0_41, %c2_42, %c2_43, %c0_44] : memref<2x18x18x4xf32, #tpu.memory_space<vmem>>, vector<2x16x16x4xf32>
    %21 = vector.shape_cast %20 : vector<2x16x16x4xf32> to vector<512x4xf32>
    %22 = tpu.concatenate %5, %7, %9, %11, %13, %15, %17, %19, %21 in 1 : vector<512x4xf32>, vector<512x4xf32>, vector<512x4xf32>, vector<512x4xf32>, vector<512x4xf32>, vector<512x4xf32>, vector<512x4xf32>, vector<512x4xf32>, vector<512x4xf32> -> vector<512x36xf32>
    %c0_45 = arith.constant 0 : index
    %c0_46 = arith.constant 0 : index
    %23 = vector.load %arg2[%c0_45, %c0_46] : memref<36x128xf32, #tpu.memory_space<vmem>>, vector<36x128xf32>
    %cst_47 = arith.constant dense<0.000000e+00> : vector<512x128xf32>
    %24 = tpu.matmul %22, %23, %cst_47 {dimension_numbers = #tpu.dot_dimension_numbers<[1], [0], [0], [1], [0, 0, 1, 1], [], []>} : vector<512x36xf32>, vector<36x128xf32>, vector<512x128xf32> -> vector<512x128xf32>
    %25 = vector.shape_cast %24 : vector<512x128xf32> to vector<2x256x128xf32>
    %cst_48 = arith.constant dense<0.000000e+00> : vector<2x128xf32>
    %26 = vector.multi_reduction <add>, %25, %cst_48 [1] : vector<2x256x128xf32> to vector<2x128xf32>
    %27 = vector.shape_cast %26 : vector<2x128xf32> to vector<2x1x128xf32>
    %cst_49 = arith.constant 2.560000e+02 : f32
    %28 = vector.broadcast %cst_49 : f32 to vector<2x1x128xf32>
    %29 = arith.divf %27, %28 : vector<2x1x128xf32>
    %30 = vector.broadcast %29 : vector<2x1x128xf32> to vector<2x256x128xf32>
    %31 = arith.subf %25, %30 : vector<2x256x128xf32>
    %32 = arith.mulf %31, %31 : vector<2x256x128xf32>
    %cst_50 = arith.constant dense<0.000000e+00> : vector<2x128xf32>
    %33 = vector.multi_reduction <add>, %32, %cst_50 [1] : vector<2x256x128xf32> to vector<2x128xf32>
    %34 = vector.shape_cast %33 : vector<2x128xf32> to vector<2x1x128xf32>
    %cst_51 = arith.constant 2.560000e+02 : f32
    %35 = vector.broadcast %cst_51 : f32 to vector<2x1x128xf32>
    %36 = arith.divf %34, %35 : vector<2x1x128xf32>
    %37 = vector.broadcast %29 : vector<2x1x128xf32> to vector<2x256x128xf32>
    %38 = arith.subf %25, %37 : vector<2x256x128xf32>
    %cst_52 = arith.constant 9.99999974E-6 : f32
    %39 = vector.broadcast %cst_52 : f32 to vector<2x1x128xf32>
    %40 = arith.addf %36, %39 : vector<2x1x128xf32>
    %41 = math.rsqrt %40 : vector<2x1x128xf32>
    %42 = vector.broadcast %41 : vector<2x1x128xf32> to vector<2x256x128xf32>
    %43 = arith.mulf %38, %42 : vector<2x256x128xf32>
    %cst_53 = arith.constant 0.000000e+00 : f32
    %44 = vector.broadcast %cst_53 : f32 to vector<2x256x128xf32>
    %45 = arith.cmpf ogt, %43, %44 : vector<2x256x128xf32>
    %cst_54 = arith.constant 2.000000e-01 : f32
    %46 = vector.broadcast %cst_54 : f32 to vector<2x256x128xf32>
    %47 = arith.mulf %46, %43 : vector<2x256x128xf32>
    %48 = arith.select %45, %43, %47 : vector<2x256x128xi1>, vector<2x256x128xf32>
    %c0_55 = arith.constant 0 : index
    %c0_56 = arith.constant 0 : index
    %c0_57 = arith.constant 0 : index
    %49 = vector.load %arg3[%c0_55, %c0_56, %c0_57] : memref<2x256x128xf32, #tpu.memory_space<vmem>>, vector<2x256x128xf32>
    tpu.vector_store %arg3[%c0_55, %c0_56, %c0_57], %48 {strides = array<i32>} : memref<2x256x128xf32, #tpu.memory_space<vmem>>, vector<2x256x128xf32>,
    return
  }
  func.func @transform_0(%arg0: i32) -> (i32, i32, i32, i32) {
    %c0_i32 = arith.constant 0 : i32
    %c0_i32_0 = arith.constant 0 : i32
    %c0_i32_1 = arith.constant 0 : i32
    %c0_i32_2 = arith.constant 0 : i32
    return %arg0, %c0_i32, %c0_i32_0, %c0_i32_1 : i32, i32, i32, i32
  }
  func.func @transform_1(%arg0: i32) -> (i32, i32) {
    %c0_i32 = arith.constant 0 : i32
    %c0_i32_0 = arith.constant 0 : i32
    %c0_i32_1 = arith.constant 0 : i32
    return %c0_i32, %c0_i32_0 : i32, i32
  }
  func.func @transform_2(%arg0: i32) -> (i32, i32, i32) {
    %c0_i32 = arith.constant 0 : i32
    %c0_i32_0 = arith.constant 0 : i32
    %c0_i32_1 = arith.constant 0 : i32
    return %arg0, %c0_i32, %c0_i32_0 : i32, i32, i32
  }
}

</mosaic_0001>

<llo_original>
// kernel: tpu_custom_call.1
$region0: #{tpu_custom_call.1}
  #allocation0 [shape = 'u32[]', space=smem, size = 0x4, offset = 0x4, fixed_abs, tag = 'smem constant byte address 0x4 - core index']
  #allocation1 [shape = 'u32[144,128]{1,0:T(1,128)}', space=vmem, size = 0x12000, scoped, tag = 'internal scratch']
  #allocation2 [shape = 'f32[2,18,18,4]{3,2,1,0:T(8,128)}', space=vmem, size = 0x6c000, scoped, tag = 'scratch operand']
  %s0 = inlined_call_operand.vmem [shape: f32[2,16,16,4], index: 0, kind: input, shape index: {}]
  %s1 = inlined_call_operand.vmem [shape: f32[36,128], index: 1, kind: input, shape index: {}]
  %s2 = inlined_call_operand.hbm [shape: f32[2,256,128], index: 2, kind: output, shape index: {}]
  %s3 = sld [smem:[#allocation0]]
  $region18: #{tpu_custom_call.1} parent=0
    _
  %s5 = ssub.s32 1, %s3
  %s6 = scalar_select 0, %s5, %s3
  $region1: #{tpu_custom_call.1} parent=0
    #allocation3 [shape = 'u8[262144]{0}', space=vmem, size = 0x40000, scoped, tag = 'output window, operand 0, single buffered']
    #allocation4 [shape = 's32[1]{0}', space=sflag, size = 0x4, scoped, tag = 'scoped memory for tpu_custom_call.1']
    %7 = vsyncpa [#allocation4], 0
    // Predicated region
    $region2: #{tpu_custom_call.1} parent=1 // pred_check
      _
    $region3: #{tpu_custom_call.1} parent=1 // pred_check_branch
      %9 = sbr.rel (0) target = $region5
    $region4: #{tpu_custom_call.1} parent=1 // pred_region
      _
    $region5: #{tpu_custom_call.1} parent=1 // pred_fallthru
      _
    // Predicated region
    $region6: #{tpu_custom_call.1} parent=1 // pred_check
      _
    $region7: #{tpu_custom_call.1} parent=1 // pred_check_branch
      %11 = sbr.rel (0) target = $region9
    $region8: #{tpu_custom_call.1} parent=1 // pred_region
      _
    $region9: #{tpu_custom_call.1} parent=1 // pred_fallthru
      _
    %vm12 = vcmask 31744
    %13 = vst.msk [vmem:[#allocation2] sm:$0xff] %vm12, 0.0
    %14 = vst.msk [vmem:[#allocation2 + $0x8] sm:$0xff] %vm12, 0.0
    %vm15 = vcmask 25600
    %16 = vst.msk [vmem:[#allocation2 + $0x10] sm:$0x3] %vm15, 0.0
    %17 = vst.msk [vmem:[#allocation2 + $0x18] sm:$0xff] %vm12, 0.0
    %18 = vst.msk [vmem:[#allocation2 + $0x20] sm:$0xff] %vm12, 0.0
    %19 = vst.msk [vmem:[#allocation2 + $0x28] sm:$0x3] %vm15, 0.0
    %20 = vst.msk [vmem:[#allocation2 + $0x30] sm:$0xff] %vm12, 0.0
    %21 = vst.msk [vmem:[#allocation2 + $0x38] sm:$0xff] %vm12, 0.0
    %22 = vst.msk [vmem:[#allocation2 + $0x40] sm:$0x3] %vm15, 0.0
    %23 = vst.msk [vmem:[#allocation2 + $0x48] sm:$0xff] %vm12, 0.0
    %24 = vst.msk [vmem:[#allocation2 + $0x50] sm:$0xff] %vm12, 0.0
    %25 = vst.msk [vmem:[#allocation2 + $0x58] sm:$0x3] %vm15, 0.0
    %26 = vst.msk [vmem:[#allocation2 + $0x60] sm:$0xff] %vm12, 0.0
    %27 = vst.msk [vmem:[#allocation2 + $0x68] sm:$0xff] %vm12, 0.0
    %28 = vst.msk [vmem:[#allocation2 + $0x70] sm:$0x3] %vm15, 0.0
    %29 = vst.msk [vmem:[#allocation2 + $0x78] sm:$0xff] %vm12, 0.0
    %30 = vst.msk [vmem:[#allocation2 + $0x80] sm:$0xff] %vm12, 0.0
    %31 = vst.msk [vmem:[#allocation2 + $0x88] sm:$0x3] %vm15, 0.0
    %32 = vst.msk [vmem:[#allocation2 + $0x90] sm:$0xff] %vm12, 0.0
    %33 = vst.msk [vmem:[#allocation2 + $0x98] sm:$0xff] %vm12, 0.0
    %34 = vst.msk [vmem:[#allocation2 + $0xa0] sm:$0x3] %vm15, 0.0
    %35 = vst.msk [vmem:[#allocation2 + $0xa8] sm:$0xff] %vm12, 0.0
    %36 = vst.msk [vmem:[#allocation2 + $0xb0] sm:$0xff] %vm12, 0.0
    %37 = vst.msk [vmem:[#allocation2 + $0xb8] sm:$0x3] %vm15, 0.0
    %38 = vst.msk [vmem:[#allocation2 + $0xc0] sm:$0xff] %vm12, 0.0
    %39 = vst.msk [vmem:[#allocation2 + $0xc8] sm:$0xff] %vm12, 0.0
    %40 = vst.msk [vmem:[#allocation2 + $0xd0] sm:$0x3] %vm15, 0.0
    %41 = vst.msk [vmem:[#allocation2 + $0xd8] sm:$0xff] %vm12, 0.0
    %42 = vst.msk [vmem:[#allocation2 + $0xe0] sm:$0xff] %vm12, 0.0
    %43 = vst.msk [vmem:[#allocation2 + $0xe8] sm:$0x3] %vm15, 0.0
    %44 = vst.msk [vmem:[#allocation2 + $0xf0] sm:$0xff] %vm12, 0.0
    %45 = vst.msk [vmem:[#allocation2 + $0xf8] sm:$0xff] %vm12, 0.0
    %46 = vst.msk [vmem:[#allocation2 + $0x100] sm:$0x3] %vm15, 0.0
    %47 = vst.msk [vmem:[#allocation2 + $0x108] sm:$0xff] %vm12, 0.0
    %48 = vst.msk [vmem:[#allocation2 + $0x110] sm:$0xff] %vm12, 0.0
    %49 = vst.msk [vmem:[#allocation2 + $0x118] sm:$0x3] %vm15, 0.0
    %50 = vst.msk [vmem:[#allocation2 + $0x120] sm:$0xff] %vm12, 0.0
    %51 = vst.msk [vmem:[#allocation2 + $0x128] sm:$0xff] %vm12, 0.0
    %52 = vst.msk [vmem:[#allocation2 + $0x130] sm:$0x3] %vm15, 0.0
    %53 = vst.msk [vmem:[#allocation2 + $0x138] sm:$0xff] %vm12, 0.0
    %54 = vst.msk [vmem:[#allocation2 + $0x140] sm:$0xff] %vm12, 0.0
    %55 = vst.msk [vmem:[#allocation2 + $0x148] sm:$0x3] %vm15, 0.0
    %56 = vst.msk [vmem:[#allocation2 + $0x150] sm:$0xff] %vm12, 0.0
    %57 = vst.msk [vmem:[#allocation2 + $0x158] sm:$0xff] %vm12, 0.0
    %58 = vst.msk [vmem:[#allocation2 + $0x160] sm:$0x3] %vm15, 0.0
    %59 = vst.msk [vmem:[#allocation2 + $0x168] sm:$0xff] %vm12, 0.0
    %60 = vst.msk [vmem:[#allocation2 + $0x170] sm:$0xff] %vm12, 0.0
    %61 = vst.msk [vmem:[#allocation2 + $0x178] sm:$0x3] %vm15, 0.0
    %62 = vst.msk [vmem:[#allocation2 + $0x180] sm:$0xff] %vm12, 0.0
    %63 = vst.msk [vmem:[#allocation2 + $0x188] sm:$0xff] %vm12, 0.0
    %64 = vst.msk [vmem:[#allocation2 + $0x190] sm:$0x3] %vm15, 0.0
    %65 = vst.msk [vmem:[#allocation2 + $0x198] sm:$0xff] %vm12, 0.0
    %66 = vst.msk [vmem:[#allocation2 + $0x1a0] sm:$0xff] %vm12, 0.0
    %67 = vst.msk [vmem:[#allocation2 + $0x1a8] sm:$0x3] %vm15, 0.0
    %68 = vst.msk [vmem:[#allocation2 + $0x1b0] sm:$0xff] %vm12, 0.0
    %69 = vst.msk [vmem:[#allocation2 + $0x1b8] sm:$0xff] %vm12, 0.0
    %70 = vst.msk [vmem:[#allocation2 + $0x1c0] sm:$0x3] %vm15, 0.0
    %71 = vst.msk [vmem:[#allocation2 + $0x1c8] sm:$0xff] %vm12, 0.0
    %72 = vst.msk [vmem:[#allocation2 + $0x1d0] sm:$0xff] %vm12, 0.0
    %73 = vst.msk [vmem:[#allocation2 + $0x1d8] sm:$0x3] %vm15, 0.0
    %74 = vst.msk [vmem:[#allocation2 + $0x1e0] sm:$0xff] %vm12, 0.0
    %75 = vst.msk [vmem:[#allocation2 + $0x1e8] sm:$0xff] %vm12, 0.0
    %76 = vst.msk [vmem:[#allocation2 + $0x1f0] sm:$0x3] %vm15, 0.0
    %77 = vst.msk [vmem:[#allocation2 + $0x1f8] sm:$0xff] %vm12, 0.0
    %78 = vst.msk [vmem:[#allocation2 + $0x200] sm:$0xff] %vm12, 0.0
    %79 = vst.msk [vmem:[#allocation2 + $0x208] sm:$0x3] %vm15, 0.0
    %80 = vst.msk [vmem:[#allocation2 + $0x210] sm:$0xff] %vm12, 0.0
    %81 = vst.msk [vmem:[#allocation2 + $0x218] sm:$0xff] %vm12, 0.0
    %82 = vst.msk [vmem:[#allocation2 + $0x220] sm:$0x3] %vm15, 0.0
    %83 = vst.msk [vmem:[#allocation2 + $0x228] sm:$0xff] %vm12, 0.0
    %84 = vst.msk [vmem:[#allocation2 + $0x230] sm:$0xff] %vm12, 0.0
    %85 = vst.msk [vmem:[#allocation2 + $0x238] sm:$0x3] %vm15, 0.0
    %86 = vst.msk [vmem:[#allocation2 + $0x240] sm:$0xff] %vm12, 0.0
    %87 = vst.msk [vmem:[#allocation2 + $0x248] sm:$0xff] %vm12, 0.0
    %88 = vst.msk [vmem:[#allocation2 + $0x250] sm:$0x3] %vm15, 0.0
    %89 = vst.msk [vmem:[#allocation2 + $0x258] sm:$0xff] %vm12, 0.0
    %90 = vst.msk [vmem:[#allocation2 + $0x260] sm:$0xff] %vm12, 0.0
    %91 = vst.msk [vmem:[#allocation2 + $0x268] sm:$0x3] %vm15, 0.0
    %92 = vst.msk [vmem:[#allocation2 + $0x270] sm:$0xff] %vm12, 0.0
    %93 = vst.msk [vmem:[#allocation2 + $0x278] sm:$0xff] %vm12, 0.0
    %94 = vst.msk [vmem:[#allocation2 + $0x280] sm:$0x3] %vm15, 0.0
    %95 = vst.msk [vmem:[#allocation2 + $0x288] sm:$0xff] %vm12, 0.0
    %96 = vst.msk [vmem:[#allocation2 + $0x290] sm:$0xff] %vm12, 0.0
    %97 = vst.msk [vmem:[#allocation2 + $0x298] sm:$0x3] %vm15, 0.0
    %98 = vst.msk [vmem:[#allocation2 + $0x2a0] sm:$0xff] %vm12, 0.0
    %99 = vst.msk [vmem:[#allocation2 + $0x2a8] sm:$0xff] %vm12, 0.0
    %100 = vst.msk [vmem:[#allocation2 + $0x2b0] sm:$0x3] %vm15, 0.0
    %101 = vst.msk [vmem:[#allocation2 + $0x2b8] sm:$0xff] %vm12, 0.0
    %102 = vst.msk [vmem:[#allocation2 + $0x2c0] sm:$0xff] %vm12, 0.0
    %103 = vst.msk [vmem:[#allocation2 + $0x2c8] sm:$0x3] %vm15, 0.0
    %104 = vst.msk [vmem:[#allocation2 + $0x2d0] sm:$0xff] %vm12, 0.0
    %105 = vst.msk [vmem:[#allocation2 + $0x2d8] sm:$0xff] %vm12, 0.0
    %106 = vst.msk [vmem:[#allocation2 + $0x2e0] sm:$0x3] %vm15, 0.0
    %107 = vst.msk [vmem:[#allocation2 + $0x2e8] sm:$0xff] %vm12, 0.0
    %108 = vst.msk [vmem:[#allocation2 + $0x2f0] sm:$0xff] %vm12, 0.0
    %109 = vst.msk [vmem:[#allocation2 + $0x2f8] sm:$0x3] %vm15, 0.0
    %110 = vst.msk [vmem:[#allocation2 + $0x300] sm:$0xff] %vm12, 0.0
    %111 = vst.msk [vmem:[#allocation2 + $0x308] sm:$0xff] %vm12, 0.0
    %112 = vst.msk [vmem:[#allocation2 + $0x310] sm:$0x3] %vm15, 0.0
    %113 = vst.msk [vmem:[#allocation2 + $0x318] sm:$0xff] %vm12, 0.0
    %114 = vst.msk [vmem:[#allocation2 + $0x320] sm:$0xff] %vm12, 0.0
    %115 = vst.msk [vmem:[#allocation2 + $0x328] sm:$0x3] %vm15, 0.0
    %116 = vst.msk [vmem:[#allocation2 + $0x330] sm:$0xff] %vm12, 0.0
    %117 = vst.msk [vmem:[#allocation2 + $0x338] sm:$0xff] %vm12, 0.0
    %118 = vst.msk [vmem:[#allocation2 + $0x340] sm:$0x3] %vm15, 0.0
    %119 = vst.msk [vmem:[#allocation2 + $0x348] sm:$0xff] %vm12, 0.0
    %120 = vst.msk [vmem:[#allocation2 + $0x350] sm:$0xff] %vm12, 0.0
    %121 = vst.msk [vmem:[#allocation2 + $0x358] sm:$0x3] %vm15, 0.0
    %v122 = vld [vmem:[%s0] sm:$0xff]
    %v123 = vld [vmem:[%s0 + $0x8] sm:$0xff]
    %v124 = vld [vmem:[%s0 + $0x10] sm:$0xff]
    %v125 = vld [vmem:[%s0 + $0x18] sm:$0xff]
    %v126 = vld [vmem:[%s0 + $0x20] sm:$0xff]
    %v127 = vld [vmem:[%s0 + $0x28] sm:$0xff]
    %v128 = vld [vmem:[%s0 + $0x30] sm:$0xff]
    %v129 = vld [vmem:[%s0 + $0x38] sm:$0xff]
    %v130 = vld [vmem:[%s0 + $0x40] sm:$0xff]
    %v131 = vld [vmem:[%s0 + $0x48] sm:$0xff]
    %v132 = vld [vmem:[%s0 + $0x50] sm:$0xff]
    %v133 = vld [vmem:[%s0 + $0x58] sm:$0xff]
    %v134 = vld [vmem:[%s0 + $0x60] sm:$0xff]
    %v135 = vld [vmem:[%s0 + $0x68] sm:$0xff]
    %v136 = vld [vmem:[%s0 + $0x70] sm:$0xff]
    %v137 = vld [vmem:[%s0 + $0x78] sm:$0xff]
    %v138 = vld [vmem:[%s0 + $0x80] sm:$0xff]
    %v139 = vld [vmem:[%s0 + $0x88] sm:$0xff]
    %v140 = vld [vmem:[%s0 + $0x90] sm:$0xff]
    %v141 = vld [vmem:[%s0 + $0x98] sm:$0xff]
    %v142 = vld [vmem:[%s0 + $0xa0] sm:$0xff]
    %v143 = vld [vmem:[%s0 + $0xa8] sm:$0xff]
    %v144 = vld [vmem:[%s0 + $0xb0] sm:$0xff]
    %v145 = vld [vmem:[%s0 + $0xb8] sm:$0xff]
    %v146 = vld [vmem:[%s0 + $0xc0] sm:$0xff]
    %v147 = vld [vmem:[%s0 + $0xc8] sm:$0xff]
    %v148 = vld [vmem:[%s0 + $0xd0] sm:$0xff]
    %v149 = vld [vmem:[%s0 + $0xd8] sm:$0xff]
    %v150 = vld [vmem:[%s0 + $0xe0] sm:$0xff]
    %v151 = vld [vmem:[%s0 + $0xe8] sm:$0xff]
    %v152 = vld [vmem:[%s0 + $0xf0] sm:$0xff]
    %v153 = vld [vmem:[%s0 + $0xf8] sm:$0xff]
    %v154 = vld [vmem:[%s0 + $0x100] sm:$0xff]
    %v155 = vld [vmem:[%s0 + $0x108] sm:$0xff]
    %v156 = vld [vmem:[%s0 + $0x110] sm:$0xff]
    %v157 = vld [vmem:[%s0 + $0x118] sm:$0xff]
    %v158 = vld [vmem:[%s0 + $0x120] sm:$0xff]
    %v159 = vld [vmem:[%s0 + $0x128] sm:$0xff]
    %v160 = vld [vmem:[%s0 + $0x130] sm:$0xff]
    %v161 = vld [vmem:[%s0 + $0x138] sm:$0xff]
    %v162 = vld [vmem:[%s0 + $0x140] sm:$0xff]
    %v163 = vld [vmem:[%s0 + $0x148] sm:$0xff]
    %v164 = vld [vmem:[%s0 + $0x150] sm:$0xff]
    %v165 = vld [vmem:[%s0 + $0x158] sm:$0xff]
    %v166 = vld [vmem:[%s0 + $0x160] sm:$0xff]
    %v167 = vld [vmem:[%s0 + $0x168] sm:$0xff]
    %v168 = vld [vmem:[%s0 + $0x170] sm:$0xff]
    %v169 = vld [vmem:[%s0 + $0x178] sm:$0xff]
    %v170 = vld [vmem:[%s0 + $0x180] sm:$0xff]
    %v171 = vld [vmem:[%s0 + $0x188] sm:$0xff]
    %v172 = vld [vmem:[%s0 + $0x190] sm:$0xff]
    %v173 = vld [vmem:[%s0 + $0x198] sm:$0xff]
    %v174 = vld [vmem:[%s0 + $0x1a0] sm:$0xff]
    %v175 = vld [vmem:[%s0 + $0x1a8] sm:$0xff]
    %v176 = vld [vmem:[%s0 + $0x1b0] sm:$0xff]
    %v177 = vld [vmem:[%s0 + $0x1b8] sm:$0xff]
    %v178 = vld [vmem:[%s0 + $0x1c0] sm:$0xff]
    %v179 = vld [vmem:[%s0 + $0x1c8] sm:$0xff]
    %v180 = vld [vmem:[%s0 + $0x1d0] sm:$0xff]
    %v181 = vld [vmem:[%s0 + $0x1d8] sm:$0xff]
    %v182 = vld [vmem:[%s0 + $0x1e0] sm:$0xff]
    %v183 = vld [vmem:[%s0 + $0x1e8] sm:$0xff]
    %v184 = vld [vmem:[%s0 + $0x1f0] sm:$0xff]
    %v185 = vld [vmem:[%s0 + $0x1f8] sm:$0xff]
    %s186 = scalar_lea.vmem [#allocation2], 24
    %187 = vst.msk [vmem:[%s186 + $0x1] sm:$0xff] %vm12, %v122
    %188 = vst.msk [vmem:[%s186 + $0x9] sm:$0xff] %vm12, %v123
    %189 = vst.msk [vmem:[%s186 + $0x19] sm:$0xff] %vm12, %v124
    %190 = vst.msk [vmem:[%s186 + $0x21] sm:$0xff] %vm12, %v125
    %191 = vst.msk [vmem:[%s186 + $0x31] sm:$0xff] %vm12, %v126
    %192 = vst.msk [vmem:[%s186 + $0x39] sm:$0xff] %vm12, %v127
    %193 = vst.msk [vmem:[%s186 + $0x49] sm:$0xff] %vm12, %v128
    %194 = vst.msk [vmem:[%s186 + $0x51] sm:$0xff] %vm12, %v129
    %195 = vst.msk [vmem:[%s186 + $0x61] sm:$0xff] %vm12, %v130
    %196 = vst.msk [vmem:[%s186 + $0x69] sm:$0xff] %vm12, %v131
    %197 = vst.msk [vmem:[%s186 + $0x79] sm:$0xff] %vm12, %v132
    %198 = vst.msk [vmem:[%s186 + $0x81] sm:$0xff] %vm12, %v133
    %199 = vst.msk [vmem:[%s186 + $0x91] sm:$0xff] %vm12, %v134
    %200 = vst.msk [vmem:[%s186 + $0x99] sm:$0xff] %vm12, %v135
    %201 = vst.msk [vmem:[%s186 + $0xa9] sm:$0xff] %vm12, %v136
    %202 = vst.msk [vmem:[%s186 + $0xb1] sm:$0xff] %vm12, %v137
    %203 = vst.msk [vmem:[%s186 + $0xc1] sm:$0xff] %vm12, %v138
    %204 = vst.msk [vmem:[%s186 + $0xc9] sm:$0xff] %vm12, %v139
    %205 = vst.msk [vmem:[%s186 + $0xd9] sm:$0xff] %vm12, %v140
    %206 = vst.msk [vmem:[%s186 + $0xe1] sm:$0xff] %vm12, %v141
    %207 = vst.msk [vmem:[%s186 + $0xf1] sm:$0xff] %vm12, %v142
    %208 = vst.msk [vmem:[%s186 + $0xf9] sm:$0xff] %vm12, %v143
    %209 = vst.msk [vmem:[%s186 + $0x109] sm:$0xff] %vm12, %v144
    %210 = vst.msk [vmem:[%s186 + $0x111] sm:$0xff] %vm12, %v145
    %211 = vst.msk [vmem:[%s186 + $0x121] sm:$0xff] %vm12, %v146
    %212 = vst.msk [vmem:[%s186 + $0x129] sm:$0xff] %vm12, %v147
    %213 = vst.msk [vmem:[%s186 + $0x139] sm:$0xff] %vm12, %v148
    %214 = vst.msk [vmem:[%s186 + $0x141] sm:$0xff] %vm12, %v149
    %215 = vst.msk [vmem:[%s186 + $0x151] sm:$0xff] %vm12, %v150
    %216 = vst.msk [vmem:[%s186 + $0x159] sm:$0xff] %vm12, %v151
    %217 = vst.msk [vmem:[%s186 + $0x169] sm:$0xff] %vm12, %v152
    %218 = vst.msk [vmem:[%s186 + $0x171] sm:$0xff] %vm12, %v153
    %219 = vst.msk [vmem:[%s186 + $0x1b1] sm:$0xff] %vm12, %v154
    %220 = vst.msk [vmem:[%s186 + $0x1b9] sm:$0xff] %vm12, %v155
    %221 = vst.msk [vmem:[%s186 + $0x1c9] sm:$0xff] %vm12, %v156
    %222 = vst.msk [vmem:[%s186 + $0x1d1] sm:$0xff] %vm12, %v157
    %223 = vst.msk [vmem:[%s186 + $0x1e1] sm:$0xff] %vm12, %v158
    %224 = vst.msk [vmem:[%s186 + $0x1e9] sm:$0xff] %vm12, %v159
    %225 = vst.msk [vmem:[%s186 + $0x1f9] sm:$0xff] %vm12, %v160
    %226 = vst.msk [vmem:[%s186 + $0x201] sm:$0xff] %vm12, %v161
    %227 = vst.msk [vmem:[%s186 + $0x211] sm:$0xff] %vm12, %v162
    %228 = vst.msk [vmem:[%s186 + $0x219] sm:$0xff] %vm12, %v163
    %229 = vst.msk [vmem:[%s186 + $0x229] sm:$0xff] %vm12, %v164
    %230 = vst.msk [vmem:[%s186 + $0x231] sm:$0xff] %vm12, %v165
    %231 = vst.msk [vmem:[%s186 + $0x241] sm:$0xff] %vm12, %v166
    %232 = vst.msk [vmem:[%s186 + $0x249] sm:$0xff] %vm12, %v167
    %233 = vst.msk [vmem:[%s186 + $0x259] sm:$0xff] %vm12, %v168
    %234 = vst.msk [vmem:[%s186 + $0x261] sm:$0xff] %vm12, %v169
    %235 = vst.msk [vmem:[%s186 + $0x271] sm:$0xff] %vm12, %v170
    %236 = vst.msk [vmem:[%s186 + $0x279] sm:$0xff] %vm12, %v171
    %237 = vst.msk [vmem:[%s186 + $0x289] sm:$0xff] %vm12, %v172
    %238 = vst.msk [vmem:[%s186 + $0x291] sm:$0xff] %vm12, %v173
    %239 = vst.msk [vmem:[%s186 + $0x2a1] sm:$0xff] %vm12, %v174
    %240 = vst.msk [vmem:[%s186 + $0x2a9] sm:$0xff] %vm12, %v175
    %241 = vst.msk [vmem:[%s186 + $0x2b9] sm:$0xff] %vm12, %v176
    %242 = vst.msk [vmem:[%s186 + $0x2c1] sm:$0xff] %vm12, %v177
    %243 = vst.msk [vmem:[%s186 + $0x2d1] sm:$0xff] %vm12, %v178
    %244 = vst.msk [vmem:[%s186 + $0x2d9] sm:$0xff] %vm12, %v179
    %245 = vst.msk [vmem:[%s186 + $0x2e9] sm:$0xff] %vm12, %v180
    %246 = vst.msk [vmem:[%s186 + $0x2f1] sm:$0xff] %vm12, %v181
    %247 = vst.msk [vmem:[%s186 + $0x301] sm:$0xff] %vm12, %v182
    %248 = vst.msk [vmem:[%s186 + $0x309] sm:$0xff] %vm12, %v183
    %249 = vst.msk [vmem:[%s186 + $0x319] sm:$0xff] %vm12, %v184
    %250 = vst.msk [vmem:[%s186 + $0x321] sm:$0xff] %vm12, %v185
    %v251 = vld [vmem:[#allocation2] sm:$0xff]
    %v252 = vld [vmem:[#allocation2 + $0x8] sm:$0xff]
    %v253 = vld [vmem:[#allocation2 + $0x18] sm:$0xff]
    %v254 = vld [vmem:[#allocation2 + $0x20] sm:$0xff]
    %v255 = vld [vmem:[#allocation2 + $0x30] sm:$0xff]
    %v256 = vld [vmem:[#allocation2 + $0x38] sm:$0xff]
    %v257 = vld [vmem:[#allocation2 + $0x48] sm:$0xff]
    %v258 = vld [vmem:[#allocation2 + $0x50] sm:$0xff]
    %v259 = vld [vmem:[#allocation2 + $0x60] sm:$0xff]
    %v260 = vld [vmem:[#allocation2 + $0x68] sm:$0xff]
    %v261 = vld [vmem:[#allocation2 + $0x78] sm:$0xff]
    %v262 = vld [vmem:[#allocation2 + $0x80] sm:$0xff]
    %v263 = vld [vmem:[#allocation2 + $0x90] sm:$0xff]
    %v264 = vld [vmem:[#allocation2 + $0x98] sm:$0xff]
    %v265 = vld [vmem:[#allocation2 + $0xa8] sm:$0xff]
    %v266 = vld [vmem:[#allocation2 + $0xb0] sm:$0xff]
    %v267 = vld [vmem:[#allocation2 + $0xc0] sm:$0xff]
    %v268 = vld [vmem:[#allocation2 + $0xc8] sm:$0xff]
    %v269 = vld [vmem:[#allocation2 + $0xd8] sm:$0xff]
    %v270 = vld [vmem:[#allocation2 + $0xe0] sm:$0xff]
    %v271 = vld [vmem:[#allocation2 + $0xf0] sm:$0xff]
    %v272 = vld [vmem:[#allocation2 + $0xf8] sm:$0xff]
    %v273 = vld [vmem:[#allocation2 + $0x108] sm:$0xff]
    %v274 = vld [vmem:[#allocation2 + $0x110] sm:$0xff]
    %v275 = vld [vmem:[#allocation2 + $0x120] sm:$0xff]
    %v276 = vld [vmem:[#allocation2 + $0x128] sm:$0xff]
    %v277 = vld [vmem:[#allocation2 + $0x138] sm:$0xff]
    %v278 = vld [vmem:[#allocation2 + $0x140] sm:$0xff]
    %v279 = vld [vmem:[#allocation2 + $0x150] sm:$0xff]
    %v280 = vld [vmem:[#allocation2 + $0x158] sm:$0xff]
    %v281 = vld [vmem:[#allocation2 + $0x168] sm:$0xff]
    %v282 = vld [vmem:[#allocation2 + $0x170] sm:$0xff]
    %v283 = vld [vmem:[#allocation2 + $0x1b0] sm:$0xff]
    %v284 = vld [vmem:[#allocation2 + $0x1b8] sm:$0xff]
    %v285 = vld [vmem:[#allocation2 + $0x1c8] sm:$0xff]
    %v286 = vld [vmem:[#allocation2 + $0x1d0] sm:$0xff]
    %v287 = vld [vmem:[#allocation2 + $0x1e0] sm:$0xff]
    %v288 = vld [vmem:[#allocation2 + $0x1e8] sm:$0xff]
    %v289 = vld [vmem:[#allocation2 + $0x1f8] sm:$0xff]
    %v290 = vld [vmem:[#allocation2 + $0x200] sm:$0xff]
    %v291 = vld [vmem:[#allocation2 + $0x210] sm:$0xff]
    %v292 = vld [vmem:[#allocation2 + $0x218] sm:$0xff]
    %v293 = vld [vmem:[#allocation2 + $0x228] sm:$0xff]
    %v294 = vld [vmem:[#allocation2 + $0x230] sm:$0xff]
    %v295 = vld [vmem:[#allocation2 + $0x240] sm:$0xff]
    %v296 = vld [vmem:[#allocation2 + $0x248] sm:$0xff]
    %v297 = vld [vmem:[#allocation2 + $0x258] sm:$0xff]
    %v298 = vld [vmem:[#allocation2 + $0x260] sm:$0xff]
    %v299 = vld [vmem:[#allocation2 + $0x270] sm:$0xff]
    %v300 = vld [vmem:[#allocation2 + $0x278] sm:$0xff]
    %v301 = vld [vmem:[#allocation2 + $0x288] sm:$0xff]
    %v302 = vld [vmem:[#allocation2 + $0x290] sm:$0xff]
    %v303 = vld [vmem:[#allocation2 + $0x2a0] sm:$0xff]
    %v304 = vld [vmem:[#allocation2 + $0x2a8] sm:$0xff]
    %v305 = vld [vmem:[#allocation2 + $0x2b8] sm:$0xff]
    %v306 = vld [vmem:[#allocation2 + $0x2c0] sm:$0xff]
    %v307 = vld [vmem:[#allocation2 + $0x2d0] sm:$0xff]
    %v308 = vld [vmem:[#allocation2 + $0x2d8] sm:$0xff]
    %v309 = vld [vmem:[#allocation2 + $0x2e8] sm:$0xff]
    %v310 = vld [vmem:[#allocation2 + $0x2f0] sm:$0xff]
    %v311 = vld [vmem:[#allocation2 + $0x300] sm:$0xff]
    %v312 = vld [vmem:[#allocation2 + $0x308] sm:$0xff]
    %v313 = vld [vmem:[#allocation2 + $0x318] sm:$0xff]
    %v314 = vld [vmem:[#allocation2 + $0x320] sm:$0xff]
    %v315 = vld [vmem:[#allocation2 + $0x1] sm:$0xff]
    %v316 = vld [vmem:[#allocation2 + $0x9] sm:$0xff]
    %v317 = vld [vmem:[#allocation2 + $0x19] sm:$0xff]
    %v318 = vld [vmem:[#allocation2 + $0x21] sm:$0xff]
    %v319 = vld [vmem:[#allocation2 + $0x31] sm:$0xff]
    %v320 = vld [vmem:[#allocation2 + $0x39] sm:$0xff]
    %v321 = vld [vmem:[#allocation2 + $0x49] sm:$0xff]
    %v322 = vld [vmem:[#allocation2 + $0x51] sm:$0xff]
    %v323 = vld [vmem:[#allocation2 + $0x61] sm:$0xff]
    %v324 = vld [vmem:[#allocation2 + $0x69] sm:$0xff]
    %v325 = vld [vmem:[#allocation2 + $0x79] sm:$0xff]
    %v326 = vld [vmem:[#allocation2 + $0x81] sm:$0xff]
    %v327 = vld [vmem:[#allocation2 + $0x91] sm:$0xff]
    %v328 = vld [vmem:[#allocation2 + $0x99] sm:$0xff]
    %v329 = vld [vmem:[#allocation2 + $0xa9] sm:$0xff]
    %v330 = vld [vmem:[#allocation2 + $0xb1] sm:$0xff]
    %v331 = vld [vmem:[#allocation2 + $0xc1] sm:$0xff]
    %v332 = vld [vmem:[#allocation2 + $0xc9] sm:$0xff]
    %v333 = vld [vmem:[#allocation2 + $0xd9] sm:$0xff]
    %v334 = vld [vmem:[#allocation2 + $0xe1] sm:$0xff]
    %v335 = vld [vmem:[#allocation2 + $0xf1] sm:$0xff]
    %v336 = vld [vmem:[#allocation2 + $0xf9] sm:$0xff]
    %v337 = vld [vmem:[#allocation2 + $0x109] sm:$0xff]
    %v338 = vld [vmem:[#allocation2 + $0x111] sm:$0xff]
    %v339 = vld [vmem:[#allocation2 + $0x121] sm:$0xff]
    %v340 = vld [vmem:[#allocation2 + $0x129] sm:$0xff]
    %v341 = vld [vmem:[#allocation2 + $0x139] sm:$0xff]
    %v342 = vld [vmem:[#allocation2 + $0x141] sm:$0xff]
    %v343 = vld [vmem:[#allocation2 + $0x151] sm:$0xff]
    %v344 = vld [vmem:[#allocation2 + $0x159] sm:$0xff]
    %v345 = vld [vmem:[#allocation2 + $0x169] sm:$0xff]
    %v346 = vld [vmem:[#allocation2 + $0x171] sm:$0xff]
    %v347 = vld [vmem:[#allocation2 + $0x1b1] sm:$0xff]
    %v348 = vld [vmem:[#allocation2 + $0x1b9] sm:$0xff]
    %v349 = vld [vmem:[#allocation2 + $0x1c9] sm:$0xff]
    %v350 = vld [vmem:[#allocation2 + $0x1d1] sm:$0xff]
    %v351 = vld [vmem:[#allocation2 + $0x1e1] sm:$0xff]
    %v352 = vld [vmem:[#allocation2 + $0x1e9] sm:$0xff]
    %v353 = vld [vmem:[#allocation2 + $0x1f9] sm:$0xff]
    %v354 = vld [vmem:[#allocation2 + $0x201] sm:$0xff]
    %v355 = vld [vmem:[#allocation2 + $0x211] sm:$0xff]
    %v356 = vld [vmem:[#allocation2 + $0x219] sm:$0xff]
    %v357 = vld [vmem:[#allocation2 + $0x229] sm:$0xff]
    %v358 = vld [vmem:[#allocation2 + $0x231] sm:$0xff]
    %v359 = vld [vmem:[#allocation2 + $0x241] sm:$0xff]
    %v360 = vld [vmem:[#allocation2 + $0x249] sm:$0xff]
    %v361 = vld [vmem:[#allocation2 + $0x259] sm:$0xff]
    %v362 = vld [vmem:[#allocation2 + $0x261] sm:$0xff]
    %v363 = vld [vmem:[#allocation2 + $0x271] sm:$0xff]
    %v364 = vld [vmem:[#allocation2 + $0x279] sm:$0xff]
    %v365 = vld [vmem:[#allocation2 + $0x289] sm:$0xff]
    %v366 = vld [vmem:[#allocation2 + $0x291] sm:$0xff]
    %v367 = vld [vmem:[#allocation2 + $0x2a1] sm:$0xff]
    %v368 = vld [vmem:[#allocation2 + $0x2a9] sm:$0xff]
    %v369 = vld [vmem:[#allocation2 + $0x2b9] sm:$0xff]
    %v370 = vld [vmem:[#allocation2 + $0x2c1] sm:$0xff]
    %v371 = vld [vmem:[#allocation2 + $0x2d1] sm:$0xff]
    %v372 = vld [vmem:[#allocation2 + $0x2d9] sm:$0xff]
    %v373 = vld [vmem:[#allocation2 + $0x2e9] sm:$0xff]
    %v374 = vld [vmem:[#allocation2 + $0x2f1] sm:$0xff]
    %v375 = vld [vmem:[#allocation2 + $0x301] sm:$0xff]
    %v376 = vld [vmem:[#allocation2 + $0x309] sm:$0xff]
    %v377 = vld [vmem:[#allocation2 + $0x319] sm:$0xff]
    %v378 = vld [vmem:[#allocation2 + $0x321] sm:$0xff]
    %v379 = vld [vmem:[#allocation2 + $0x2] sm:$0xff]
    %v380 = vld [vmem:[#allocation2 + $0xa] sm:$0xff]
    %v381 = vld [vmem:[#allocation2 + $0x1a] sm:$0xff]
    %v382 = vld [vmem:[#allocation2 + $0x22] sm:$0xff]
    %v383 = vld [vmem:[#allocation2 + $0x32] sm:$0xff]
    %v384 = vld [vmem:[#allocation2 + $0x3a] sm:$0xff]
    %v385 = vld [vmem:[#allocation2 + $0x4a] sm:$0xff]
    %v386 = vld [vmem:[#allocation2 + $0x52] sm:$0xff]
    %v387 = vld [vmem:[#allocation2 + $0x62] sm:$0xff]
    %v388 = vld [vmem:[#allocation2 + $0x6a] sm:$0xff]
    %v389 = vld [vmem:[#allocation2 + $0x7a] sm:$0xff]
    %v390 = vld [vmem:[#allocation2 + $0x82] sm:$0xff]
    %v391 = vld [vmem:[#allocation2 + $0x92] sm:$0xff]
    %v392 = vld [vmem:[#allocation2 + $0x9a] sm:$0xff]
    %v393 = vld [vmem:[#allocation2 + $0xaa] sm:$0xff]
    %v394 = vld [vmem:[#allocation2 + $0xb2] sm:$0xff]
    %v395 = vld [vmem:[#allocation2 + $0xc2] sm:$0xff]
    %v396 = vld [vmem:[#allocation2 + $0xca] sm:$0xff]
    %v397 = vld [vmem:[#allocation2 + $0xda] sm:$0xff]
    %v398 = vld [vmem:[#allocation2 + $0xe2] sm:$0xff]
    %v399 = vld [vmem:[#allocation2 + $0xf2] sm:$0xff]
    %v400 = vld [vmem:[#allocation2 + $0xfa] sm:$0xff]
    %v401 = vld [vmem:[#allocation2 + $0x10a] sm:$0xff]
    %v402 = vld [vmem:[#allocation2 + $0x112] sm:$0xff]
    %v403 = vld [vmem:[#allocation2 + $0x122] sm:$0xff]
    %v404 = vld [vmem:[#allocation2 + $0x12a] sm:$0xff]
    %v405 = vld [vmem:[#allocation2 + $0x13a] sm:$0xff]
    %v406 = vld [vmem:[#allocation2 + $0x142] sm:$0xff]
    %v407 = vld [vmem:[#allocation2 + $0x152] sm:$0xff]
    %v408 = vld [vmem:[#allocation2 + $0x15a] sm:$0xff]
    %v409 = vld [vmem:[#allocation2 + $0x16a] sm:$0xff]
    %v410 = vld [vmem:[#allocation2 + $0x172] sm:$0xff]
    %v411 = vld [vmem:[#allocation2 + $0x1b2] sm:$0xff]
    %v412 = vld [vmem:[#allocation2 + $0x1ba] sm:$0xff]
    %v413 = vld [vmem:[#allocation2 + $0x1ca] sm:$0xff]
    %v414 = vld [vmem:[#allocation2 + $0x1d2] sm:$0xff]
    %v415 = vld [vmem:[#allocation2 + $0x1e2] sm:$0xff]
    %v416 = vld [vmem:[#allocation2 + $0x1ea] sm:$0xff]
    %v417 = vld [vmem:[#allocation2 + $0x1fa] sm:$0xff]
    %v418 = vld [vmem:[#allocation2 + $0x202] sm:$0xff]
    %v419 = vld [vmem:[#allocation2 + $0x212] sm:$0xff]
    %v420 = vld [vmem:[#allocation2 + $0x21a] sm:$0xff]
    %v421 = vld [vmem:[#allocation2 + $0x22a] sm:$0xff]
    %v422 = vld [vmem:[#allocation2 + $0x232] sm:$0xff]
    %v423 = vld [vmem:[#allocation2 + $0x242] sm:$0xff]
    %v424 = vld [vmem:[#allocation2 + $0x24a] sm:$0xff]
    %v425 = vld [vmem:[#allocation2 + $0x25a] sm:$0xff]
    %v426 = vld [vmem:[#allocation2 + $0x262] sm:$0xff]
    %v427 = vld [vmem:[#allocation2 + $0x272] sm:$0xff]
    %v428 = vld [vmem:[#allocation2 + $0x27a] sm:$0xff]
    %v429 = vld [vmem:[#allocation2 + $0x28a] sm:$0xff]
    %v430 = vld [vmem:[#allocation2 + $0x292] sm:$0xff]
    %v431 = vld [vmem:[#allocation2 + $0x2a2] sm:$0xff]
    %v432 = vld [vmem:[#allocation2 + $0x2aa] sm:$0xff]
    %v433 = vld [vmem:[#allocation2 + $0x2ba] sm:$0xff]
    %v434 = vld [vmem:[#allocation2 + $0x2c2] sm:$0xff]
    %v435 = vld [vmem:[#allocation2 + $0x2d2] sm:$0xff]
    %v436 = vld [vmem:[#allocation2 + $0x2da] sm:$0xff]
    %v437 = vld [vmem:[#allocation2 + $0x2ea] sm:$0xff]
    %v438 = vld [vmem:[#allocation2 + $0x2f2] sm:$0xff]
    %v439 = vld [vmem:[#allocation2 + $0x302] sm:$0xff]
    %v440 = vld [vmem:[#allocation2 + $0x30a] sm:$0xff]
    %v441 = vld [vmem:[#allocation2 + $0x31a] sm:$0xff]
    %v442 = vld [vmem:[#allocation2 + $0x322] sm:$0xff]
    %v443 = vld [vmem:[%s186] sm:$0xff]
    %v444 = vld [vmem:[%s186 + $0x8] sm:$0xff]
    %v445 = vld [vmem:[%s186 + $0x18] sm:$0xff]
    %v446 = vld [vmem:[%s186 + $0x20] sm:$0xff]
    %v447 = vld [vmem:[%s186 + $0x30] sm:$0xff]
    %v448 = vld [vmem:[%s186 + $0x38] sm:$0xff]
    %v449 = vld [vmem:[%s186 + $0x48] sm:$0xff]
    %v450 = vld [vmem:[%s186 + $0x50] sm:$0xff]
    %v451 = vld [vmem:[%s186 + $0x60] sm:$0xff]
    %v452 = vld [vmem:[%s186 + $0x68] sm:$0xff]
    %v453 = vld [vmem:[%s186 + $0x78] sm:$0xff]
    %v454 = vld [vmem:[%s186 + $0x80] sm:$0xff]
    %v455 = vld [vmem:[%s186 + $0x90] sm:$0xff]
    %v456 = vld [vmem:[%s186 + $0x98] sm:$0xff]
    %v457 = vld [vmem:[%s186 + $0xa8] sm:$0xff]
    %v458 = vld [vmem:[%s186 + $0xb0] sm:$0xff]
    %v459 = vld [vmem:[%s186 + $0xc0] sm:$0xff]
    %v460 = vld [vmem:[%s186 + $0xc8] sm:$0xff]
    %v461 = vld [vmem:[%s186 + $0xd8] sm:$0xff]
    %v462 = vld [vmem:[%s186 + $0xe0] sm:$0xff]
    %v463 = vld [vmem:[%s186 + $0xf0] sm:$0xff]
    %v464 = vld [vmem:[%s186 + $0xf8] sm:$0xff]
    %v465 = vld [vmem:[%s186 + $0x108] sm:$0xff]
    %v466 = vld [vmem:[%s186 + $0x110] sm:$0xff]
    %v467 = vld [vmem:[%s186 + $0x120] sm:$0xff]
    %v468 = vld [vmem:[%s186 + $0x128] sm:$0xff]
    %v469 = vld [vmem:[%s186 + $0x138] sm:$0xff]
    %v470 = vld [vmem:[%s186 + $0x140] sm:$0xff]
    %v471 = vld [vmem:[%s186 + $0x150] sm:$0xff]
    %v472 = vld [vmem:[%s186 + $0x158] sm:$0xff]
    %v473 = vld [vmem:[%s186 + $0x168] sm:$0xff]
    %v474 = vld [vmem:[%s186 + $0x170] sm:$0xff]
    %v475 = vld [vmem:[%s186 + $0x1b0] sm:$0xff]
    %v476 = vld [vmem:[%s186 + $0x1b8] sm:$0xff]
    %v477 = vld [vmem:[%s186 + $0x1c8] sm:$0xff]
    %v478 = vld [vmem:[%s186 + $0x1d0] sm:$0xff]
    %v479 = vld [vmem:[%s186 + $0x1e0] sm:$0xff]
    %v480 = vld [vmem:[%s186 + $0x1e8] sm:$0xff]
    %v481 = vld [vmem:[%s186 + $0x1f8] sm:$0xff]
    %v482 = vld [vmem:[%s186 + $0x200] sm:$0xff]
    %v483 = vld [vmem:[%s186 + $0x210] sm:$0xff]
    %v484 = vld [vmem:[%s186 + $0x218] sm:$0xff]
    %v485 = vld [vmem:[%s186 + $0x228] sm:$0xff]
    %v486 = vld [vmem:[%s186 + $0x230] sm:$0xff]
    %v487 = vld [vmem:[%s186 + $0x240] sm:$0xff]
    %v488 = vld [vmem:[%s186 + $0x248] sm:$0xff]
    %v489 = vld [vmem:[%s186 + $0x258] sm:$0xff]
    %v490 = vld [vmem:[%s186 + $0x260] sm:$0xff]
    %v491 = vld [vmem:[%s186 + $0x270] sm:$0xff]
    %v492 = vld [vmem:[%s186 + $0x278] sm:$0xff]
    %v493 = vld [vmem:[%s186 + $0x288] sm:$0xff]
    %v494 = vld [vmem:[%s186 + $0x290] sm:$0xff]
    %v495 = vld [vmem:[%s186 + $0x2a0] sm:$0xff]
    %v496 = vld [vmem:[%s186 + $0x2a8] sm:$0xff]
    %v497 = vld [vmem:[%s186 + $0x2b8] sm:$0xff]
    %v498 = vld [vmem:[%s186 + $0x2c0] sm:$0xff]
    %v499 = vld [vmem:[%s186 + $0x2d0] sm:$0xff]
    %v500 = vld [vmem:[%s186 + $0x2d8] sm:$0xff]
    %v501 = vld [vmem:[%s186 + $0x2e8] sm:$0xff]
    %v502 = vld [vmem:[%s186 + $0x2f0] sm:$0xff]
    %v503 = vld [vmem:[%s186 + $0x300] sm:$0xff]
    %v504 = vld [vmem:[%s186 + $0x308] sm:$0xff]
    %v505 = vld [vmem:[%s186 + $0x318] sm:$0xff]
    %v506 = vld [vmem:[%s186 + $0x320] sm:$0xff]
    %v507 = vld [vmem:[%s186 + $0x1] sm:$0xff]
    %v508 = vld [vmem:[%s186 + $0x9] sm:$0xff]
    %v509 = vld [vmem:[%s186 + $0x19] sm:$0xff]
    %v510 = vld [vmem:[%s186 + $0x21] sm:$0xff]
    %v511 = vld [vmem:[%s186 + $0x31] sm:$0xff]
    %v512 = vld [vmem:[%s186 + $0x39] sm:$0xff]
    %v513 = vld [vmem:[%s186 + $0x49] sm:$0xff]
    %v514 = vld [vmem:[%s186 + $0x51] sm:$0xff]
    %v515 = vld [vmem:[%s186 + $0x61] sm:$0xff]
    %v516 = vld [vmem:[%s186 + $0x69] sm:$0xff]
    %v517 = vld [vmem:[%s186 + $0x79] sm:$0xff]
    %v518 = vld [vmem:[%s186 + $0x81] sm:$0xff]
    %v519 = vld [vmem:[%s186 + $0x91] sm:$0xff]
    %v520 = vld [vmem:[%s186 + $0x99] sm:$0xff]
    %v521 = vld [vmem:[%s186 + $0xa9] sm:$0xff]
    %v522 = vld [vmem:[%s186 + $0xb1] sm:$0xff]
    %v523 = vld [vmem:[%s186 + $0xc1] sm:$0xff]
    %v524 = vld [vmem:[%s186 + $0xc9] sm:$0xff]
    %v525 = vld [vmem:[%s186 + $0xd9] sm:$0xff]
    %v526 = vld [vmem:[%s186 + $0xe1] sm:$0xff]
    %v527 = vld [vmem:[%s186 + $0xf1] sm:$0xff]
    %v528 = vld [vmem:[%s186 + $0xf9] sm:$0xff]
    %v529 = vld [vmem:[%s186 + $0x109] sm:$0xff]
    %v530 = vld [vmem:[%s186 + $0x111] sm:$0xff]
    %v531 = vld [vmem:[%s186 + $0x121] sm:$0xff]
    %v532 = vld [vmem:[%s186 + $0x129] sm:$0xff]
    %v533 = vld [vmem:[%s186 + $0x139] sm:$0xff]
    %v534 = vld [vmem:[%s186 + $0x141] sm:$0xff]
    %v535 = vld [vmem:[%s186 + $0x151] sm:$0xff]
    %v536 = vld [vmem:[%s186 + $0x159] sm:$0xff]
    %v537 = vld [vmem:[%s186 + $0x169] sm:$0xff]
    %v538 = vld [vmem:[%s186 + $0x171] sm:$0xff]
    %v539 = vld [vmem:[%s186 + $0x1b1] sm:$0xff]
    %v540 = vld [vmem:[%s186 + $0x1b9] sm:$0xff]
    %v541 = vld [vmem:[%s186 + $0x1c9] sm:$0xff]
    %v542 = vld [vmem:[%s186 + $0x1d1] sm:$0xff]
    %v543 = vld [vmem:[%s186 + $0x1e1] sm:$0xff]
    %v544 = vld [vmem:[%s186 + $0x1e9] sm:$0xff]
    %v545 = vld [vmem:[%s186 + $0x1f9] sm:$0xff]
    %v546 = vld [vmem:[%s186 + $0x201] sm:$0xff]
    %v547 = vld [vmem:[%s186 + $0x211] sm:$0xff]
    %v548 = vld [vmem:[%s186 + $0x219] sm:$0xff]
    %v549 = vld [vmem:[%s186 + $0x229] sm:$0xff]
    %v550 = vld [vmem:[%s186 + $0x231] sm:$0xff]
    %v551 = vld [vmem:[%s186 + $0x241] sm:$0xff]
    %v552 = vld [vmem:[%s186 + $0x249] sm:$0xff]
    %v553 = vld [vmem:[%s186 + $0x259] sm:$0xff]
    %v554 = vld [vmem:[%s186 + $0x261] sm:$0xff]
    %v555 = vld [vmem:[%s186 + $0x271] sm:$0xff]
    %v556 = vld [vmem:[%s186 + $0x279] sm:$0xff]
    %v557 = vld [vmem:[%s186 + $0x289] sm:$0xff]
    %v558 = vld [vmem:[%s186 + $0x291] sm:$0xff]
    %v559 = vld [vmem:[%s186 + $0x2a1] sm:$0xff]
    %v560 = vld [vmem:[%s186 + $0x2a9] sm:$0xff]
    %v561 = vld [vmem:[%s186 + $0x2b9] sm:$0xff]
    %v562 = vld [vmem:[%s186 + $0x2c1] sm:$0xff]
    %v563 = vld [vmem:[%s186 + $0x2d1] sm:$0xff]
    %v564 = vld [vmem:[%s186 + $0x2d9] sm:$0xff]
    %v565 = vld [vmem:[%s186 + $0x2e9] sm:$0xff]
    %v566 = vld [vmem:[%s186 + $0x2f1] sm:$0xff]
    %v567 = vld [vmem:[%s186 + $0x301] sm:$0xff]
    %v568 = vld [vmem:[%s186 + $0x309] sm:$0xff]
    %v569 = vld [vmem:[%s186 + $0x319] sm:$0xff]
    %v570 = vld [vmem:[%s186 + $0x321] sm:$0xff]
    %v571 = vld [vmem:[%s186 + $0x2] sm:$0xff]
    %v572 = vld [vmem:[%s186 + $0xa] sm:$0xff]
    %v573 = vld [vmem:[%s186 + $0x1a] sm:$0xff]
    %v574 = vld [vmem:[%s186 + $0x22] sm:$0xff]
    %v575 = vld [vmem:[%s186 + $0x32] sm:$0xff]
    %v576 = vld [vmem:[%s186 + $0x3a] sm:$0xff]
    %v577 = vld [vmem:[%s186 + $0x4a] sm:$0xff]
    %v578 = vld [vmem:[%s186 + $0x52] sm:$0xff]
    %v579 = vld [vmem:[%s186 + $0x62] sm:$0xff]
    %v580 = vld [vmem:[%s186 + $0x6a] sm:$0xff]
    %v581 = vld [vmem:[%s186 + $0x7a] sm:$0xff]
    %v582 = vld [vmem:[%s186 + $0x82] sm:$0xff]
    %v583 = vld [vmem:[%s186 + $0x92] sm:$0xff]
    %v584 = vld [vmem:[%s186 + $0x9a] sm:$0xff]
    %v585 = vld [vmem:[%s186 + $0xaa] sm:$0xff]
    %v586 = vld [vmem:[%s186 + $0xb2] sm:$0xff]
    %v587 = vld [vmem:[%s186 + $0xc2] sm:$0xff]
    %v588 = vld [vmem:[%s186 + $0xca] sm:$0xff]
    %v589 = vld [vmem:[%s186 + $0xda] sm:$0xff]
    %v590 = vld [vmem:[%s186 + $0xe2] sm:$0xff]
    %v591 = vld [vmem:[%s186 + $0xf2] sm:$0xff]
    %v592 = vld [vmem:[%s186 + $0xfa] sm:$0xff]
    %v593 = vld [vmem:[%s186 + $0x10a] sm:$0xff]
    %v594 = vld [vmem:[%s186 + $0x112] sm:$0xff]
    %v595 = vld [vmem:[%s186 + $0x122] sm:$0xff]
    %v596 = vld [vmem:[%s186 + $0x12a] sm:$0xff]
    %v597 = vld [vmem:[%s186 + $0x13a] sm:$0xff]
    %v598 = vld [vmem:[%s186 + $0x142] sm:$0xff]
    %v599 = vld [vmem:[%s186 + $0x152] sm:$0xff]
    %v600 = vld [vmem:[%s186 + $0x15a] sm:$0xff]
    %v601 = vld [vmem:[%s186 + $0x16a] sm:$0xff]
    %v602 = vld [vmem:[%s186 + $0x172] sm:$0xff]
    %v603 = vld [vmem:[%s186 + $0x1b2] sm:$0xff]
    %v604 = vld [vmem:[%s186 + $0x1ba] sm:$0xff]
    %v605 = vld [vmem:[%s186 + $0x1ca] sm:$0xff]
    %v606 = vld [vmem:[%s186 + $0x1d2] sm:$0xff]
    %v607 = vld [vmem:[%s186 + $0x1e2] sm:$0xff]
    %v608 = vld [vmem:[%s186 + $0x1ea] sm:$0xff]
    %v609 = vld [vmem:[%s186 + $0x1fa] sm:$0xff]
    %v610 = vld [vmem:[%s186 + $0x202] sm:$0xff]
    %v611 = vld [vmem:[%s186 + $0x212] sm:$0xff]
    %v612 = vld [vmem:[%s186 + $0x21a] sm:$0xff]
    %v613 = vld [vmem:[%s186 + $0x22a] sm:$0xff]
    %v614 = vld [vmem:[%s186 + $0x232] sm:$0xff]
    %v615 = vld [vmem:[%s186 + $0x242] sm:$0xff]
    %v616 = vld [vmem:[%s186 + $0x24a] sm:$0xff]
    %v617 = vld [vmem:[%s186 + $0x25a] sm:$0xff]
    %v618 = vld [vmem:[%s186 + $0x262] sm:$0xff]
    %v619 = vld [vmem:[%s186 + $0x272] sm:$0xff]
    %v620 = vld [vmem:[%s186 + $0x27a] sm:$0xff]
    %v621 = vld [vmem:[%s186 + $0x28a] sm:$0xff]
    %v622 = vld [vmem:[%s186 + $0x292] sm:$0xff]
    %v623 = vld [vmem:[%s186 + $0x2a2] sm:$0xff]
    %v624 = vld [vmem:[%s186 + $0x2aa] sm:$0xff]
    %v625 = vld [vmem:[%s186 + $0x2ba] sm:$0xff]
    %v626 = vld [vmem:[%s186 + $0x2c2] sm:$0xff]
    %v627 = vld [vmem:[%s186 + $0x2d2] sm:$0xff]
    %v628 = vld [vmem:[%s186 + $0x2da] sm:$0xff]
    %v629 = vld [vmem:[%s186 + $0x2ea] sm:$0xff]
    %v630 = vld [vmem:[%s186 + $0x2f2] sm:$0xff]
    %v631 = vld [vmem:[%s186 + $0x302] sm:$0xff]
    %v632 = vld [vmem:[%s186 + $0x30a] sm:$0xff]
    %v633 = vld [vmem:[%s186 + $0x31a] sm:$0xff]
    %v634 = vld [vmem:[%s186 + $0x322] sm:$0xff]
    %s635 = scalar_lea.vmem [#allocation2], 48
    %v636 = vld [vmem:[%s635] sm:$0xff]
    %v637 = vld [vmem:[%s635 + $0x8] sm:$0xff]
    %v638 = vld [vmem:[%s635 + $0x18] sm:$0xff]
    %v639 = vld [vmem:[%s635 + $0x20] sm:$0xff]
    %v640 = vld [vmem:[%s635 + $0x30] sm:$0xff]
    %v641 = vld [vmem:[%s635 + $0x38] sm:$0xff]
    %v642 = vld [vmem:[%s635 + $0x48] sm:$0xff]
    %v643 = vld [vmem:[%s635 + $0x50] sm:$0xff]
    %v644 = vld [vmem:[%s635 + $0x60] sm:$0xff]
    %v645 = vld [vmem:[%s635 + $0x68] sm:$0xff]
    %v646 = vld [vmem:[%s635 + $0x78] sm:$0xff]
    %v647 = vld [vmem:[%s635 + $0x80] sm:$0xff]
    %v648 = vld [vmem:[%s635 + $0x90] sm:$0xff]
    %v649 = vld [vmem:[%s635 + $0x98] sm:$0xff]
    %v650 = vld [vmem:[%s635 + $0xa8] sm:$0xff]
    %v651 = vld [vmem:[%s635 + $0xb0] sm:$0xff]
    %v652 = vld [vmem:[%s635 + $0xc0] sm:$0xff]
    %v653 = vld [vmem:[%s635 + $0xc8] sm:$0xff]
    %v654 = vld [vmem:[%s635 + $0xd8] sm:$0xff]
    %v655 = vld [vmem:[%s635 + $0xe0] sm:$0xff]
    %v656 = vld [vmem:[%s635 + $0xf0] sm:$0xff]
    %v657 = vld [vmem:[%s635 + $0xf8] sm:$0xff]
    %v658 = vld [vmem:[%s635 + $0x108] sm:$0xff]
    %v659 = vld [vmem:[%s635 + $0x110] sm:$0xff]
    %v660 = vld [vmem:[%s635 + $0x120] sm:$0xff]
    %v661 = vld [vmem:[%s635 + $0x128] sm:$0xff]
    %v662 = vld [vmem:[%s635 + $0x138] sm:$0xff]
    %v663 = vld [vmem:[%s635 + $0x140] sm:$0xff]
    %v664 = vld [vmem:[%s635 + $0x150] sm:$0xff]
    %v665 = vld [vmem:[%s635 + $0x158] sm:$0xff]
    %v666 = vld [vmem:[%s635 + $0x168] sm:$0xff]
    %v667 = vld [vmem:[%s635 + $0x170] sm:$0xff]
    %v668 = vld [vmem:[%s635 + $0x1b0] sm:$0xff]
    %v669 = vld [vmem:[%s635 + $0x1b8] sm:$0xff]
    %v670 = vld [vmem:[%s635 + $0x1c8] sm:$0xff]
    %v671 = vld [vmem:[%s635 + $0x1d0] sm:$0xff]
    %v672 = vld [vmem:[%s635 + $0x1e0] sm:$0xff]
    %v673 = vld [vmem:[%s635 + $0x1e8] sm:$0xff]
    %v674 = vld [vmem:[%s635 + $0x1f8] sm:$0xff]
    %v675 = vld [vmem:[%s635 + $0x200] sm:$0xff]
    %v676 = vld [vmem:[%s635 + $0x210] sm:$0xff]
    %v677 = vld [vmem:[%s635 + $0x218] sm:$0xff]
    %v678 = vld [vmem:[%s635 + $0x228] sm:$0xff]
    %v679 = vld [vmem:[%s635 + $0x230] sm:$0xff]
    %v680 = vld [vmem:[%s635 + $0x240] sm:$0xff]
    %v681 = vld [vmem:[%s635 + $0x248] sm:$0xff]
    %v682 = vld [vmem:[%s635 + $0x258] sm:$0xff]
    %v683 = vld [vmem:[%s635 + $0x260] sm:$0xff]
    %v684 = vld [vmem:[%s635 + $0x270] sm:$0xff]
    %v685 = vld [vmem:[%s635 + $0x278] sm:$0xff]
    %v686 = vld [vmem:[%s635 + $0x288] sm:$0xff]
    %v687 = vld [vmem:[%s635 + $0x290] sm:$0xff]
    %v688 = vld [vmem:[%s635 + $0x2a0] sm:$0xff]
    %v689 = vld [vmem:[%s635 + $0x2a8] sm:$0xff]
    %v690 = vld [vmem:[%s635 + $0x2b8] sm:$0xff]
    %v691 = vld [vmem:[%s635 + $0x2c0] sm:$0xff]
    %v692 = vld [vmem:[%s635 + $0x2d0] sm:$0xff]
    %v693 = vld [vmem:[%s635 + $0x2d8] sm:$0xff]
    %v694 = vld [vmem:[%s635 + $0x2e8] sm:$0xff]
    %v695 = vld [vmem:[%s635 + $0x2f0] sm:$0xff]
    %v696 = vld [vmem:[%s635 + $0x300] sm:$0xff]
    %v697 = vld [vmem:[%s635 + $0x308] sm:$0xff]
    %v698 = vld [vmem:[%s635 + $0x318] sm:$0xff]
    %v699 = vld [vmem:[%s635 + $0x320] sm:$0xff]
    %v700 = vld [vmem:[%s635 + $0x1] sm:$0xff]
    %v701 = vld [vmem:[%s635 + $0x9] sm:$0xff]
    %v702 = vld [vmem:[%s635 + $0x19] sm:$0xff]
    %v703 = vld [vmem:[%s635 + $0x21] sm:$0xff]
    %v704 = vld [vmem:[%s635 + $0x31] sm:$0xff]
    %v705 = vld [vmem:[%s635 + $0x39] sm:$0xff]
    %v706 = vld [vmem:[%s635 + $0x49] sm:$0xff]
    %v707 = vld [vmem:[%s635 + $0x51] sm:$0xff]
    %v708 = vld [vmem:[%s635 + $0x61] sm:$0xff]
    %v709 = vld [vmem:[%s635 + $0x69] sm:$0xff]
    %v710 = vld [vmem:[%s635 + $0x79] sm:$0xff]
    %v711 = vld [vmem:[%s635 + $0x81] sm:$0xff]
    %v712 = vld [vmem:[%s635 + $0x91] sm:$0xff]
    %v713 = vld [vmem:[%s635 + $0x99] sm:$0xff]
    %v714 = vld [vmem:[%s635 + $0xa9] sm:$0xff]
    %v715 = vld [vmem:[%s635 + $0xb1] sm:$0xff]
    %v716 = vld [vmem:[%s635 + $0xc1] sm:$0xff]
    %v717 = vld [vmem:[%s635 + $0xc9] sm:$0xff]
    %v718 = vld [vmem:[%s635 + $0xd9] sm:$0xff]
    %v719 = vld [vmem:[%s635 + $0xe1] sm:$0xff]
    %v720 = vld [vmem:[%s635 + $0xf1] sm:$0xff]
    %v721 = vld [vmem:[%s635 + $0xf9] sm:$0xff]
    %v722 = vld [vmem:[%s635 + $0x109] sm:$0xff]
    %v723 = vld [vmem:[%s635 + $0x111] sm:$0xff]
    %v724 = vld [vmem:[%s635 + $0x121] sm:$0xff]
    %v725 = vld [vmem:[%s635 + $0x129] sm:$0xff]
    %v726 = vld [vmem:[%s635 + $0x139] sm:$0xff]
    %v727 = vld [vmem:[%s635 + $0x141] sm:$0xff]
    %v728 = vld [vmem:[%s635 + $0x151] sm:$0xff]
    %v729 = vld [vmem:[%s635 + $0x159] sm:$0xff]
    %v730 = vld [vmem:[%s635 + $0x169] sm:$0xff]
    %v731 = vld [vmem:[%s635 + $0x171] sm:$0xff]
    %v732 = vld [vmem:[%s635 + $0x1b1] sm:$0xff]
    %v733 = vld [vmem:[%s635 + $0x1b9] sm:$0xff]
    %v734 = vld [vmem:[%s635 + $0x1c9] sm:$0xff]
    %v735 = vld [vmem:[%s635 + $0x1d1] sm:$0xff]
    %v736 = vld [vmem:[%s635 + $0x1e1] sm:$0xff]
    %v737 = vld [vmem:[%s635 + $0x1e9] sm:$0xff]
    %v738 = vld [vmem:[%s635 + $0x1f9] sm:$0xff]
    %v739 = vld [vmem:[%s635 + $0x201] sm:$0xff]
    %v740 = vld [vmem:[%s635 + $0x211] sm:$0xff]
    %v741 = vld [vmem:[%s635 + $0x219] sm:$0xff]
    %v742 = vld [vmem:[%s635 + $0x229] sm:$0xff]
    %v743 = vld [vmem:[%s635 + $0x231] sm:$0xff]
    %v744 = vld [vmem:[%s635 + $0x241] sm:$0xff]
    %v745 = vld [vmem:[%s635 + $0x249] sm:$0xff]
    %v746 = vld [vmem:[%s635 + $0x259] sm:$0xff]
    %v747 = vld [vmem:[%s635 + $0x261] sm:$0xff]
    %v748 = vld [vmem:[%s635 + $0x271] sm:$0xff]
    %v749 = vld [vmem:[%s635 + $0x279] sm:$0xff]
    %v750 = vld [vmem:[%s635 + $0x289] sm:$0xff]
    %v751 = vld [vmem:[%s635 + $0x291] sm:$0xff]
    %v752 = vld [vmem:[%s635 + $0x2a1] sm:$0xff]
    %v753 = vld [vmem:[%s635 + $0x2a9] sm:$0xff]
    %v754 = vld [vmem:[%s635 + $0x2b9] sm:$0xff]
    %v755 = vld [vmem:[%s635 + $0x2c1] sm:$0xff]
    %v756 = vld [vmem:[%s635 + $0x2d1] sm:$0xff]
    %v757 = vld [vmem:[%s635 + $0x2d9] sm:$0xff]
    %v758 = vld [vmem:[%s635 + $0x2e9] sm:$0xff]
    %v759 = vld [vmem:[%s635 + $0x2f1] sm:$0xff]
    %v760 = vld [vmem:[%s635 + $0x301] sm:$0xff]
    %v761 = vld [vmem:[%s635 + $0x309] sm:$0xff]
    %v762 = vld [vmem:[%s635 + $0x319] sm:$0xff]
    %v763 = vld [vmem:[%s635 + $0x321] sm:$0xff]
    %v764 = vld [vmem:[%s635 + $0x2] sm:$0xff]
    %v765 = vld [vmem:[%s635 + $0xa] sm:$0xff]
    %v766 = vld [vmem:[%s635 + $0x1a] sm:$0xff]
    %v767 = vld [vmem:[%s635 + $0x22] sm:$0xff]
    %v768 = vld [vmem:[%s635 + $0x32] sm:$0xff]
    %v769 = vld [vmem:[%s635 + $0x3a] sm:$0xff]
    %v770 = vld [vmem:[%s635 + $0x4a] sm:$0xff]
    %v771 = vld [vmem:[%s635 + $0x52] sm:$0xff]
    %v772 = vld [vmem:[%s635 + $0x62] sm:$0xff]
    %v773 = vld [vmem:[%s635 + $0x6a] sm:$0xff]
    %v774 = vld [vmem:[%s635 + $0x7a] sm:$0xff]
    %v775 = vld [vmem:[%s635 + $0x82] sm:$0xff]
    %v776 = vld [vmem:[%s635 + $0x92] sm:$0xff]
    %v777 = vld [vmem:[%s635 + $0x9a] sm:$0xff]
    %v778 = vld [vmem:[%s635 + $0xaa] sm:$0xff]
    %v779 = vld [vmem:[%s635 + $0xb2] sm:$0xff]
    %v780 = vld [vmem:[%s635 + $0xc2] sm:$0xff]
    %v781 = vld [vmem:[%s635 + $0xca] sm:$0xff]
    %v782 = vld [vmem:[%s635 + $0xda] sm:$0xff]
    %v783 = vld [vmem:[%s635 + $0xe2] sm:$0xff]
    %v784 = vld [vmem:[%s635 + $0xf2] sm:$0xff]
    %v785 = vld [vmem:[%s635 + $0xfa] sm:$0xff]
    %v786 = vld [vmem:[%s635 + $0x10a] sm:$0xff]
    %v787 = vld [vmem:[%s635 + $0x112] sm:$0xff]
    %v788 = vld [vmem:[%s635 + $0x122] sm:$0xff]
    %v789 = vld [vmem:[%s635 + $0x12a] sm:$0xff]
    %v790 = vld [vmem:[%s635 + $0x13a] sm:$0xff]
    %v791 = vld [vmem:[%s635 + $0x142] sm:$0xff]
    %v792 = vld [vmem:[%s635 + $0x152] sm:$0xff]
    %v793 = vld [vmem:[%s635 + $0x15a] sm:$0xff]
    %v794 = vld [vmem:[%s635 + $0x16a] sm:$0xff]
    %v795 = vld [vmem:[%s635 + $0x172] sm:$0xff]
    %v796 = vld [vmem:[%s635 + $0x1b2] sm:$0xff]
    %v797 = vld [vmem:[%s635 + $0x1ba] sm:$0xff]
    %v798 = vld [vmem:[%s635 + $0x1ca] sm:$0xff]
    %v799 = vld [vmem:[%s635 + $0x1d2] sm:$0xff]
    %v800 = vld [vmem:[%s635 + $0x1e2] sm:$0xff]
    %v801 = vld [vmem:[%s635 + $0x1ea] sm:$0xff]
    %v802 = vld [vmem:[%s635 + $0x1fa] sm:$0xff]
    %v803 = vld [vmem:[%s635 + $0x202] sm:$0xff]
    %v804 = vld [vmem:[%s635 + $0x212] sm:$0xff]
    %v805 = vld [vmem:[%s635 + $0x21a] sm:$0xff]
    %v806 = vld [vmem:[%s635 + $0x22a] sm:$0xff]
    %v807 = vld [vmem:[%s635 + $0x232] sm:$0xff]
    %v808 = vld [vmem:[%s635 + $0x242] sm:$0xff]
    %v809 = vld [vmem:[%s635 + $0x24a] sm:$0xff]
    %v810 = vld [vmem:[%s635 + $0x25a] sm:$0xff]
    %v811 = vld [vmem:[%s635 + $0x262] sm:$0xff]
    %v812 = vld [vmem:[%s635 + $0x272] sm:$0xff]
    %v813 = vld [vmem:[%s635 + $0x27a] sm:$0xff]
    %v814 = vld [vmem:[%s635 + $0x28a] sm:$0xff]
    %v815 = vld [vmem:[%s635 + $0x292] sm:$0xff]
    %v816 = vld [vmem:[%s635 + $0x2a2] sm:$0xff]
    %v817 = vld [vmem:[%s635 + $0x2aa] sm:$0xff]
    %v818 = vld [vmem:[%s635 + $0x2ba] sm:$0xff]
    %v819 = vld [vmem:[%s635 + $0x2c2] sm:$0xff]
    %v820 = vld [vmem:[%s635 + $0x2d2] sm:$0xff]
    %v821 = vld [vmem:[%s635 + $0x2da] sm:$0xff]
    %v822 = vld [vmem:[%s635 + $0x2ea] sm:$0xff]
    %v823 = vld [vmem:[%s635 + $0x2f2] sm:$0xff]
    %v824 = vld [vmem:[%s635 + $0x302] sm:$0xff]
    %v825 = vld [vmem:[%s635 + $0x30a] sm:$0xff]
    %v826 = vld [vmem:[%s635 + $0x31a] sm:$0xff]
    %v827 = vld [vmem:[%s635 + $0x322] sm:$0xff]
    %892 = vrot.lane.b32.xlu0 %v315, 4
    %v893 = vpop.permute.xlu0 %892
    %894 = vrot.lane.b32.xlu0 %v316, 4
    %v895 = vpop.permute.xlu0 %894
    %896 = vrot.lane.b32.xlu0 %v317, 4
    %v897 = vpop.permute.xlu0 %896
    %898 = vrot.lane.b32.xlu0 %v318, 4
    %v899 = vpop.permute.xlu0 %898
    %900 = vrot.lane.b32.xlu0 %v319, 4
    %v901 = vpop.permute.xlu0 %900
    %902 = vrot.lane.b32.xlu0 %v320, 4
    %v903 = vpop.permute.xlu0 %902
    %904 = vrot.lane.b32.xlu0 %v321, 4
    %v905 = vpop.permute.xlu0 %904
    %906 = vrot.lane.b32.xlu0 %v322, 4
    %v907 = vpop.permute.xlu0 %906
    %908 = vrot.lane.b32.xlu0 %v323, 4
    %v909 = vpop.permute.xlu0 %908
    %910 = vrot.lane.b32.xlu0 %v324, 4
    %v911 = vpop.permute.xlu0 %910
    %912 = vrot.lane.b32.xlu0 %v325, 4
    %v913 = vpop.permute.xlu0 %912
    %914 = vrot.lane.b32.xlu0 %v326, 4
    %v915 = vpop.permute.xlu0 %914
    %916 = vrot.lane.b32.xlu0 %v327, 4
    %v917 = vpop.permute.xlu0 %916
    %918 = vrot.lane.b32.xlu0 %v328, 4
    %v919 = vpop.permute.xlu0 %918
    %920 = vrot.lane.b32.xlu0 %v329, 4
    %v921 = vpop.permute.xlu0 %920
    %922 = vrot.lane.b32.xlu0 %v330, 4
    %v923 = vpop.permute.xlu0 %922
    %924 = vrot.lane.b32.xlu0 %v331, 4
    %v925 = vpop.permute.xlu0 %924
    %926 = vrot.lane.b32.xlu0 %v332, 4
    %v927 = vpop.permute.xlu0 %926
    %928 = vrot.lane.b32.xlu0 %v333, 4
    %v929 = vpop.permute.xlu0 %928
    %930 = vrot.lane.b32.xlu0 %v334, 4
    %v931 = vpop.permute.xlu0 %930
    %932 = vrot.lane.b32.xlu0 %v335, 4
    %v933 = vpop.permute.xlu0 %932
    %934 = vrot.lane.b32.xlu0 %v336, 4
    %v935 = vpop.permute.xlu0 %934
    %936 = vrot.lane.b32.xlu0 %v337, 4
    %v937 = vpop.permute.xlu0 %936
    %938 = vrot.lane.b32.xlu0 %v338, 4
    %v939 = vpop.permute.xlu0 %938
    %940 = vrot.lane.b32.xlu0 %v339, 4
    %v941 = vpop.permute.xlu0 %940
    %942 = vrot.lane.b32.xlu0 %v340, 4
    %v943 = vpop.permute.xlu0 %942
    %944 = vrot.lane.b32.xlu0 %v341, 4
    %v945 = vpop.permute.xlu0 %944
    %946 = vrot.lane.b32.xlu0 %v342, 4
    %v947 = vpop.permute.xlu0 %946
    %948 = vrot.lane.b32.xlu0 %v343, 4
    %v949 = vpop.permute.xlu0 %948
    %950 = vrot.lane.b32.xlu0 %v344, 4
    %v951 = vpop.permute.xlu0 %950
    %952 = vrot.lane.b32.xlu0 %v345, 4
    %v953 = vpop.permute.xlu0 %952
    %954 = vrot.lane.b32.xlu0 %v346, 4
    %v955 = vpop.permute.xlu0 %954
    %956 = vrot.lane.b32.xlu0 %v347, 4
    %v957 = vpop.permute.xlu0 %956
    %958 = vrot.lane.b32.xlu0 %v348, 4
    %v959 = vpop.permute.xlu0 %958
    %960 = vrot.lane.b32.xlu0 %v349, 4
    %v961 = vpop.permute.xlu0 %960
    %962 = vrot.lane.b32.xlu0 %v350, 4
    %v963 = vpop.permute.xlu0 %962
    %964 = vrot.lane.b32.xlu0 %v351, 4
    %v965 = vpop.permute.xlu0 %964
    %966 = vrot.lane.b32.xlu0 %v352, 4
    %v967 = vpop.permute.xlu0 %966
    %968 = vrot.lane.b32.xlu0 %v353, 4
    %v969 = vpop.permute.xlu0 %968
    %970 = vrot.lane.b32.xlu0 %v354, 4
    %v971 = vpop.permute.xlu0 %970
    %972 = vrot.lane.b32.xlu0 %v355, 4
    %v973 = vpop.permute.xlu0 %972
    %974 = vrot.lane.b32.xlu0 %v356, 4
    %v975 = vpop.permute.xlu0 %974
    %976 = vrot.lane.b32.xlu0 %v357, 4
    %v977 = vpop.permute.xlu0 %976
    %978 = vrot.lane.b32.xlu0 %v358, 4
    %v979 = vpop.permute.xlu0 %978
    %980 = vrot.lane.b32.xlu0 %v359, 4
    %v981 = vpop.permute.xlu0 %980
    %982 = vrot.lane.b32.xlu0 %v360, 4
    %v983 = vpop.permute.xlu0 %982
    %984 = vrot.lane.b32.xlu0 %v361, 4
    %v985 = vpop.permute.xlu0 %984
    %986 = vrot.lane.b32.xlu0 %v362, 4
    %v987 = vpop.permute.xlu0 %986
    %988 = vrot.lane.b32.xlu0 %v363, 4
    %v989 = vpop.permute.xlu0 %988
    %990 = vrot.lane.b32.xlu0 %v364, 4
    %v991 = vpop.permute.xlu0 %990
    %992 = vrot.lane.b32.xlu0 %v365, 4
    %v993 = vpop.permute.xlu0 %992
    %994 = vrot.lane.b32.xlu0 %v366, 4
    %v995 = vpop.permute.xlu0 %994
    %996 = vrot.lane.b32.xlu0 %v367, 4
    %v997 = vpop.permute.xlu0 %996
    %998 = vrot.lane.b32.xlu0 %v368, 4
    %v999 = vpop.permute.xlu0 %998
    %1000 = vrot.lane.b32.xlu0 %v369, 4
    %v1001 = vpop.permute.xlu0 %1000
    %1002 = vrot.lane.b32.xlu0 %v370, 4
    %v1003 = vpop.permute.xlu0 %1002
    %1004 = vrot.lane.b32.xlu0 %v371, 4
    %v1005 = vpop.permute.xlu0 %1004
    %1006 = vrot.lane.b32.xlu0 %v372, 4
    %v1007 = vpop.permute.xlu0 %1006
    %1008 = vrot.lane.b32.xlu0 %v373, 4
    %v1009 = vpop.permute.xlu0 %1008
    %1010 = vrot.lane.b32.xlu0 %v374, 4
    %v1011 = vpop.permute.xlu0 %1010
    %1012 = vrot.lane.b32.xlu0 %v375, 4
    %v1013 = vpop.permute.xlu0 %1012
    %1014 = vrot.lane.b32.xlu0 %v376, 4
    %v1015 = vpop.permute.xlu0 %1014
    %1016 = vrot.lane.b32.xlu0 %v377, 4
    %v1017 = vpop.permute.xlu0 %1016
    %1018 = vrot.lane.b32.xlu0 %v378, 4
    %v1019 = vpop.permute.xlu0 %1018
    %1148 = vrot.lane.b32.xlu0 %v379, 8
    %v1149 = vpop.permute.xlu0 %1148
    %1150 = vrot.lane.b32.xlu0 %v380, 8
    %v1151 = vpop.permute.xlu0 %1150
    %1152 = vrot.lane.b32.xlu0 %v381, 8
    %v1153 = vpop.permute.xlu0 %1152
    %1154 = vrot.lane.b32.xlu0 %v382, 8
    %v1155 = vpop.permute.xlu0 %1154
    %1156 = vrot.lane.b32.xlu0 %v383, 8
    %v1157 = vpop.permute.xlu0 %1156
    %1158 = vrot.lane.b32.xlu0 %v384, 8
    %v1159 = vpop.permute.xlu0 %1158
    %1160 = vrot.lane.b32.xlu0 %v385, 8
    %v1161 = vpop.permute.xlu0 %1160
    %1162 = vrot.lane.b32.xlu0 %v386, 8
    %v1163 = vpop.permute.xlu0 %1162
    %1164 = vrot.lane.b32.xlu0 %v387, 8
    %v1165 = vpop.permute.xlu0 %1164
    %1166 = vrot.lane.b32.xlu0 %v388, 8
    %v1167 = vpop.permute.xlu0 %1166
    %1168 = vrot.lane.b32.xlu0 %v389, 8
    %v1169 = vpop.permute.xlu0 %1168
    %1170 = vrot.lane.b32.xlu0 %v390, 8
    %v1171 = vpop.permute.xlu0 %1170
    %1172 = vrot.lane.b32.xlu0 %v391, 8
    %v1173 = vpop.permute.xlu0 %1172
    %1174 = vrot.lane.b32.xlu0 %v392, 8
    %v1175 = vpop.permute.xlu0 %1174
    %1176 = vrot.lane.b32.xlu0 %v393, 8
    %v1177 = vpop.permute.xlu0 %1176
    %1178 = vrot.lane.b32.xlu0 %v394, 8
    %v1179 = vpop.permute.xlu0 %1178
    %1180 = vrot.lane.b32.xlu0 %v395, 8
    %v1181 = vpop.permute.xlu0 %1180
    %1182 = vrot.lane.b32.xlu0 %v396, 8
    %v1183 = vpop.permute.xlu0 %1182
    %1184 = vrot.lane.b32.xlu0 %v397, 8
    %v1185 = vpop.permute.xlu0 %1184
    %1186 = vrot.lane.b32.xlu0 %v398, 8
    %v1187 = vpop.permute.xlu0 %1186
    %1188 = vrot.lane.b32.xlu0 %v399, 8
    %v1189 = vpop.permute.xlu0 %1188
    %1190 = vrot.lane.b32.xlu0 %v400, 8
    %v1191 = vpop.permute.xlu0 %1190
    %1192 = vrot.lane.b32.xlu0 %v401, 8
    %v1193 = vpop.permute.xlu0 %1192
    %1194 = vrot.lane.b32.xlu0 %v402, 8
    %v1195 = vpop.permute.xlu0 %1194
    %1196 = vrot.lane.b32.xlu0 %v403, 8
    %v1197 = vpop.permute.xlu0 %1196
    %1198 = vrot.lane.b32.xlu0 %v404, 8
    %v1199 = vpop.permute.xlu0 %1198
    %1200 = vrot.lane.b32.xlu0 %v405, 8
    %v1201 = vpop.permute.xlu0 %1200
    %1202 = vrot.lane.b32.xlu0 %v406, 8
    %v1203 = vpop.permute.xlu0 %1202
    %1204 = vrot.lane.b32.xlu0 %v407, 8
    %v1205 = vpop.permute.xlu0 %1204
    %1206 = vrot.lane.b32.xlu0 %v408, 8
    %v1207 = vpop.permute.xlu0 %1206
    %1208 = vrot.lane.b32.xlu0 %v409, 8
    %v1209 = vpop.permute.xlu0 %1208
    %1210 = vrot.lane.b32.xlu0 %v410, 8
    %v1211 = vpop.permute.xlu0 %1210
    %1212 = vrot.lane.b32.xlu0 %v411, 8
    %v1213 = vpop.permute.xlu0 %1212
    %1214 = vrot.lane.b32.xlu0 %v412, 8
    %v1215 = vpop.permute.xlu0 %1214
    %1216 = vrot.lane.b32.xlu0 %v413, 8
    %v1217 = vpop.permute.xlu0 %1216
    %1218 = vrot.lane.b32.xlu0 %v414, 8
    %v1219 = vpop.permute.xlu0 %1218
    %1220 = vrot.lane.b32.xlu0 %v415, 8
    %v1221 = vpop.permute.xlu0 %1220
    %1222 = vrot.lane.b32.xlu0 %v416, 8
    %v1223 = vpop.permute.xlu0 %1222
    %1224 = vrot.lane.b32.xlu0 %v417, 8
    %v1225 = vpop.permute.xlu0 %1224
    %1226 = vrot.lane.b32.xlu0 %v418, 8
    %v1227 = vpop.permute.xlu0 %1226
    %1228 = vrot.lane.b32.xlu0 %v419, 8
    %v1229 = vpop.permute.xlu0 %1228
    %1230 = vrot.lane.b32.xlu0 %v420, 8
    %v1231 = vpop.permute.xlu0 %1230
    %1232 = vrot.lane.b32.xlu0 %v421, 8
    %v1233 = vpop.permute.xlu0 %1232
    %1234 = vrot.lane.b32.xlu0 %v422, 8
    %v1235 = vpop.permute.xlu0 %1234
    %1236 = vrot.lane.b32.xlu0 %v423, 8
    %v1237 = vpop.permute.xlu0 %1236
    %1238 = vrot.lane.b32.xlu0 %v424, 8
    %v1239 = vpop.permute.xlu0 %1238
    %1240 = vrot.lane.b32.xlu0 %v425, 8
    %v1241 = vpop.permute.xlu0 %1240
    %1242 = vrot.lane.b32.xlu0 %v426, 8
    %v1243 = vpop.permute.xlu0 %1242
    %1244 = vrot.lane.b32.xlu0 %v427, 8
    %v1245 = vpop.permute.xlu0 %1244
    %1246 = vrot.lane.b32.xlu0 %v428, 8
    %v1247 = vpop.permute.xlu0 %1246
    %1248 = vrot.lane.b32.xlu0 %v429, 8
    %v1249 = vpop.permute.xlu0 %1248
    %1250 = vrot.lane.b32.xlu0 %v430, 8
    %v1251 = vpop.permute.xlu0 %1250
    %1252 = vrot.lane.b32.xlu0 %v431, 8
    %v1253 = vpop.permute.xlu0 %1252
    %1254 = vrot.lane.b32.xlu0 %v432, 8
    %v1255 = vpop.permute.xlu0 %1254
    %1256 = vrot.lane.b32.xlu0 %v433, 8
    %v1257 = vpop.permute.xlu0 %1256
    %1258 = vrot.lane.b32.xlu0 %v434, 8
    %v1259 = vpop.permute.xlu0 %1258
    %1260 = vrot.lane.b32.xlu0 %v435, 8
    %v1261 = vpop.permute.xlu0 %1260
    %1262 = vrot.lane.b32.xlu0 %v436, 8
    %v1263 = vpop.permute.xlu0 %1262
    %1264 = vrot.lane.b32.xlu0 %v437, 8
    %v1265 = vpop.permute.xlu0 %1264
    %1266 = vrot.lane.b32.xlu0 %v438, 8
    %v1267 = vpop.permute.xlu0 %1266
    %1268 = vrot.lane.b32.xlu0 %v439, 8
    %v1269 = vpop.permute.xlu0 %1268
    %1270 = vrot.lane.b32.xlu0 %v440, 8
    %v1271 = vpop.permute.xlu0 %1270
    %1272 = vrot.lane.b32.xlu0 %v441, 8
    %v1273 = vpop.permute.xlu0 %1272
    %1274 = vrot.lane.b32.xlu0 %v442, 8
    %v1275 = vpop.permute.xlu0 %1274
    %1404 = vrot.lane.b32.xlu0 %v443, 12
    %v1405 = vpop.permute.xlu0 %1404
    %1406 = vrot.lane.b32.xlu0 %v444, 12
    %v1407 = vpop.permute.xlu0 %1406
    %1408 = vrot.lane.b32.xlu0 %v445, 12
    %v1409 = vpop.permute.xlu0 %1408
    %1410 = vrot.lane.b32.xlu0 %v446, 12
    %v1411 = vpop.permute.xlu0 %1410
    %1412 = vrot.lane.b32.xlu0 %v447, 12
    %v1413 = vpop.permute.xlu0 %1412
    %1414 = vrot.lane.b32.xlu0 %v448, 12
    %v1415 = vpop.permute.xlu0 %1414
    %1416 = vrot.lane.b32.xlu0 %v449, 12
    %v1417 = vpop.permute.xlu0 %1416
    %1418 = vrot.lane.b32.xlu0 %v450, 12
    %v1419 = vpop.permute.xlu0 %1418
    %1420 = vrot.lane.b32.xlu0 %v451, 12
    %v1421 = vpop.permute.xlu0 %1420
    %1422 = vrot.lane.b32.xlu0 %v452, 12
    %v1423 = vpop.permute.xlu0 %1422
    %1424 = vrot.lane.b32.xlu0 %v453, 12
    %v1425 = vpop.permute.xlu0 %1424
    %1426 = vrot.lane.b32.xlu0 %v454, 12
    %v1427 = vpop.permute.xlu0 %1426
    %1428 = vrot.lane.b32.xlu0 %v455, 12
    %v1429 = vpop.permute.xlu0 %1428
    %1430 = vrot.lane.b32.xlu0 %v456, 12
    %v1431 = vpop.permute.xlu0 %1430
    %1432 = vrot.lane.b32.xlu0 %v457, 12
    %v1433 = vpop.permute.xlu0 %1432
    %1434 = vrot.lane.b32.xlu0 %v458, 12
    %v1435 = vpop.permute.xlu0 %1434
    %1436 = vrot.lane.b32.xlu0 %v459, 12
    %v1437 = vpop.permute.xlu0 %1436
    %1438 = vrot.lane.b32.xlu0 %v460, 12
    %v1439 = vpop.permute.xlu0 %1438
    %1440 = vrot.lane.b32.xlu0 %v461, 12
    %v1441 = vpop.permute.xlu0 %1440
    %1442 = vrot.lane.b32.xlu0 %v462, 12
    %v1443 = vpop.permute.xlu0 %1442
    %1444 = vrot.lane.b32.xlu0 %v463, 12
    %v1445 = vpop.permute.xlu0 %1444
    %1446 = vrot.lane.b32.xlu0 %v464, 12
    %v1447 = vpop.permute.xlu0 %1446
    %1448 = vrot.lane.b32.xlu0 %v465, 12
    %v1449 = vpop.permute.xlu0 %1448
    %1450 = vrot.lane.b32.xlu0 %v466, 12
    %v1451 = vpop.permute.xlu0 %1450
    %1452 = vrot.lane.b32.xlu0 %v467, 12
    %v1453 = vpop.permute.xlu0 %1452
    %1454 = vrot.lane.b32.xlu0 %v468, 12
    %v1455 = vpop.permute.xlu0 %1454
    %1456 = vrot.lane.b32.xlu0 %v469, 12
    %v1457 = vpop.permute.xlu0 %1456
    %1458 = vrot.lane.b32.xlu0 %v470, 12
    %v1459 = vpop.permute.xlu0 %1458
    %1460 = vrot.lane.b32.xlu0 %v471, 12
    %v1461 = vpop.permute.xlu0 %1460
    %1462 = vrot.lane.b32.xlu0 %v472, 12
    %v1463 = vpop.permute.xlu0 %1462
    %1464 = vrot.lane.b32.xlu0 %v473, 12
    %v1465 = vpop.permute.xlu0 %1464
    %1466 = vrot.lane.b32.xlu0 %v474, 12
    %v1467 = vpop.permute.xlu0 %1466
    %1468 = vrot.lane.b32.xlu0 %v475, 12
    %v1469 = vpop.permute.xlu0 %1468
    %1470 = vrot.lane.b32.xlu0 %v476, 12
    %v1471 = vpop.permute.xlu0 %1470
    %1472 = vrot.lane.b32.xlu0 %v477, 12
    %v1473 = vpop.permute.xlu0 %1472
    %1474 = vrot.lane.b32.xlu0 %v478, 12
    %v1475 = vpop.permute.xlu0 %1474
    %1476 = vrot.lane.b32.xlu0 %v479, 12
    %v1477 = vpop.permute.xlu0 %1476
    %1478 = vrot.lane.b32.xlu0 %v480, 12
    %v1479 = vpop.permute.xlu0 %1478
    %1480 = vrot.lane.b32.xlu0 %v481, 12
    %v1481 = vpop.permute.xlu0 %1480
    %1482 = vrot.lane.b32.xlu0 %v482, 12
    %v1483 = vpop.permute.xlu0 %1482
    %1484 = vrot.lane.b32.xlu0 %v483, 12
    %v1485 = vpop.permute.xlu0 %1484
    %1486 = vrot.lane.b32.xlu0 %v484, 12
    %v1487 = vpop.permute.xlu0 %1486
    %1488 = vrot.lane.b32.xlu0 %v485, 12
    %v1489 = vpop.permute.xlu0 %1488
    %1490 = vrot.lane.b32.xlu0 %v486, 12
    %v1491 = vpop.permute.xlu0 %1490
    %1492 = vrot.lane.b32.xlu0 %v487, 12
    %v1493 = vpop.permute.xlu0 %1492
    %1494 = vrot.lane.b32.xlu0 %v488, 12
    %v1495 = vpop.permute.xlu0 %1494
    %1496 = vrot.lane.b32.xlu0 %v489, 12
    %v1497 = vpop.permute.xlu0 %1496
    %1498 = vrot.lane.b32.xlu0 %v490, 12
    %v1499 = vpop.permute.xlu0 %1498
    %1500 = vrot.lane.b32.xlu0 %v491, 12
    %v1501 = vpop.permute.xlu0 %1500
    %1502 = vrot.lane.b32.xlu0 %v492, 12
    %v1503 = vpop.permute.xlu0 %1502
    %1504 = vrot.lane.b32.xlu0 %v493, 12
    %v1505 = vpop.permute.xlu0 %1504
    %1506 = vrot.lane.b32.xlu0 %v494, 12
    %v1507 = vpop.permute.xlu0 %1506
    %1508 = vrot.lane.b32.xlu0 %v495, 12
    %v1509 = vpop.permute.xlu0 %1508
    %1510 = vrot.lane.b32.xlu0 %v496, 12
    %v1511 = vpop.permute.xlu0 %1510
    %1512 = vrot.lane.b32.xlu0 %v497, 12
    %v1513 = vpop.permute.xlu0 %1512
    %1514 = vrot.lane.b32.xlu0 %v498, 12
    %v1515 = vpop.permute.xlu0 %1514
    %1516 = vrot.lane.b32.xlu0 %v499, 12
    %v1517 = vpop.permute.xlu0 %1516
    %1518 = vrot.lane.b32.xlu0 %v500, 12
    %v1519 = vpop.permute.xlu0 %1518
    %1520 = vrot.lane.b32.xlu0 %v501, 12
    %v1521 = vpop.permute.xlu0 %1520
    %1522 = vrot.lane.b32.xlu0 %v502, 12
    %v1523 = vpop.permute.xlu0 %1522
    %1524 = vrot.lane.b32.xlu0 %v503, 12
    %v1525 = vpop.permute.xlu0 %1524
    %1526 = vrot.lane.b32.xlu0 %v504, 12
    %v1527 = vpop.permute.xlu0 %1526
    %1528 = vrot.lane.b32.xlu0 %v505, 12
    %v1529 = vpop.permute.xlu0 %1528
    %1530 = vrot.lane.b32.xlu0 %v506, 12
    %v1531 = vpop.permute.xlu0 %1530
    %1660 = vrot.lane.b32.xlu0 %v507, 16
    %v1661 = vpop.permute.xlu0 %1660
    %1662 = vrot.lane.b32.xlu0 %v508, 16
    %v1663 = vpop.permute.xlu0 %1662
    %1664 = vrot.lane.b32.xlu0 %v509, 16
    %v1665 = vpop.permute.xlu0 %1664
    %1666 = vrot.lane.b32.xlu0 %v510, 16
    %v1667 = vpop.permute.xlu0 %1666
    %1668 = vrot.lane.b32.xlu0 %v511, 16
    %v1669 = vpop.permute.xlu0 %1668
    %1670 = vrot.lane.b32.xlu0 %v512, 16
    %v1671 = vpop.permute.xlu0 %1670
    %1672 = vrot.lane.b32.xlu0 %v513, 16
    %v1673 = vpop.permute.xlu0 %1672
    %1674 = vrot.lane.b32.xlu0 %v514, 16
    %v1675 = vpop.permute.xlu0 %1674
    %1676 = vrot.lane.b32.xlu0 %v515, 16
    %v1677 = vpop.permute.xlu0 %1676
    %1678 = vrot.lane.b32.xlu0 %v516, 16
    %v1679 = vpop.permute.xlu0 %1678
    %1680 = vrot.lane.b32.xlu0 %v517, 16
    %v1681 = vpop.permute.xlu0 %1680
    %1682 = vrot.lane.b32.xlu0 %v518, 16
    %v1683 = vpop.permute.xlu0 %1682
    %1684 = vrot.lane.b32.xlu0 %v519, 16
    %v1685 = vpop.permute.xlu0 %1684
    %1686 = vrot.lane.b32.xlu0 %v520, 16
    %v1687 = vpop.permute.xlu0 %1686
    %1688 = vrot.lane.b32.xlu0 %v521, 16
    %v1689 = vpop.permute.xlu0 %1688
    %1690 = vrot.lane.b32.xlu0 %v522, 16
    %v1691 = vpop.permute.xlu0 %1690
    %1692 = vrot.lane.b32.xlu0 %v523, 16
    %v1693 = vpop.permute.xlu0 %1692
    %1694 = vrot.lane.b32.xlu0 %v524, 16
    %v1695 = vpop.permute.xlu0 %1694
    %1696 = vrot.lane.b32.xlu0 %v525, 16
    %v1697 = vpop.permute.xlu0 %1696
    %1698 = vrot.lane.b32.xlu0 %v526, 16
    %v1699 = vpop.permute.xlu0 %1698
    %1700 = vrot.lane.b32.xlu0 %v527, 16
    %v1701 = vpop.permute.xlu0 %1700
    %1702 = vrot.lane.b32.xlu0 %v528, 16
    %v1703 = vpop.permute.xlu0 %1702
    %1704 = vrot.lane.b32.xlu0 %v529, 16
    %v1705 = vpop.permute.xlu0 %1704
    %1706 = vrot.lane.b32.xlu0 %v530, 16
    %v1707 = vpop.permute.xlu0 %1706
    %1708 = vrot.lane.b32.xlu0 %v531, 16
    %v1709 = vpop.permute.xlu0 %1708
    %1710 = vrot.lane.b32.xlu0 %v532, 16
    %v1711 = vpop.permute.xlu0 %1710
    %1712 = vrot.lane.b32.xlu0 %v533, 16
    %v1713 = vpop.permute.xlu0 %1712
    %1714 = vrot.lane.b32.xlu0 %v534, 16
    %v1715 = vpop.permute.xlu0 %1714
    %1716 = vrot.lane.b32.xlu0 %v535, 16
    %v1717 = vpop.permute.xlu0 %1716
    %1718 = vrot.lane.b32.xlu0 %v536, 16
    %v1719 = vpop.permute.xlu0 %1718
    %1720 = vrot.lane.b32.xlu0 %v537, 16
    %v1721 = vpop.permute.xlu0 %1720
    %1722 = vrot.lane.b32.xlu0 %v538, 16
    %v1723 = vpop.permute.xlu0 %1722
    %1724 = vrot.lane.b32.xlu0 %v539, 16
    %v1725 = vpop.permute.xlu0 %1724
    %1726 = vrot.lane.b32.xlu0 %v540, 16
    %v1727 = vpop.permute.xlu0 %1726
    %1728 = vrot.lane.b32.xlu0 %v541, 16
    %v1729 = vpop.permute.xlu0 %1728
    %1730 = vrot.lane.b32.xlu0 %v542, 16
    %v1731 = vpop.permute.xlu0 %1730
    %1732 = vrot.lane.b32.xlu0 %v543, 16
    %v1733 = vpop.permute.xlu0 %1732
    %1734 = vrot.lane.b32.xlu0 %v544, 16
    %v1735 = vpop.permute.xlu0 %1734
    %1736 = vrot.lane.b32.xlu0 %v545, 16
    %v1737 = vpop.permute.xlu0 %1736
    %1738 = vrot.lane.b32.xlu0 %v546, 16
    %v1739 = vpop.permute.xlu0 %1738
    %1740 = vrot.lane.b32.xlu0 %v547, 16
    %v1741 = vpop.permute.xlu0 %1740
    %1742 = vrot.lane.b32.xlu0 %v548, 16
    %v1743 = vpop.permute.xlu0 %1742
    %1744 = vrot.lane.b32.xlu0 %v549, 16
    %v1745 = vpop.permute.xlu0 %1744
    %1746 = vrot.lane.b32.xlu0 %v550, 16
    %v1747 = vpop.permute.xlu0 %1746
    %1748 = vrot.lane.b32.xlu0 %v551, 16
    %v1749 = vpop.permute.xlu0 %1748
    %1750 = vrot.lane.b32.xlu0 %v552, 16
    %v1751 = vpop.permute.xlu0 %1750
    %1752 = vrot.lane.b32.xlu0 %v553, 16
    %v1753 = vpop.permute.xlu0 %1752
    %1754 = vrot.lane.b32.xlu0 %v554, 16
    %v1755 = vpop.permute.xlu0 %1754
    %1756 = vrot.lane.b32.xlu0 %v555, 16
    %v1757 = vpop.permute.xlu0 %1756
    %1758 = vrot.lane.b32.xlu0 %v556, 16
    %v1759 = vpop.permute.xlu0 %1758
    %1760 = vrot.lane.b32.xlu0 %v557, 16
    %v1761 = vpop.permute.xlu0 %1760
    %1762 = vrot.lane.b32.xlu0 %v558, 16
    %v1763 = vpop.permute.xlu0 %1762
    %1764 = vrot.lane.b32.xlu0 %v559, 16
    %v1765 = vpop.permute.xlu0 %1764
    %1766 = vrot.lane.b32.xlu0 %v560, 16
    %v1767 = vpop.permute.xlu0 %1766
    %1768 = vrot.lane.b32.xlu0 %v561, 16
    %v1769 = vpop.permute.xlu0 %1768
    %1770 = vrot.lane.b32.xlu0 %v562, 16
    %v1771 = vpop.permute.xlu0 %1770
    %1772 = vrot.lane.b32.xlu0 %v563, 16
    %v1773 = vpop.permute.xlu0 %1772
    %1774 = vrot.lane.b32.xlu0 %v564, 16
    %v1775 = vpop.permute.xlu0 %1774
    %1776 = vrot.lane.b32.xlu0 %v565, 16
    %v1777 = vpop.permute.xlu0 %1776
    %1778 = vrot.lane.b32.xlu0 %v566, 16
    %v1779 = vpop.permute.xlu0 %1778
    %1780 = vrot.lane.b32.xlu0 %v567, 16
    %v1781 = vpop.permute.xlu0 %1780
    %1782 = vrot.lane.b32.xlu0 %v568, 16
    %v1783 = vpop.permute.xlu0 %1782
    %1784 = vrot.lane.b32.xlu0 %v569, 16
    %v1785 = vpop.permute.xlu0 %1784
    %1786 = vrot.lane.b32.xlu0 %v570, 16
    %v1787 = vpop.permute.xlu0 %1786
    %1916 = vrot.lane.b32.xlu0 %v571, 20
    %v1917 = vpop.permute.xlu0 %1916
    %1918 = vrot.lane.b32.xlu0 %v572, 20
    %v1919 = vpop.permute.xlu0 %1918
    %1920 = vrot.lane.b32.xlu0 %v573, 20
    %v1921 = vpop.permute.xlu0 %1920
    %1922 = vrot.lane.b32.xlu0 %v574, 20
    %v1923 = vpop.permute.xlu0 %1922
    %1924 = vrot.lane.b32.xlu0 %v575, 20
    %v1925 = vpop.permute.xlu0 %1924
    %1926 = vrot.lane.b32.xlu0 %v576, 20
    %v1927 = vpop.permute.xlu0 %1926
    %1928 = vrot.lane.b32.xlu0 %v577, 20
    %v1929 = vpop.permute.xlu0 %1928
    %1930 = vrot.lane.b32.xlu0 %v578, 20
    %v1931 = vpop.permute.xlu0 %1930
    %1932 = vrot.lane.b32.xlu0 %v579, 20
    %v1933 = vpop.permute.xlu0 %1932
    %1934 = vrot.lane.b32.xlu0 %v580, 20
    %v1935 = vpop.permute.xlu0 %1934
    %1936 = vrot.lane.b32.xlu0 %v581, 20
    %v1937 = vpop.permute.xlu0 %1936
    %1938 = vrot.lane.b32.xlu0 %v582, 20
    %v1939 = vpop.permute.xlu0 %1938
    %1940 = vrot.lane.b32.xlu0 %v583, 20
    %v1941 = vpop.permute.xlu0 %1940
    %1942 = vrot.lane.b32.xlu0 %v584, 20
    %v1943 = vpop.permute.xlu0 %1942
    %1944 = vrot.lane.b32.xlu0 %v585, 20
    %v1945 = vpop.permute.xlu0 %1944
    %1946 = vrot.lane.b32.xlu0 %v586, 20
    %v1947 = vpop.permute.xlu0 %1946
    %1948 = vrot.lane.b32.xlu0 %v587, 20
    %v1949 = vpop.permute.xlu0 %1948
    %1950 = vrot.lane.b32.xlu0 %v588, 20
    %v1951 = vpop.permute.xlu0 %1950
    %1952 = vrot.lane.b32.xlu0 %v589, 20
    %v1953 = vpop.permute.xlu0 %1952
    %1954 = vrot.lane.b32.xlu0 %v590, 20
    %v1955 = vpop.permute.xlu0 %1954
    %1956 = vrot.lane.b32.xlu0 %v591, 20
    %v1957 = vpop.permute.xlu0 %1956
    %1958 = vrot.lane.b32.xlu0 %v592, 20
    %v1959 = vpop.permute.xlu0 %1958
    %1960 = vrot.lane.b32.xlu0 %v593, 20
    %v1961 = vpop.permute.xlu0 %1960
    %1962 = vrot.lane.b32.xlu0 %v594, 20
    %v1963 = vpop.permute.xlu0 %1962
    %1964 = vrot.lane.b32.xlu0 %v595, 20
    %v1965 = vpop.permute.xlu0 %1964
    %1966 = vrot.lane.b32.xlu0 %v596, 20
    %v1967 = vpop.permute.xlu0 %1966
    %1968 = vrot.lane.b32.xlu0 %v597, 20
    %v1969 = vpop.permute.xlu0 %1968
    %1970 = vrot.lane.b32.xlu0 %v598, 20
    %v1971 = vpop.permute.xlu0 %1970
    %1972 = vrot.lane.b32.xlu0 %v599, 20
    %v1973 = vpop.permute.xlu0 %1972
    %1974 = vrot.lane.b32.xlu0 %v600, 20
    %v1975 = vpop.permute.xlu0 %1974
    %1976 = vrot.lane.b32.xlu0 %v601, 20
    %v1977 = vpop.permute.xlu0 %1976
    %1978 = vrot.lane.b32.xlu0 %v602, 20
    %v1979 = vpop.permute.xlu0 %1978
    %1980 = vrot.lane.b32.xlu0 %v603, 20
    %v1981 = vpop.permute.xlu0 %1980
    %1982 = vrot.lane.b32.xlu0 %v604, 20
    %v1983 = vpop.permute.xlu0 %1982
    %1984 = vrot.lane.b32.xlu0 %v605, 20
    %v1985 = vpop.permute.xlu0 %1984
    %1986 = vrot.lane.b32.xlu0 %v606, 20
    %v1987 = vpop.permute.xlu0 %1986
    %1988 = vrot.lane.b32.xlu0 %v607, 20
    %v1989 = vpop.permute.xlu0 %1988
    %1990 = vrot.lane.b32.xlu0 %v608, 20
    %v1991 = vpop.permute.xlu0 %1990
    %1992 = vrot.lane.b32.xlu0 %v609, 20
    %v1993 = vpop.permute.xlu0 %1992
    %1994 = vrot.lane.b32.xlu0 %v610, 20
    %v1995 = vpop.permute.xlu0 %1994
    %1996 = vrot.lane.b32.xlu0 %v611, 20
    %v1997 = vpop.permute.xlu0 %1996
    %1998 = vrot.lane.b32.xlu0 %v612, 20
    %v1999 = vpop.permute.xlu0 %1998
    %2000 = vrot.lane.b32.xlu0 %v613, 20
    %v2001 = vpop.permute.xlu0 %2000
    %2002 = vrot.lane.b32.xlu0 %v614, 20
    %v2003 = vpop.permute.xlu0 %2002
    %2004 = vrot.lane.b32.xlu0 %v615, 20
    %v2005 = vpop.permute.xlu0 %2004
    %2006 = vrot.lane.b32.xlu0 %v616, 20
    %v2007 = vpop.permute.xlu0 %2006
    %2008 = vrot.lane.b32.xlu0 %v617, 20
    %v2009 = vpop.permute.xlu0 %2008
    %2010 = vrot.lane.b32.xlu0 %v618, 20
    %v2011 = vpop.permute.xlu0 %2010
    %2012 = vrot.lane.b32.xlu0 %v619, 20
    %v2013 = vpop.permute.xlu0 %2012
    %2014 = vrot.lane.b32.xlu0 %v620, 20
    %v2015 = vpop.permute.xlu0 %2014
    %2016 = vrot.lane.b32.xlu0 %v621, 20
    %v2017 = vpop.permute.xlu0 %2016
    %2018 = vrot.lane.b32.xlu0 %v622, 20
    %v2019 = vpop.permute.xlu0 %2018
    %2020 = vrot.lane.b32.xlu0 %v623, 20
    %v2021 = vpop.permute.xlu0 %2020
    %2022 = vrot.lane.b32.xlu0 %v624, 20
    %v2023 = vpop.permute.xlu0 %2022
    %2024 = vrot.lane.b32.xlu0 %v625, 20
    %v2025 = vpop.permute.xlu0 %2024
    %2026 = vrot.lane.b32.xlu0 %v626, 20
    %v2027 = vpop.permute.xlu0 %2026
    %2028 = vrot.lane.b32.xlu0 %v627, 20
    %v2029 = vpop.permute.xlu0 %2028
    %2030 = vrot.lane.b32.xlu0 %v628, 20
    %v2031 = vpop.permute.xlu0 %2030
    %2032 = vrot.lane.b32.xlu0 %v629, 20
    %v2033 = vpop.permute.xlu0 %2032
    %2034 = vrot.lane.b32.xlu0 %v630, 20
    %v2035 = vpop.permute.xlu0 %2034
    %2036 = vrot.lane.b32.xlu0 %v631, 20
    %v2037 = vpop.permute.xlu0 %2036
    %2038 = vrot.lane.b32.xlu0 %v632, 20
    %v2039 = vpop.permute.xlu0 %2038
    %2040 = vrot.lane.b32.xlu0 %v633, 20
    %v2041 = vpop.permute.xlu0 %2040
    %2042 = vrot.lane.b32.xlu0 %v634, 20
    %v2043 = vpop.permute.xlu0 %2042
    %2172 = vrot.lane.b32.xlu0 %v636, 24
    %v2173 = vpop.permute.xlu0 %2172
    %2174 = vrot.lane.b32.xlu0 %v637, 24
    %v2175 = vpop.permute.xlu0 %2174
    %2176 = vrot.lane.b32.xlu0 %v638, 24
    %v2177 = vpop.permute.xlu0 %2176
    %2178 = vrot.lane.b32.xlu0 %v639, 24
    %v2179 = vpop.permute.xlu0 %2178
    %2180 = vrot.lane.b32.xlu0 %v640, 24
    %v2181 = vpop.permute.xlu0 %2180
    %2182 = vrot.lane.b32.xlu0 %v641, 24
    %v2183 = vpop.permute.xlu0 %2182
    %2184 = vrot.lane.b32.xlu0 %v642, 24
    %v2185 = vpop.permute.xlu0 %2184
    %2186 = vrot.lane.b32.xlu0 %v643, 24
    %v2187 = vpop.permute.xlu0 %2186
    %2188 = vrot.lane.b32.xlu0 %v644, 24
    %v2189 = vpop.permute.xlu0 %2188
    %2190 = vrot.lane.b32.xlu0 %v645, 24
    %v2191 = vpop.permute.xlu0 %2190
    %2192 = vrot.lane.b32.xlu0 %v646, 24
    %v2193 = vpop.permute.xlu0 %2192
    %2194 = vrot.lane.b32.xlu0 %v647, 24
    %v2195 = vpop.permute.xlu0 %2194
    %2196 = vrot.lane.b32.xlu0 %v648, 24
    %v2197 = vpop.permute.xlu0 %2196
    %2198 = vrot.lane.b32.xlu0 %v649, 24
    %v2199 = vpop.permute.xlu0 %2198
    %2200 = vrot.lane.b32.xlu0 %v650, 24
    %v2201 = vpop.permute.xlu0 %2200
    %2202 = vrot.lane.b32.xlu0 %v651, 24
    %v2203 = vpop.permute.xlu0 %2202
    %2204 = vrot.lane.b32.xlu0 %v652, 24
    %v2205 = vpop.permute.xlu0 %2204
    %2206 = vrot.lane.b32.xlu0 %v653, 24
    %v2207 = vpop.permute.xlu0 %2206
    %2208 = vrot.lane.b32.xlu0 %v654, 24
    %v2209 = vpop.permute.xlu0 %2208
    %2210 = vrot.lane.b32.xlu0 %v655, 24
    %v2211 = vpop.permute.xlu0 %2210
    %2212 = vrot.lane.b32.xlu0 %v656, 24
    %v2213 = vpop.permute.xlu0 %2212
    %2214 = vrot.lane.b32.xlu0 %v657, 24
    %v2215 = vpop.permute.xlu0 %2214
    %2216 = vrot.lane.b32.xlu0 %v658, 24
    %v2217 = vpop.permute.xlu0 %2216
    %2218 = vrot.lane.b32.xlu0 %v659, 24
    %v2219 = vpop.permute.xlu0 %2218
    %2220 = vrot.lane.b32.xlu0 %v660, 24
    %v2221 = vpop.permute.xlu0 %2220
    %2222 = vrot.lane.b32.xlu0 %v661, 24
    %v2223 = vpop.permute.xlu0 %2222
    %2224 = vrot.lane.b32.xlu0 %v662, 24
    %v2225 = vpop.permute.xlu0 %2224
    %2226 = vrot.lane.b32.xlu0 %v663, 24
    %v2227 = vpop.permute.xlu0 %2226
    %2228 = vrot.lane.b32.xlu0 %v664, 24
    %v2229 = vpop.permute.xlu0 %2228
    %2230 = vrot.lane.b32.xlu0 %v665, 24
    %v2231 = vpop.permute.xlu0 %2230
    %2232 = vrot.lane.b32.xlu0 %v666, 24
    %v2233 = vpop.permute.xlu0 %2232
    %2234 = vrot.lane.b32.xlu0 %v667, 24
    %v2235 = vpop.permute.xlu0 %2234
    %2236 = vrot.lane.b32.xlu0 %v668, 24
    %v2237 = vpop.permute.xlu0 %2236
    %2238 = vrot.lane.b32.xlu0 %v669, 24
    %v2239 = vpop.permute.xlu0 %2238
    %2240 = vrot.lane.b32.xlu0 %v670, 24
    %v2241 = vpop.permute.xlu0 %2240
    %2242 = vrot.lane.b32.xlu0 %v671, 24
    %v2243 = vpop.permute.xlu0 %2242
    %2244 = vrot.lane.b32.xlu0 %v672, 24
    %v2245 = vpop.permute.xlu0 %2244
    %2246 = vrot.lane.b32.xlu0 %v673, 24
    %v2247 = vpop.permute.xlu0 %2246
    %2248 = vrot.lane.b32.xlu0 %v674, 24
    %v2249 = vpop.permute.xlu0 %2248
    %2250 = vrot.lane.b32.xlu0 %v675, 24
    %v2251 = vpop.permute.xlu0 %2250
    %2252 = vrot.lane.b32.xlu0 %v676, 24
    %v2253 = vpop.permute.xlu0 %2252
    %2254 = vrot.lane.b32.xlu0 %v677, 24
    %v2255 = vpop.permute.xlu0 %2254
    %2256 = vrot.lane.b32.xlu0 %v678, 24
    %v2257 = vpop.permute.xlu0 %2256
    %2258 = vrot.lane.b32.xlu0 %v679, 24
    %v2259 = vpop.permute.xlu0 %2258
    %2260 = vrot.lane.b32.xlu0 %v680, 24
    %v2261 = vpop.permute.xlu0 %2260
    %2262 = vrot.lane.b32.xlu0 %v681, 24
    %v2263 = vpop.permute.xlu0 %2262
    %2264 = vrot.lane.b32.xlu0 %v682, 24
    %v2265 = vpop.permute.xlu0 %2264
    %2266 = vrot.lane.b32.xlu0 %v683, 24
    %v2267 = vpop.permute.xlu0 %2266
    %2268 = vrot.lane.b32.xlu0 %v684, 24
    %v2269 = vpop.permute.xlu0 %2268
    %2270 = vrot.lane.b32.xlu0 %v685, 24
    %v2271 = vpop.permute.xlu0 %2270
    %2272 = vrot.lane.b32.xlu0 %v686, 24
    %v2273 = vpop.permute.xlu0 %2272
    %2274 = vrot.lane.b32.xlu0 %v687, 24
    %v2275 = vpop.permute.xlu0 %2274
    %2276 = vrot.lane.b32.xlu0 %v688, 24
    %v2277 = vpop.permute.xlu0 %2276
    %2278 = vrot.lane.b32.xlu0 %v689, 24
    %v2279 = vpop.permute.xlu0 %2278
    %2280 = vrot.lane.b32.xlu0 %v690, 24
    %v2281 = vpop.permute.xlu0 %2280
    %2282 = vrot.lane.b32.xlu0 %v691, 24
    %v2283 = vpop.permute.xlu0 %2282
    %2284 = vrot.lane.b32.xlu0 %v692, 24
    %v2285 = vpop.permute.xlu0 %2284
    %2286 = vrot.lane.b32.xlu0 %v693, 24
    %v2287 = vpop.permute.xlu0 %2286
    %2288 = vrot.lane.b32.xlu0 %v694, 24
    %v2289 = vpop.permute.xlu0 %2288
    %2290 = vrot.lane.b32.xlu0 %v695, 24
    %v2291 = vpop.permute.xlu0 %2290
    %2292 = vrot.lane.b32.xlu0 %v696, 24
    %v2293 = vpop.permute.xlu0 %2292
    %2294 = vrot.lane.b32.xlu0 %v697, 24
    %v2295 = vpop.permute.xlu0 %2294
    %2296 = vrot.lane.b32.xlu0 %v698, 24
    %v2297 = vpop.permute.xlu0 %2296
    %2298 = vrot.lane.b32.xlu0 %v699, 24
    %v2299 = vpop.permute.xlu0 %2298
    %2428 = vrot.lane.b32.xlu0 %v700, 28
    %v2429 = vpop.permute.xlu0 %2428
    %2430 = vrot.lane.b32.xlu0 %v701, 28
    %v2431 = vpop.permute.xlu0 %2430
    %2432 = vrot.lane.b32.xlu0 %v702, 28
    %v2433 = vpop.permute.xlu0 %2432
    %2434 = vrot.lane.b32.xlu0 %v703, 28
    %v2435 = vpop.permute.xlu0 %2434
    %2436 = vrot.lane.b32.xlu0 %v704, 28
    %v2437 = vpop.permute.xlu0 %2436
    %2438 = vrot.lane.b32.xlu0 %v705, 28
    %v2439 = vpop.permute.xlu0 %2438
    %2440 = vrot.lane.b32.xlu0 %v706, 28
    %v2441 = vpop.permute.xlu0 %2440
    %2442 = vrot.lane.b32.xlu0 %v707, 28
    %v2443 = vpop.permute.xlu0 %2442
    %2444 = vrot.lane.b32.xlu0 %v708, 28
    %v2445 = vpop.permute.xlu0 %2444
    %2446 = vrot.lane.b32.xlu0 %v709, 28
    %v2447 = vpop.permute.xlu0 %2446
    %2448 = vrot.lane.b32.xlu0 %v710, 28
    %v2449 = vpop.permute.xlu0 %2448
    %2450 = vrot.lane.b32.xlu0 %v711, 28
    %v2451 = vpop.permute.xlu0 %2450
    %2452 = vrot.lane.b32.xlu0 %v712, 28
    %v2453 = vpop.permute.xlu0 %2452
    %2454 = vrot.lane.b32.xlu0 %v713, 28
    %v2455 = vpop.permute.xlu0 %2454
    %2456 = vrot.lane.b32.xlu0 %v714, 28
    %v2457 = vpop.permute.xlu0 %2456
    %2458 = vrot.lane.b32.xlu0 %v715, 28
    %v2459 = vpop.permute.xlu0 %2458
    %2460 = vrot.lane.b32.xlu0 %v716, 28
    %v2461 = vpop.permute.xlu0 %2460
    %2462 = vrot.lane.b32.xlu0 %v717, 28
    %v2463 = vpop.permute.xlu0 %2462
    %2464 = vrot.lane.b32.xlu0 %v718, 28
    %v2465 = vpop.permute.xlu0 %2464
    %2466 = vrot.lane.b32.xlu0 %v719, 28
    %v2467 = vpop.permute.xlu0 %2466
    %2468 = vrot.lane.b32.xlu0 %v720, 28
    %v2469 = vpop.permute.xlu0 %2468
    %2470 = vrot.lane.b32.xlu0 %v721, 28
    %v2471 = vpop.permute.xlu0 %2470
    %2472 = vrot.lane.b32.xlu0 %v722, 28
    %v2473 = vpop.permute.xlu0 %2472
    %2474 = vrot.lane.b32.xlu0 %v723, 28
    %v2475 = vpop.permute.xlu0 %2474
    %2476 = vrot.lane.b32.xlu0 %v724, 28
    %v2477 = vpop.permute.xlu0 %2476
    %2478 = vrot.lane.b32.xlu0 %v725, 28
    %v2479 = vpop.permute.xlu0 %2478
    %2480 = vrot.lane.b32.xlu0 %v726, 28
    %v2481 = vpop.permute.xlu0 %2480
    %2482 = vrot.lane.b32.xlu0 %v727, 28
    %v2483 = vpop.permute.xlu0 %2482
    %2484 = vrot.lane.b32.xlu0 %v728, 28
    %v2485 = vpop.permute.xlu0 %2484
    %2486 = vrot.lane.b32.xlu0 %v729, 28
    %v2487 = vpop.permute.xlu0 %2486
    %2488 = vrot.lane.b32.xlu0 %v730, 28
    %v2489 = vpop.permute.xlu0 %2488
    %2490 = vrot.lane.b32.xlu0 %v731, 28
    %v2491 = vpop.permute.xlu0 %2490
    %2492 = vrot.lane.b32.xlu0 %v732, 28
    %v2493 = vpop.permute.xlu0 %2492
    %2494 = vrot.lane.b32.xlu0 %v733, 28
    %v2495 = vpop.permute.xlu0 %2494
    %2496 = vrot.lane.b32.xlu0 %v734, 28
    %v2497 = vpop.permute.xlu0 %2496
    %2498 = vrot.lane.b32.xlu0 %v735, 28
    %v2499 = vpop.permute.xlu0 %2498
    %2500 = vrot.lane.b32.xlu0 %v736, 28
    %v2501 = vpop.permute.xlu0 %2500
    %2502 = vrot.lane.b32.xlu0 %v737, 28
    %v2503 = vpop.permute.xlu0 %2502
    %2504 = vrot.lane.b32.xlu0 %v738, 28
    %v2505 = vpop.permute.xlu0 %2504
    %2506 = vrot.lane.b32.xlu0 %v739, 28
    %v2507 = vpop.permute.xlu0 %2506
    %2508 = vrot.lane.b32.xlu0 %v740, 28
    %v2509 = vpop.permute.xlu0 %2508
    %2510 = vrot.lane.b32.xlu0 %v741, 28
    %v2511 = vpop.permute.xlu0 %2510
    %2512 = vrot.lane.b32.xlu0 %v742, 28
    %v2513 = vpop.permute.xlu0 %2512
    %2514 = vrot.lane.b32.xlu0 %v743, 28
    %v2515 = vpop.permute.xlu0 %2514
    %2516 = vrot.lane.b32.xlu0 %v744, 28
    %v2517 = vpop.permute.xlu0 %2516
    %2518 = vrot.lane.b32.xlu0 %v745, 28
    %v2519 = vpop.permute.xlu0 %2518
    %2520 = vrot.lane.b32.xlu0 %v746, 28
    %v2521 = vpop.permute.xlu0 %2520
    %2522 = vrot.lane.b32.xlu0 %v747, 28
    %v2523 = vpop.permute.xlu0 %2522
    %2524 = vrot.lane.b32.xlu0 %v748, 28
    %v2525 = vpop.permute.xlu0 %2524
    %2526 = vrot.lane.b32.xlu0 %v749, 28
    %v2527 = vpop.permute.xlu0 %2526
    %2528 = vrot.lane.b32.xlu0 %v750, 28
    %v2529 = vpop.permute.xlu0 %2528
    %2530 = vrot.lane.b32.xlu0 %v751, 28
    %v2531 = vpop.permute.xlu0 %2530
    %2532 = vrot.lane.b32.xlu0 %v752, 28
    %v2533 = vpop.permute.xlu0 %2532
    %2534 = vrot.lane.b32.xlu0 %v753, 28
    %v2535 = vpop.permute.xlu0 %2534
    %2536 = vrot.lane.b32.xlu0 %v754, 28
    %v2537 = vpop.permute.xlu0 %2536
    %2538 = vrot.lane.b32.xlu0 %v755, 28
    %v2539 = vpop.permute.xlu0 %2538
    %2540 = vrot.lane.b32.xlu0 %v756, 28
    %v2541 = vpop.permute.xlu0 %2540
    %2542 = vrot.lane.b32.xlu0 %v757, 28
    %v2543 = vpop.permute.xlu0 %2542
    %2544 = vrot.lane.b32.xlu0 %v758, 28
    %v2545 = vpop.permute.xlu0 %2544
    %2546 = vrot.lane.b32.xlu0 %v759, 28
    %v2547 = vpop.permute.xlu0 %2546
    %2548 = vrot.lane.b32.xlu0 %v760, 28
    %v2549 = vpop.permute.xlu0 %2548
    %2550 = vrot.lane.b32.xlu0 %v761, 28
    %v2551 = vpop.permute.xlu0 %2550
    %2552 = vrot.lane.b32.xlu0 %v762, 28
    %v2553 = vpop.permute.xlu0 %2552
    %2554 = vrot.lane.b32.xlu0 %v763, 28
    %v2555 = vpop.permute.xlu0 %2554
    %2684 = vrot.lane.b32.xlu0 %v764, 32
    %v2685 = vpop.permute.xlu0 %2684
    %2686 = vrot.lane.b32.xlu0 %v765, 32
    %v2687 = vpop.permute.xlu0 %2686
    %2688 = vrot.lane.b32.xlu0 %v766, 32
    %v2689 = vpop.permute.xlu0 %2688
    %2690 = vrot.lane.b32.xlu0 %v767, 32
    %v2691 = vpop.permute.xlu0 %2690
    %2692 = vrot.lane.b32.xlu0 %v768, 32
    %v2693 = vpop.permute.xlu0 %2692
    %2694 = vrot.lane.b32.xlu0 %v769, 32
    %v2695 = vpop.permute.xlu0 %2694
    %2696 = vrot.lane.b32.xlu0 %v770, 32
    %v2697 = vpop.permute.xlu0 %2696
    %2698 = vrot.lane.b32.xlu0 %v771, 32
    %v2699 = vpop.permute.xlu0 %2698
    %2700 = vrot.lane.b32.xlu0 %v772, 32
    %v2701 = vpop.permute.xlu0 %2700
    %2702 = vrot.lane.b32.xlu0 %v773, 32
    %v2703 = vpop.permute.xlu0 %2702
    %2704 = vrot.lane.b32.xlu0 %v774, 32
    %v2705 = vpop.permute.xlu0 %2704
    %2706 = vrot.lane.b32.xlu0 %v775, 32
    %v2707 = vpop.permute.xlu0 %2706
    %2708 = vrot.lane.b32.xlu0 %v776, 32
    %v2709 = vpop.permute.xlu0 %2708
    %2710 = vrot.lane.b32.xlu0 %v777, 32
    %v2711 = vpop.permute.xlu0 %2710
    %2712 = vrot.lane.b32.xlu0 %v778, 32
    %v2713 = vpop.permute.xlu0 %2712
    %2714 = vrot.lane.b32.xlu0 %v779, 32
    %v2715 = vpop.permute.xlu0 %2714
    %2716 = vrot.lane.b32.xlu0 %v780, 32
    %v2717 = vpop.permute.xlu0 %2716
    %2718 = vrot.lane.b32.xlu0 %v781, 32
    %v2719 = vpop.permute.xlu0 %2718
    %2720 = vrot.lane.b32.xlu0 %v782, 32
    %v2721 = vpop.permute.xlu0 %2720
    %2722 = vrot.lane.b32.xlu0 %v783, 32
    %v2723 = vpop.permute.xlu0 %2722
    %2724 = vrot.lane.b32.xlu0 %v784, 32
    %v2725 = vpop.permute.xlu0 %2724
    %2726 = vrot.lane.b32.xlu0 %v785, 32
    %v2727 = vpop.permute.xlu0 %2726
    %2728 = vrot.lane.b32.xlu0 %v786, 32
    %v2729 = vpop.permute.xlu0 %2728
    %2730 = vrot.lane.b32.xlu0 %v787, 32
    %v2731 = vpop.permute.xlu0 %2730
    %2732 = vrot.lane.b32.xlu0 %v788, 32
    %v2733 = vpop.permute.xlu0 %2732
    %2734 = vrot.lane.b32.xlu0 %v789, 32
    %v2735 = vpop.permute.xlu0 %2734
    %2736 = vrot.lane.b32.xlu0 %v790, 32
    %v2737 = vpop.permute.xlu0 %2736
    %2738 = vrot.lane.b32.xlu0 %v791, 32
    %v2739 = vpop.permute.xlu0 %2738
    %2740 = vrot.lane.b32.xlu0 %v792, 32
    %v2741 = vpop.permute.xlu0 %2740
    %2742 = vrot.lane.b32.xlu0 %v793, 32
    %v2743 = vpop.permute.xlu0 %2742
    %2744 = vrot.lane.b32.xlu0 %v794, 32
    %v2745 = vpop.permute.xlu0 %2744
    %2746 = vrot.lane.b32.xlu0 %v795, 32
    %v2747 = vpop.permute.xlu0 %2746
    %2748 = vrot.lane.b32.xlu0 %v796, 32
    %v2749 = vpop.permute.xlu0 %2748
    %2750 = vrot.lane.b32.xlu0 %v797, 32
    %v2751 = vpop.permute.xlu0 %2750
    %2752 = vrot.lane.b32.xlu0 %v798, 32
    %v2753 = vpop.permute.xlu0 %2752
    %2754 = vrot.lane.b32.xlu0 %v799, 32
    %v2755 = vpop.permute.xlu0 %2754
    %2756 = vrot.lane.b32.xlu0 %v800, 32
    %v2757 = vpop.permute.xlu0 %2756
    %2758 = vrot.lane.b32.xlu0 %v801, 32
    %v2759 = vpop.permute.xlu0 %2758
    %2760 = vrot.lane.b32.xlu0 %v802, 32
    %v2761 = vpop.permute.xlu0 %2760
    %2762 = vrot.lane.b32.xlu0 %v803, 32
    %v2763 = vpop.permute.xlu0 %2762
    %2764 = vrot.lane.b32.xlu0 %v804, 32
    %v2765 = vpop.permute.xlu0 %2764
    %2766 = vrot.lane.b32.xlu0 %v805, 32
    %v2767 = vpop.permute.xlu0 %2766
    %2768 = vrot.lane.b32.xlu0 %v806, 32
    %v2769 = vpop.permute.xlu0 %2768
    %2770 = vrot.lane.b32.xlu0 %v807, 32
    %v2771 = vpop.permute.xlu0 %2770
    %2772 = vrot.lane.b32.xlu0 %v808, 32
    %v2773 = vpop.permute.xlu0 %2772
    %2774 = vrot.lane.b32.xlu0 %v809, 32
    %v2775 = vpop.permute.xlu0 %2774
    %2776 = vrot.lane.b32.xlu0 %v810, 32
    %v2777 = vpop.permute.xlu0 %2776
    %2778 = vrot.lane.b32.xlu0 %v811, 32
    %v2779 = vpop.permute.xlu0 %2778
    %2780 = vrot.lane.b32.xlu0 %v812, 32
    %v2781 = vpop.permute.xlu0 %2780
    %2782 = vrot.lane.b32.xlu0 %v813, 32
    %v2783 = vpop.permute.xlu0 %2782
    %2784 = vrot.lane.b32.xlu0 %v814, 32
    %v2785 = vpop.permute.xlu0 %2784
    %2786 = vrot.lane.b32.xlu0 %v815, 32
    %v2787 = vpop.permute.xlu0 %2786
    %2788 = vrot.lane.b32.xlu0 %v816, 32
    %v2789 = vpop.permute.xlu0 %2788
    %2790 = vrot.lane.b32.xlu0 %v817, 32
    %v2791 = vpop.permute.xlu0 %2790
    %2792 = vrot.lane.b32.xlu0 %v818, 32
    %v2793 = vpop.permute.xlu0 %2792
    %2794 = vrot.lane.b32.xlu0 %v819, 32
    %v2795 = vpop.permute.xlu0 %2794
    %2796 = vrot.lane.b32.xlu0 %v820, 32
    %v2797 = vpop.permute.xlu0 %2796
    %2798 = vrot.lane.b32.xlu0 %v821, 32
    %v2799 = vpop.permute.xlu0 %2798
    %2800 = vrot.lane.b32.xlu0 %v822, 32
    %v2801 = vpop.permute.xlu0 %2800
    %2802 = vrot.lane.b32.xlu0 %v823, 32
    %v2803 = vpop.permute.xlu0 %2802
    %2804 = vrot.lane.b32.xlu0 %v824, 32
    %v2805 = vpop.permute.xlu0 %2804
    %2806 = vrot.lane.b32.xlu0 %v825, 32
    %v2807 = vpop.permute.xlu0 %2806
    %2808 = vrot.lane.b32.xlu0 %v826, 32
    %v2809 = vpop.permute.xlu0 %2808
    %2810 = vrot.lane.b32.xlu0 %v827, 32
    %v2811 = vpop.permute.xlu0 %2810
    %v2876 = vsel %vm12, %v251, %v893
    %v2877 = vsel %vm12, %v252, %v895
    %v2878 = vsel %vm12, %v253, %v897
    %v2879 = vsel %vm12, %v254, %v899
    %v2880 = vsel %vm12, %v255, %v901
    %v2881 = vsel %vm12, %v256, %v903
    %v2882 = vsel %vm12, %v257, %v905
    %v2883 = vsel %vm12, %v258, %v907
    %v2884 = vsel %vm12, %v259, %v909
    %v2885 = vsel %vm12, %v260, %v911
    %v2886 = vsel %vm12, %v261, %v913
    %v2887 = vsel %vm12, %v262, %v915
    %v2888 = vsel %vm12, %v263, %v917
    %v2889 = vsel %vm12, %v264, %v919
    %v2890 = vsel %vm12, %v265, %v921
    %v2891 = vsel %vm12, %v266, %v923
    %v2892 = vsel %vm12, %v267, %v925
    %v2893 = vsel %vm12, %v268, %v927
    %v2894 = vsel %vm12, %v269, %v929
    %v2895 = vsel %vm12, %v270, %v931
    %v2896 = vsel %vm12, %v271, %v933
    %v2897 = vsel %vm12, %v272, %v935
    %v2898 = vsel %vm12, %v273, %v937
    %v2899 = vsel %vm12, %v274, %v939
    %v2900 = vsel %vm12, %v275, %v941
    %v2901 = vsel %vm12, %v276, %v943
    %v2902 = vsel %vm12, %v277, %v945
    %v2903 = vsel %vm12, %v278, %v947
    %v2904 = vsel %vm12, %v279, %v949
    %v2905 = vsel %vm12, %v280, %v951
    %v2906 = vsel %vm12, %v281, %v953
    %v2907 = vsel %vm12, %v282, %v955
    %v2908 = vsel %vm12, %v283, %v957
    %v2909 = vsel %vm12, %v284, %v959
    %v2910 = vsel %vm12, %v285, %v961
    %v2911 = vsel %vm12, %v286, %v963
    %v2912 = vsel %vm12, %v287, %v965
    %v2913 = vsel %vm12, %v288, %v967
    %v2914 = vsel %vm12, %v289, %v969
    %v2915 = vsel %vm12, %v290, %v971
    %v2916 = vsel %vm12, %v291, %v973
    %v2917 = vsel %vm12, %v292, %v975
    %v2918 = vsel %vm12, %v293, %v977
    %v2919 = vsel %vm12, %v294, %v979
    %v2920 = vsel %vm12, %v295, %v981
    %v2921 = vsel %vm12, %v296, %v983
    %v2922 = vsel %vm12, %v297, %v985
    %v2923 = vsel %vm12, %v298, %v987
    %v2924 = vsel %vm12, %v299, %v989
    %v2925 = vsel %vm12, %v300, %v991
    %v2926 = vsel %vm12, %v301, %v993
    %v2927 = vsel %vm12, %v302, %v995
    %v2928 = vsel %vm12, %v303, %v997
    %v2929 = vsel %vm12, %v304, %v999
    %v2930 = vsel %vm12, %v305, %v1001
    %v2931 = vsel %vm12, %v306, %v1003
    %v2932 = vsel %vm12, %v307, %v1005
    %v2933 = vsel %vm12, %v308, %v1007
    %v2934 = vsel %vm12, %v309, %v1009
    %v2935 = vsel %vm12, %v310, %v1011
    %v2936 = vsel %vm12, %v311, %v1013
    %v2937 = vsel %vm12, %v312, %v1015
    %v2938 = vsel %vm12, %v313, %v1017
    %v2939 = vsel %vm12, %v314, %v1019
    %vm2940 = vcmask 64512
    %v2941 = vsel %vm2940, %v2876, %v1149
    %v2942 = vsel %vm2940, %v2877, %v1151
    %v2943 = vsel %vm2940, %v2878, %v1153
    %v2944 = vsel %vm2940, %v2879, %v1155
    %v2945 = vsel %vm2940, %v2880, %v1157
    %v2946 = vsel %vm2940, %v2881, %v1159
    %v2947 = vsel %vm2940, %v2882, %v1161
    %v2948 = vsel %vm2940, %v2883, %v1163
    %v2949 = vsel %vm2940, %v2884, %v1165
    %v2950 = vsel %vm2940, %v2885, %v1167
    %v2951 = vsel %vm2940, %v2886, %v1169
    %v2952 = vsel %vm2940, %v2887, %v1171
    %v2953 = vsel %vm2940, %v2888, %v1173
    %v2954 = vsel %vm2940, %v2889, %v1175
    %v2955 = vsel %vm2940, %v2890, %v1177
    %v2956 = vsel %vm2940, %v2891, %v1179
    %v2957 = vsel %vm2940, %v2892, %v1181
    %v2958 = vsel %vm2940, %v2893, %v1183
    %v2959 = vsel %vm2940, %v2894, %v1185
    %v2960 = vsel %vm2940, %v2895, %v1187
    %v2961 = vsel %vm2940, %v2896, %v1189
    %v2962 = vsel %vm2940, %v2897, %v1191
    %v2963 = vsel %vm2940, %v2898, %v1193
    %v2964 = vsel %vm2940, %v2899, %v1195
    %v2965 = vsel %vm2940, %v2900, %v1197
    %v2966 = vsel %vm2940, %v2901, %v1199
    %v2967 = vsel %vm2940, %v2902, %v1201
    %v2968 = vsel %vm2940, %v2903, %v1203
    %v2969 = vsel %vm2940, %v2904, %v1205
    %v2970 = vsel %vm2940, %v2905, %v1207
    %v2971 = vsel %vm2940, %v2906, %v1209
    %v2972 = vsel %vm2940, %v2907, %v1211
    %v2973 = vsel %vm2940, %v2908, %v1213
    %v2974 = vsel %vm2940, %v2909, %v1215
    %v2975 = vsel %vm2940, %v2910, %v1217
    %v2976 = vsel %vm2940, %v2911, %v1219
    %v2977 = vsel %vm2940, %v2912, %v1221
    %v2978 = vsel %vm2940, %v2913, %v1223
    %v2979 = vsel %vm2940, %v2914, %v1225
    %v2980 = vsel %vm2940, %v2915, %v1227
    %v2981 = vsel %vm2940, %v2916, %v1229
    %v2982 = vsel %vm2940, %v2917, %v1231
    %v2983 = vsel %vm2940, %v2918, %v1233
    %v2984 = vsel %vm2940, %v2919, %v1235
    %v2985 = vsel %vm2940, %v2920, %v1237
    %v2986 = vsel %vm2940, %v2921, %v1239
    %v2987 = vsel %vm2940, %v2922, %v1241
    %v2988 = vsel %vm2940, %v2923, %v1243
    %v2989 = vsel %vm2940, %v2924, %v1245
    %v2990 = vsel %vm2940, %v2925, %v1247
    %v2991 = vsel %vm2940, %v2926, %v1249
    %v2992 = vsel %vm2940, %v2927, %v1251
    %v2993 = vsel %vm2940, %v2928, %v1253
    %v2994 = vsel %vm2940, %v2929, %v1255
    %v2995 = vsel %vm2940, %v2930, %v1257
    %v2996 = vsel %vm2940, %v2931, %v1259
    %v2997 = vsel %vm2940, %v2932, %v1261
    %v2998 = vsel %vm2940, %v2933, %v1263
    %v2999 = vsel %vm2940, %v2934, %v1265
    %v3000 = vsel %vm2940, %v2935, %v1267
    %v3001 = vsel %vm2940, %v2936, %v1269
    %v3002 = vsel %vm2940, %v2937, %v1271
    %v3003 = vsel %vm2940, %v2938, %v1273
    %v3004 = vsel %vm2940, %v2939, %v1275
    %vm3005 = vcmask 97280
    %v3006 = vsel %vm3005, %v2941, %v1405
    %v3007 = vsel %vm3005, %v2942, %v1407
    %v3008 = vsel %vm3005, %v2943, %v1409
    %v3009 = vsel %vm3005, %v2944, %v1411
    %v3010 = vsel %vm3005, %v2945, %v1413
    %v3011 = vsel %vm3005, %v2946, %v1415
    %v3012 = vsel %vm3005, %v2947, %v1417
    %v3013 = vsel %vm3005, %v2948, %v1419
    %v3014 = vsel %vm3005, %v2949, %v1421
    %v3015 = vsel %vm3005, %v2950, %v1423
    %v3016 = vsel %vm3005, %v2951, %v1425
    %v3017 = vsel %vm3005, %v2952, %v1427
    %v3018 = vsel %vm3005, %v2953, %v1429
    %v3019 = vsel %vm3005, %v2954, %v1431
    %v3020 = vsel %vm3005, %v2955, %v1433
    %v3021 = vsel %vm3005, %v2956, %v1435
    %v3022 = vsel %vm3005, %v2957, %v1437
    %v3023 = vsel %vm3005, %v2958, %v1439
    %v3024 = vsel %vm3005, %v2959, %v1441
    %v3025 = vsel %vm3005, %v2960, %v1443
    %v3026 = vsel %vm3005, %v2961, %v1445
    %v3027 = vsel %vm3005, %v2962, %v1447
    %v3028 = vsel %vm3005, %v2963, %v1449
    %v3029 = vsel %vm3005, %v2964, %v1451
    %v3030 = vsel %vm3005, %v2965, %v1453
    %v3031 = vsel %vm3005, %v2966, %v1455
    %v3032 = vsel %vm3005, %v2967, %v1457
    %v3033 = vsel %vm3005, %v2968, %v1459
    %v3034 = vsel %vm3005, %v2969, %v1461
    %v3035 = vsel %vm3005, %v2970, %v1463
    %v3036 = vsel %vm3005, %v2971, %v1465
    %v3037 = vsel %vm3005, %v2972, %v1467
    %v3038 = vsel %vm3005, %v2973, %v1469
    %v3039 = vsel %vm3005, %v2974, %v1471
    %v3040 = vsel %vm3005, %v2975, %v1473
    %v3041 = vsel %vm3005, %v2976, %v1475
    %v3042 = vsel %vm3005, %v2977, %v1477
    %v3043 = vsel %vm3005, %v2978, %v1479
    %v3044 = vsel %vm3005, %v2979, %v1481
    %v3045 = vsel %vm3005, %v2980, %v1483
    %v3046 = vsel %vm3005, %v2981, %v1485
    %v3047 = vsel %vm3005, %v2982, %v1487
    %v3048 = vsel %vm3005, %v2983, %v1489
    %v3049 = vsel %vm3005, %v2984, %v1491
    %v3050 = vsel %vm3005, %v2985, %v1493
    %v3051 = vsel %vm3005, %v2986, %v1495
    %v3052 = vsel %vm3005, %v2987, %v1497
    %v3053 = vsel %vm3005, %v2988, %v1499
    %v3054 = vsel %vm3005, %v2989, %v1501
    %v3055 = vsel %vm3005, %v2990, %v1503
    %v3056 = vsel %vm3005, %v2991, %v1505
    %v3057 = vsel %vm3005, %v2992, %v1507
    %v3058 = vsel %vm3005, %v2993, %v1509
    %v3059 = vsel %vm3005, %v2994, %v1511
    %v3060 = vsel %vm3005, %v2995, %v1513
    %v3061 = vsel %vm3005, %v2996, %v1515
    %v3062 = vsel %vm3005, %v2997, %v1517
    %v3063 = vsel %vm3005, %v2998, %v1519
    %v3064 = vsel %vm3005, %v2999, %v1521
    %v3065 = vsel %vm3005, %v3000, %v1523
    %v3066 = vsel %vm3005, %v3001, %v1525
    %v3067 = vsel %vm3005, %v3002, %v1527
    %v3068 = vsel %vm3005, %v3003, %v1529
    %v3069 = vsel %vm3005, %v3004, %v1531
    %vm3070 = vcmask 130048
    %v3071 = vsel %vm3070, %v3006, %v1661
    %v3072 = vsel %vm3070, %v3007, %v1663
    %v3073 = vsel %vm3070, %v3008, %v1665
    %v3074 = vsel %vm3070, %v3009, %v1667
    %v3075 = vsel %vm3070, %v3010, %v1669
    %v3076 = vsel %vm3070, %v3011, %v1671
    %v3077 = vsel %vm3070, %v3012, %v1673
    %v3078 = vsel %vm3070, %v3013, %v1675
    %v3079 = vsel %vm3070, %v3014, %v1677
    %v3080 = vsel %vm3070, %v3015, %v1679
    %v3081 = vsel %vm3070, %v3016, %v1681
    %v3082 = vsel %vm3070, %v3017, %v1683
    %v3083 = vsel %vm3070, %v3018, %v1685
    %v3084 = vsel %vm3070, %v3019, %v1687
    %v3085 = vsel %vm3070, %v3020, %v1689
    %v3086 = vsel %vm3070, %v3021, %v1691
    %v3087 = vsel %vm3070, %v3022, %v1693
    %v3088 = vsel %vm3070, %v3023, %v1695
    %v3089 = vsel %vm3070, %v3024, %v1697
    %v3090 = vsel %vm3070, %v3025, %v1699
    %v3091 = vsel %vm3070, %v3026, %v1701
    %v3092 = vsel %vm3070, %v3027, %v1703
    %v3093 = vsel %vm3070, %v3028, %v1705
    %v3094 = vsel %vm3070, %v3029, %v1707
    %v3095 = vsel %vm3070, %v3030, %v1709
    %v3096 = vsel %vm3070, %v3031, %v1711
    %v3097 = vsel %vm3070, %v3032, %v1713
    %v3098 = vsel %vm3070, %v3033, %v1715
    %v3099 = vsel %vm3070, %v3034, %v1717
    %v3100 = vsel %vm3070, %v3035, %v1719
    %v3101 = vsel %vm3070, %v3036, %v1721
    %v3102 = vsel %vm3070, %v3037, %v1723
    %v3103 = vsel %vm3070, %v3038, %v1725
    %v3104 = vsel %vm3070, %v3039, %v1727
    %v3105 = vsel %vm3070, %v3040, %v1729
    %v3106 = vsel %vm3070, %v3041, %v1731
    %v3107 = vsel %vm3070, %v3042, %v1733
    %v3108 = vsel %vm3070, %v3043, %v1735
    %v3109 = vsel %vm3070, %v3044, %v1737
    %v3110 = vsel %vm3070, %v3045, %v1739
    %v3111 = vsel %vm3070, %v3046, %v1741
    %v3112 = vsel %vm3070, %v3047, %v1743
    %v3113 = vsel %vm3070, %v3048, %v1745
    %v3114 = vsel %vm3070, %v3049, %v1747
    %v3115 = vsel %vm3070, %v3050, %v1749
    %v3116 = vsel %vm3070, %v3051, %v1751
    %v3117 = vsel %vm3070, %v3052, %v1753
    %v3118 = vsel %vm3070, %v3053, %v1755
    %v3119 = vsel %vm3070, %v3054, %v1757
    %v3120 = vsel %vm3070, %v3055, %v1759
    %v3121 = vsel %vm3070, %v3056, %v1761
    %v3122 = vsel %vm3070, %v3057, %v1763
    %v3123 = vsel %vm3070, %v3058, %v1765
    %v3124 = vsel %vm3070, %v3059, %v1767
    %v3125 = vsel %vm3070, %v3060, %v1769
    %v3126 = vsel %vm3070, %v3061, %v1771
    %v3127 = vsel %vm3070, %v3062, %v1773
    %v3128 = vsel %vm3070, %v3063, %v1775
    %v3129 = vsel %vm3070, %v3064, %v1777
    %v3130 = vsel %vm3070, %v3065, %v1779
    %v3131 = vsel %vm3070, %v3066, %v1781
    %v3132 = vsel %vm3070, %v3067, %v1783
    %v3133 = vsel %vm3070, %v3068, %v1785
    %v3134 = vsel %vm3070, %v3069, %v1787
    %vm3135 = vcmask 162816
    %v3136 = vsel %vm3135, %v3071, %v1917
    %v3137 = vsel %vm3135, %v3072, %v1919
    %v3138 = vsel %vm3135, %v3073, %v1921
    %v3139 = vsel %vm3135, %v3074, %v1923
    %v3140 = vsel %vm3135, %v3075, %v1925
    %v3141 = vsel %vm3135, %v3076, %v1927
    %v3142 = vsel %vm3135, %v3077, %v1929
    %v3143 = vsel %vm3135, %v3078, %v1931
    %v3144 = vsel %vm3135, %v3079, %v1933
    %v3145 = vsel %vm3135, %v3080, %v1935
    %v3146 = vsel %vm3135, %v3081, %v1937
    %v3147 = vsel %vm3135, %v3082, %v1939
    %v3148 = vsel %vm3135, %v3083, %v1941
    %v3149 = vsel %vm3135, %v3084, %v1943
    %v3150 = vsel %vm3135, %v3085, %v1945
    %v3151 = vsel %vm3135, %v3086, %v1947
    %v3152 = vsel %vm3135, %v3087, %v1949
    %v3153 = vsel %vm3135, %v3088, %v1951
    %v3154 = vsel %vm3135, %v3089, %v1953
    %v3155 = vsel %vm3135, %v3090, %v1955
    %v3156 = vsel %vm3135, %v3091, %v1957
    %v3157 = vsel %vm3135, %v3092, %v1959
    %v3158 = vsel %vm3135, %v3093, %v1961
    %v3159 = vsel %vm3135, %v3094, %v1963
    %v3160 = vsel %vm3135, %v3095, %v1965
    %v3161 = vsel %vm3135, %v3096, %v1967
    %v3162 = vsel %vm3135, %v3097, %v1969
    %v3163 = vsel %vm3135, %v3098, %v1971
    %v3164 = vsel %vm3135, %v3099, %v1973
    %v3165 = vsel %vm3135, %v3100, %v1975
    %v3166 = vsel %vm3135, %v3101, %v1977
    %v3167 = vsel %vm3135, %v3102, %v1979
    %v3168 = vsel %vm3135, %v3103, %v1981
    %v3169 = vsel %vm3135, %v3104, %v1983
    %v3170 = vsel %vm3135, %v3105, %v1985
    %v3171 = vsel %vm3135, %v3106, %v1987
    %v3172 = vsel %vm3135, %v3107, %v1989
    %v3173 = vsel %vm3135, %v3108, %v1991
    %v3174 = vsel %vm3135, %v3109, %v1993
    %v3175 = vsel %vm3135, %v3110, %v1995
    %v3176 = vsel %vm3135, %v3111, %v1997
    %v3177 = vsel %vm3135, %v3112, %v1999
    %v3178 = vsel %vm3135, %v3113, %v2001
    %v3179 = vsel %vm3135, %v3114, %v2003
    %v3180 = vsel %vm3135, %v3115, %v2005
    %v3181 = vsel %vm3135, %v3116, %v2007
    %v3182 = vsel %vm3135, %v3117, %v2009
    %v3183 = vsel %vm3135, %v3118, %v2011
    %v3184 = vsel %vm3135, %v3119, %v2013
    %v3185 = vsel %vm3135, %v3120, %v2015
    %v3186 = vsel %vm3135, %v3121, %v2017
    %v3187 = vsel %vm3135, %v3122, %v2019
    %v3188 = vsel %vm3135, %v3123, %v2021
    %v3189 = vsel %vm3135, %v3124, %v2023
    %v3190 = vsel %vm3135, %v3125, %v2025
    %v3191 = vsel %vm3135, %v3126, %v2027
    %v3192 = vsel %vm3135, %v3127, %v2029
    %v3193 = vsel %vm3135, %v3128, %v2031
    %v3194 = vsel %vm3135, %v3129, %v2033
    %v3195 = vsel %vm3135, %v3130, %v2035
    %v3196 = vsel %vm3135, %v3131, %v2037
    %v3197 = vsel %vm3135, %v3132, %v2039
    %v3198 = vsel %vm3135, %v3133, %v2041
    %v3199 = vsel %vm3135, %v3134, %v2043
    %vm3200 = vcmask 195584
    %v3201 = vsel %vm3200, %v3136, %v2173
    %v3202 = vsel %vm3200, %v3137, %v2175
    %v3203 = vsel %vm3200, %v3138, %v2177
    %v3204 = vsel %vm3200, %v3139, %v2179
    %v3205 = vsel %vm3200, %v3140, %v2181
    %v3206 = vsel %vm3200, %v3141, %v2183
    %v3207 = vsel %vm3200, %v3142, %v2185
    %v3208 = vsel %vm3200, %v3143, %v2187
    %v3209 = vsel %vm3200, %v3144, %v2189
    %v3210 = vsel %vm3200, %v3145, %v2191
    %v3211 = vsel %vm3200, %v3146, %v2193
    %v3212 = vsel %vm3200, %v3147, %v2195
    %v3213 = vsel %vm3200, %v3148, %v2197
    %v3214 = vsel %vm3200, %v3149, %v2199
    %v3215 = vsel %vm3200, %v3150, %v2201
    %v3216 = vsel %vm3200, %v3151, %v2203
    %v3217 = vsel %vm3200, %v3152, %v2205
    %v3218 = vsel %vm3200, %v3153, %v2207
    %v3219 = vsel %vm3200, %v3154, %v2209
    %v3220 = vsel %vm3200, %v3155, %v2211
    %v3221 = vsel %vm3200, %v3156, %v2213
    %v3222 = vsel %vm3200, %v3157, %v2215
    %v3223 = vsel %vm3200, %v3158, %v2217
    %v3224 = vsel %vm3200, %v3159, %v2219
    %v3225 = vsel %vm3200, %v3160, %v2221
    %v3226 = vsel %vm3200, %v3161, %v2223
    %v3227 = vsel %vm3200, %v3162, %v2225
    %v3228 = vsel %vm3200, %v3163, %v2227
    %v3229 = vsel %vm3200, %v3164, %v2229
    %v3230 = vsel %vm3200, %v3165, %v2231
    %v3231 = vsel %vm3200, %v3166, %v2233
    %v3232 = vsel %vm3200, %v3167, %v2235
    %v3233 = vsel %vm3200, %v3168, %v2237
    %v3234 = vsel %vm3200, %v3169, %v2239
    %v3235 = vsel %vm3200, %v3170, %v2241
    %v3236 = vsel %vm3200, %v3171, %v2243
    %v3237 = vsel %vm3200, %v3172, %v2245
    %v3238 = vsel %vm3200, %v3173, %v2247
    %v3239 = vsel %vm3200, %v3174, %v2249
    %v3240 = vsel %vm3200, %v3175, %v2251
    %v3241 = vsel %vm3200, %v3176, %v2253
    %v3242 = vsel %vm3200, %v3177, %v2255
    %v3243 = vsel %vm3200, %v3178, %v2257
    %v3244 = vsel %vm3200, %v3179, %v2259
    %v3245 = vsel %vm3200, %v3180, %v2261
    %v3246 = vsel %vm3200, %v3181, %v2263
    %v3247 = vsel %vm3200, %v3182, %v2265
    %v3248 = vsel %vm3200, %v3183, %v2267
    %v3249 = vsel %vm3200, %v3184, %v2269
    %v3250 = vsel %vm3200, %v3185, %v2271
    %v3251 = vsel %vm3200, %v3186, %v2273
    %v3252 = vsel %vm3200, %v3187, %v2275
    %v3253 = vsel %vm3200, %v3188, %v2277
    %v3254 = vsel %vm3200, %v3189, %v2279
    %v3255 = vsel %vm3200, %v3190, %v2281
    %v3256 = vsel %vm3200, %v3191, %v2283
    %v3257 = vsel %vm3200, %v3192, %v2285
    %v3258 = vsel %vm3200, %v3193, %v2287
    %v3259 = vsel %vm3200, %v3194, %v2289
    %v3260 = vsel %vm3200, %v3195, %v2291
    %v3261 = vsel %vm3200, %v3196, %v2293
    %v3262 = vsel %vm3200, %v3197, %v2295
    %v3263 = vsel %vm3200, %v3198, %v2297
    %v3264 = vsel %vm3200, %v3199, %v2299
    %vm3265 = vcmask 228352
    %v3266 = vsel %vm3265, %v3201, %v2429
    %v3267 = vsel %vm3265, %v3202, %v2431
    %v3268 = vsel %vm3265, %v3203, %v2433
    %v3269 = vsel %vm3265, %v3204, %v2435
    %v3270 = vsel %vm3265, %v3205, %v2437
    %v3271 = vsel %vm3265, %v3206, %v2439
    %v3272 = vsel %vm3265, %v3207, %v2441
    %v3273 = vsel %vm3265, %v3208, %v2443
    %v3274 = vsel %vm3265, %v3209, %v2445
    %v3275 = vsel %vm3265, %v3210, %v2447
    %v3276 = vsel %vm3265, %v3211, %v2449
    %v3277 = vsel %vm3265, %v3212, %v2451
    %v3278 = vsel %vm3265, %v3213, %v2453
    %v3279 = vsel %vm3265, %v3214, %v2455
    %v3280 = vsel %vm3265, %v3215, %v2457
    %v3281 = vsel %vm3265, %v3216, %v2459
    %v3282 = vsel %vm3265, %v3217, %v2461
    %v3283 = vsel %vm3265, %v3218, %v2463
    %v3284 = vsel %vm3265, %v3219, %v2465
    %v3285 = vsel %vm3265, %v3220, %v2467
    %v3286 = vsel %vm3265, %v3221, %v2469
    %v3287 = vsel %vm3265, %v3222, %v2471
    %v3288 = vsel %vm3265, %v3223, %v2473
    %v3289 = vsel %vm3265, %v3224, %v2475
    %v3290 = vsel %vm3265, %v3225, %v2477
    %v3291 = vsel %vm3265, %v3226, %v2479
    %v3292 = vsel %vm3265, %v3227, %v2481
    %v3293 = vsel %vm3265, %v3228, %v2483
    %v3294 = vsel %vm3265, %v3229, %v2485
    %v3295 = vsel %vm3265, %v3230, %v2487
    %v3296 = vsel %vm3265, %v3231, %v2489
    %v3297 = vsel %vm3265, %v3232, %v2491
    %v3298 = vsel %vm3265, %v3233, %v2493
    %v3299 = vsel %vm3265, %v3234, %v2495
    %v3300 = vsel %vm3265, %v3235, %v2497
    %v3301 = vsel %vm3265, %v3236, %v2499
    %v3302 = vsel %vm3265, %v3237, %v2501
    %v3303 = vsel %vm3265, %v3238, %v2503
    %v3304 = vsel %vm3265, %v3239, %v2505
    %v3305 = vsel %vm3265, %v3240, %v2507
    %v3306 = vsel %vm3265, %v3241, %v2509
    %v3307 = vsel %vm3265, %v3242, %v2511
    %v3308 = vsel %vm3265, %v3243, %v2513
    %v3309 = vsel %vm3265, %v3244, %v2515
    %v3310 = vsel %vm3265, %v3245, %v2517
    %v3311 = vsel %vm3265, %v3246, %v2519
    %v3312 = vsel %vm3265, %v3247, %v2521
    %v3313 = vsel %vm3265, %v3248, %v2523
    %v3314 = vsel %vm3265, %v3249, %v2525
    %v3315 = vsel %vm3265, %v3250, %v2527
    %v3316 = vsel %vm3265, %v3251, %v2529
    %v3317 = vsel %vm3265, %v3252, %v2531
    %v3318 = vsel %vm3265, %v3253, %v2533
    %v3319 = vsel %vm3265, %v3254, %v2535
    %v3320 = vsel %vm3265, %v3255, %v2537
    %v3321 = vsel %vm3265, %v3256, %v2539
    %v3322 = vsel %vm3265, %v3257, %v2541
    %v3323 = vsel %vm3265, %v3258, %v2543
    %v3324 = vsel %vm3265, %v3259, %v2545
    %v3325 = vsel %vm3265, %v3260, %v2547
    %v3326 = vsel %vm3265, %v3261, %v2549
    %v3327 = vsel %vm3265, %v3262, %v2551
    %v3328 = vsel %vm3265, %v3263, %v2553
    %v3329 = vsel %vm3265, %v3264, %v2555
    %vm3330 = vcmask 261120
    %v3331 = vsel %vm3330, %v3266, %v2685
    %v3332 = vsel %vm3330, %v3267, %v2687
    %v3333 = vsel %vm3330, %v3268, %v2689
    %v3334 = vsel %vm3330, %v3269, %v2691
    %v3335 = vsel %vm3330, %v3270, %v2693
    %v3336 = vsel %vm3330, %v3271, %v2695
    %v3337 = vsel %vm3330, %v3272, %v2697
    %v3338 = vsel %vm3330, %v3273, %v2699
    %v3339 = vsel %vm3330, %v3274, %v2701
    %v3340 = vsel %vm3330, %v3275, %v2703
    %v3341 = vsel %vm3330, %v3276, %v2705
    %v3342 = vsel %vm3330, %v3277, %v2707
    %v3343 = vsel %vm3330, %v3278, %v2709
    %v3344 = vsel %vm3330, %v3279, %v2711
    %v3345 = vsel %vm3330, %v3280, %v2713
    %v3346 = vsel %vm3330, %v3281, %v2715
    %v3347 = vsel %vm3330, %v3282, %v2717
    %v3348 = vsel %vm3330, %v3283, %v2719
    %v3349 = vsel %vm3330, %v3284, %v2721
    %v3350 = vsel %vm3330, %v3285, %v2723
    %v3351 = vsel %vm3330, %v3286, %v2725
    %v3352 = vsel %vm3330, %v3287, %v2727
    %v3353 = vsel %vm3330, %v3288, %v2729
    %v3354 = vsel %vm3330, %v3289, %v2731
    %v3355 = vsel %vm3330, %v3290, %v2733
    %v3356 = vsel %vm3330, %v3291, %v2735
    %v3357 = vsel %vm3330, %v3292, %v2737
    %v3358 = vsel %vm3330, %v3293, %v2739
    %v3359 = vsel %vm3330, %v3294, %v2741
    %v3360 = vsel %vm3330, %v3295, %v2743
    %v3361 = vsel %vm3330, %v3296, %v2745
    %v3362 = vsel %vm3330, %v3297, %v2747
    %v3363 = vsel %vm3330, %v3298, %v2749
    %v3364 = vsel %vm3330, %v3299, %v2751
    %v3365 = vsel %vm3330, %v3300, %v2753
    %v3366 = vsel %vm3330, %v3301, %v2755
    %v3367 = vsel %vm3330, %v3302, %v2757
    %v3368 = vsel %vm3330, %v3303, %v2759
    %v3369 = vsel %vm3330, %v3304, %v2761
    %v3370 = vsel %vm3330, %v3305, %v2763
    %v3371 = vsel %vm3330, %v3306, %v2765
    %v3372 = vsel %vm3330, %v3307, %v2767
    %v3373 = vsel %vm3330, %v3308, %v2769
    %v3374 = vsel %vm3330, %v3309, %v2771
    %v3375 = vsel %vm3330, %v3310, %v2773
    %v3376 = vsel %vm3330, %v3311, %v2775
    %v3377 = vsel %vm3330, %v3312, %v2777
    %v3378 = vsel %vm3330, %v3313, %v2779
    %v3379 = vsel %vm3330, %v3314, %v2781
    %v3380 = vsel %vm3330, %v3315, %v2783
    %v3381 = vsel %vm3330, %v3316, %v2785
    %v3382 = vsel %vm3330, %v3317, %v2787
    %v3383 = vsel %vm3330, %v3318, %v2789
    %v3384 = vsel %vm3330, %v3319, %v2791
    %v3385 = vsel %vm3330, %v3320, %v2793
    %v3386 = vsel %vm3330, %v3321, %v2795
    %v3387 = vsel %vm3330, %v3322, %v2797
    %v3388 = vsel %vm3330, %v3323, %v2799
    %v3389 = vsel %vm3330, %v3324, %v2801
    %v3390 = vsel %vm3330, %v3325, %v2803
    %v3391 = vsel %vm3330, %v3326, %v2805
    %v3392 = vsel %vm3330, %v3327, %v2807
    %v3393 = vsel %vm3330, %v3328, %v2809
    %v3394 = vsel %vm3330, %v3329, %v2811
    %v3395 = vld [vmem:[%s1] sm:$0xff]
    %v3396 = vld [vmem:[%s1 + $0x8] sm:$0xff]
    %v3397 = vld [vmem:[%s1 + $0x10] sm:$0xff]
    %v3398 = vld [vmem:[%s1 + $0x18] sm:$0xff]
    %v3399 = vld [vmem:[%s1 + $0x20] sm:$0xf]
    %vm3400 = vcmask 293888
    %v3402 = vsel %vm3400, %v3331, 0
    %v3405 = vsel %vm3400, %v3332, 0
    %v3408 = vsel %vm3400, %v3333, 0
    %v3411 = vsel %vm3400, %v3334, 0
    %v3414 = vsel %vm3400, %v3335, 0
    %v3417 = vsel %vm3400, %v3336, 0
    %v3420 = vsel %vm3400, %v3337, 0
    %v3423 = vsel %vm3400, %v3338, 0
    %v3426 = vsel %vm3400, %v3339, 0
    %v3429 = vsel %vm3400, %v3340, 0
    %v3432 = vsel %vm3400, %v3341, 0
    %v3435 = vsel %vm3400, %v3342, 0
    %v3438 = vsel %vm3400, %v3343, 0
    %v3441 = vsel %vm3400, %v3344, 0
    %v3444 = vsel %vm3400, %v3345, 0
    %v3447 = vsel %vm3400, %v3346, 0
    %v3450 = vsel %vm3400, %v3347, 0
    %v3453 = vsel %vm3400, %v3348, 0
    %v3456 = vsel %vm3400, %v3349, 0
    %v3459 = vsel %vm3400, %v3350, 0
    %v3462 = vsel %vm3400, %v3351, 0
    %v3465 = vsel %vm3400, %v3352, 0
    %v3468 = vsel %vm3400, %v3353, 0
    %v3471 = vsel %vm3400, %v3354, 0
    %v3474 = vsel %vm3400, %v3355, 0
    %v3477 = vsel %vm3400, %v3356, 0
    %v3480 = vsel %vm3400, %v3357, 0
    %v3483 = vsel %vm3400, %v3358, 0
    %v3486 = vsel %vm3400, %v3359, 0
    %v3489 = vsel %vm3400, %v3360, 0
    %v3492 = vsel %vm3400, %v3361, 0
    %v3495 = vsel %vm3400, %v3362, 0
    %v3498 = vsel %vm3400, %v3363, 0
    %v3501 = vsel %vm3400, %v3364, 0
    %v3504 = vsel %vm3400, %v3365, 0
    %v3507 = vsel %vm3400, %v3366, 0
    %v3510 = vsel %vm3400, %v3367, 0
    %v3513 = vsel %vm3400, %v3368, 0
    %v3516 = vsel %vm3400, %v3369, 0
    %v3519 = vsel %vm3400, %v3370, 0
    %v3522 = vsel %vm3400, %v3371, 0
    %v3525 = vsel %vm3400, %v3372, 0
    %v3528 = vsel %vm3400, %v3373, 0
    %v3531 = vsel %vm3400, %v3374, 0
    %v3534 = vsel %vm3400, %v3375, 0
    %v3537 = vsel %vm3400, %v3376, 0
    %v3540 = vsel %vm3400, %v3377, 0
    %v3543 = vsel %vm3400, %v3378, 0
    %v3546 = vsel %vm3400, %v3379, 0
    %v3549 = vsel %vm3400, %v3380, 0
    %v3552 = vsel %vm3400, %v3381, 0
    %v3555 = vsel %vm3400, %v3382, 0
    %v3558 = vsel %vm3400, %v3383, 0
    %v3561 = vsel %vm3400, %v3384, 0
    %v3564 = vsel %vm3400, %v3385, 0
    %v3567 = vsel %vm3400, %v3386, 0
    %v3570 = vsel %vm3400, %v3387, 0
    %v3573 = vsel %vm3400, %v3388, 0
    %v3576 = vsel %vm3400, %v3389, 0
    %v3579 = vsel %vm3400, %v3390, 0
    %v3582 = vsel %vm3400, %v3391, 0
    %v3585 = vsel %vm3400, %v3392, 0
    %v3588 = vsel %vm3400, %v3393, 0
    %v3591 = vsel %vm3400, %v3394, 0
    %vm3593 = vcmask 1043456
    %v3595 = vsel %vm3593, %v3399, 0
    %3597 = vmatprep.subr.mxu0 0.0
    %3598 = vmatpush1.msra.mxu0 0.0
    %3599 = vmatprep.subr.mxu0 0.0
    %3600 = vmatpush1.msra.mxu0 0.0
    %3601 = vmatprep.subr.mxu0 0.0
    %3602 = vmatpush1.msra.mxu0 0.0
    %3603 = vmatprep.subr.mxu0 0.0
    %3604 = vmatpush1.msra.mxu0 0.0
    %3605 = vmatprep.subr.mxu0 0.0
    %3606 = vmatpush1.msra.mxu0 0.0
    %3607 = vmatprep.subr.mxu0 0.0
    %3608 = vmatpush1.msra.mxu0 0.0
    %3609 = vmatprep.subr.mxu0 0.0
    %3610 = vmatpush1.msra.mxu0 0.0
    %3611 = vmatprep.subr.mxu0 0.0
    %3612 = vmatpush1.msra.mxu0 0.0
    %3613 = vmatprep.subr.mxu0 0.0
    %3614 = vmatpush1.msra.mxu0 0.0
    %3615 = vmatprep.subr.mxu0 0.0
    %3616 = vmatpush1.msra.mxu0 0.0
    %3617 = vmatprep.subr.mxu0 0.0
    %3618 = vmatpush1.msra.mxu0 0.0
    %3619 = vmatprep.subr.mxu0 0.0
    %3620 = vmatpush1.msra.mxu0 %v3595
    %3621 = vmatprep.subr.mxu0 0.0
    %3622 = vmatpush1.msra.mxu0 %v3398
    %3623 = vmatprep.subr.mxu0 0.0
    %3624 = vmatpush1.msra.mxu0 %v3397
    %3625 = vmatprep.subr.mxu0 0.0
    %3626 = vmatpush1.msra.mxu0 %v3396
    %3627 = vmatprep.subr.mxu0 0.0
    %3628 = vmatpush1.msra.mxu0 %v3395
    %3629 = vmatprep.subr.mxu0 0.0
    %3630 = vmatpush2.msra.mxu0 0.0
    %3631 = vmatprep.subr.mxu0 0.0
    %3632 = vmatpush2.msra.mxu0 0.0
    %3633 = vmatprep.subr.mxu0 0.0
    %3634 = vmatpush2.msra.mxu0 0.0
    %3635 = vmatprep.subr.mxu0 0.0
    %3636 = vmatpush2.msra.mxu0 0.0
    %3637 = vmatprep.subr.mxu0 0.0
    %3638 = vmatpush2.msra.mxu0 0.0
    %3639 = vmatprep.subr.mxu0 0.0
    %3640 = vmatpush2.msra.mxu0 0.0
    %3641 = vmatprep.subr.mxu0 0.0
    %3642 = vmatpush2.msra.mxu0 0.0
    %3643 = vmatprep.subr.mxu0 0.0
    %3644 = vmatpush2.msra.mxu0 0.0
    %3645 = vmatprep.subr.mxu0 0.0
    %3646 = vmatpush2.msra.mxu0 0.0
    %3647 = vmatprep.subr.mxu0 0.0
    %3648 = vmatpush2.msra.mxu0 0.0
    %3649 = vmatprep.subr.mxu0 0.0
    %3650 = vmatpush2.msra.mxu0 0.0
    %3651 = vmatprep.subr.mxu0 0.0
    %3652 = vmatpush2.msra.mxu0 0.0
    %3653 = vmatprep.subr.mxu0 0.0
    %3654 = vmatpush2.msra.mxu0 0.0
    %3655 = vmatprep.subr.mxu0 0.0
    %3656 = vmatpush2.msra.mxu0 0.0
    %3657 = vmatprep.subr.mxu0 0.0
    %3658 = vmatpush2.msra.mxu0 0.0
    %3659 = vmatprep.subr.mxu0 0.0
    %3660 = vmatpush2.msra.mxu0 0.0
    %3661 = vmatprep.mubr.f32.mxu0 0.0
    %3662 = vmatmul.mubr.f32.gmra.mxu0 %v3402
    %v3663 = vpop.f32.mrf.mxu0
    %v3664 = vadd.f32 0.0, %v3663
    %v3665 = vpop.f32.mrf.mxu0
    %3666 = vmatprep.mubr.f32.mxu0 0.0
    %3667 = vmatmul.mubr.f32.gmra.mxu0 %v3405
    %v3668 = vpop.f32.mrf.mxu0
    %v3669 = vadd.f32 0.0, %v3668
    %v3670 = vpop.f32.mrf.mxu0
    %3671 = vmatprep.mubr.f32.mxu0 0.0
    %3672 = vmatmul.mubr.f32.gmra.mxu0 %v3408
    %v3673 = vpop.f32.mrf.mxu0
    %v3674 = vadd.f32 0.0, %v3673
    %v3675 = vpop.f32.mrf.mxu0
    %3676 = vmatprep.mubr.f32.mxu0 0.0
    %3677 = vmatmul.mubr.f32.gmra.mxu0 %v3411
    %v3678 = vpop.f32.mrf.mxu0
    %v3679 = vadd.f32 0.0, %v3678
    %v3680 = vpop.f32.mrf.mxu0
    %3681 = vmatprep.mubr.f32.mxu0 0.0
    %3682 = vmatmul.mubr.f32.gmra.mxu0 %v3414
    %v3683 = vpop.f32.mrf.mxu0
    %v3684 = vadd.f32 0.0, %v3683
    %v3685 = vpop.f32.mrf.mxu0
    %3686 = vmatprep.mubr.f32.mxu0 0.0
    %3687 = vmatmul.mubr.f32.gmra.mxu0 %v3417
    %v3688 = vpop.f32.mrf.mxu0
    %v3689 = vadd.f32 0.0, %v3688
    %v3690 = vpop.f32.mrf.mxu0
    %3691 = vmatprep.mubr.f32.mxu0 0.0
    %3692 = vmatmul.mubr.f32.gmra.mxu0 %v3420
    %v3693 = vpop.f32.mrf.mxu0
    %v3694 = vadd.f32 0.0, %v3693
    %v3695 = vpop.f32.mrf.mxu0
    %3696 = vmatprep.mubr.f32.mxu0 0.0
    %3697 = vmatmul.mubr.f32.gmra.mxu0 %v3423
    %v3698 = vpop.f32.mrf.mxu0
    %v3699 = vadd.f32 0.0, %v3698
    %v3700 = vpop.f32.mrf.mxu0
    %3701 = vmatprep.mubr.f32.mxu0 0.0
    %3702 = vmatmul.mubr.f32.gmra.mxu0 %v3426
    %v3703 = vpop.f32.mrf.mxu0
    %v3704 = vadd.f32 0.0, %v3703
    %v3705 = vpop.f32.mrf.mxu0
    %3706 = vmatprep.mubr.f32.mxu0 0.0
    %3707 = vmatmul.mubr.f32.gmra.mxu0 %v3429
    %v3708 = vpop.f32.mrf.mxu0
    %v3709 = vadd.f32 0.0, %v3708
    %v3710 = vpop.f32.mrf.mxu0
    %3711 = vmatprep.mubr.f32.mxu0 0.0
    %3712 = vmatmul.mubr.f32.gmra.mxu0 %v3432
    %v3713 = vpop.f32.mrf.mxu0
    %v3714 = vadd.f32 0.0, %v3713
    %v3715 = vpop.f32.mrf.mxu0
    %3716 = vmatprep.mubr.f32.mxu0 0.0
    %3717 = vmatmul.mubr.f32.gmra.mxu0 %v3435
    %v3718 = vpop.f32.mrf.mxu0
    %v3719 = vadd.f32 0.0, %v3718
    %v3720 = vpop.f32.mrf.mxu0
    %3721 = vmatprep.mubr.f32.mxu0 0.0
    %3722 = vmatmul.mubr.f32.gmra.mxu0 %v3438
    %v3723 = vpop.f32.mrf.mxu0
    %v3724 = vadd.f32 0.0, %v3723
    %v3725 = vpop.f32.mrf.mxu0
    %3726 = vmatprep.mubr.f32.mxu0 0.0
    %3727 = vmatmul.mubr.f32.gmra.mxu0 %v3441
    %v3728 = vpop.f32.mrf.mxu0
    %v3729 = vadd.f32 0.0, %v3728
    %v3730 = vpop.f32.mrf.mxu0
    %3731 = vmatprep.mubr.f32.mxu0 0.0
    %3732 = vmatmul.mubr.f32.gmra.mxu0 %v3444
    %v3733 = vpop.f32.mrf.mxu0
    %v3734 = vadd.f32 0.0, %v3733
    %v3735 = vpop.f32.mrf.mxu0
    %3736 = vmatprep.mubr.f32.mxu0 0.0
    %3737 = vmatmul.mubr.f32.gmra.mxu0 %v3447
    %v3738 = vpop.f32.mrf.mxu0
    %v3739 = vadd.f32 0.0, %v3738
    %v3740 = vpop.f32.mrf.mxu0
    %3741 = vmatprep.mubr.f32.mxu0 0.0
    %3742 = vmatmul.mubr.f32.gmra.mxu0 %v3450
    %v3743 = vpop.f32.mrf.mxu0
    %v3744 = vadd.f32 0.0, %v3743
    %v3745 = vpop.f32.mrf.mxu0
    %3746 = vmatprep.mubr.f32.mxu0 0.0
    %3747 = vmatmul.mubr.f32.gmra.mxu0 %v3453
    %v3748 = vpop.f32.mrf.mxu0
    %v3749 = vadd.f32 0.0, %v3748
    %v3750 = vpop.f32.mrf.mxu0
    %3751 = vmatprep.mubr.f32.mxu0 0.0
    %3752 = vmatmul.mubr.f32.gmra.mxu0 %v3456
    %v3753 = vpop.f32.mrf.mxu0
    %v3754 = vadd.f32 0.0, %v3753
    %v3755 = vpop.f32.mrf.mxu0
    %3756 = vmatprep.mubr.f32.mxu0 0.0
    %3757 = vmatmul.mubr.f32.gmra.mxu0 %v3459
    %v3758 = vpop.f32.mrf.mxu0
    %v3759 = vadd.f32 0.0, %v3758
    %v3760 = vpop.f32.mrf.mxu0
    %3761 = vmatprep.mubr.f32.mxu0 0.0
    %3762 = vmatmul.mubr.f32.gmra.mxu0 %v3462
    %v3763 = vpop.f32.mrf.mxu0
    %v3764 = vadd.f32 0.0, %v3763
    %v3765 = vpop.f32.mrf.mxu0
    %3766 = vmatprep.mubr.f32.mxu0 0.0
    %3767 = vmatmul.mubr.f32.gmra.mxu0 %v3465
    %v3768 = vpop.f32.mrf.mxu0
    %v3769 = vadd.f32 0.0, %v3768
    %v3770 = vpop.f32.mrf.mxu0
    %3771 = vmatprep.mubr.f32.mxu0 0.0
    %3772 = vmatmul.mubr.f32.gmra.mxu0 %v3468
    %v3773 = vpop.f32.mrf.mxu0
    %v3774 = vadd.f32 0.0, %v3773
    %v3775 = vpop.f32.mrf.mxu0
    %3776 = vmatprep.mubr.f32.mxu0 0.0
    %3777 = vmatmul.mubr.f32.gmra.mxu0 %v3471
    %v3778 = vpop.f32.mrf.mxu0
    %v3779 = vadd.f32 0.0, %v3778
    %v3780 = vpop.f32.mrf.mxu0
    %3781 = vmatprep.mubr.f32.mxu0 0.0
    %3782 = vmatmul.mubr.f32.gmra.mxu0 %v3474
    %v3783 = vpop.f32.mrf.mxu0
    %v3784 = vadd.f32 0.0, %v3783
    %v3785 = vpop.f32.mrf.mxu0
    %3786 = vmatprep.mubr.f32.mxu0 0.0
    %3787 = vmatmul.mubr.f32.gmra.mxu0 %v3477
    %v3788 = vpop.f32.mrf.mxu0
    %v3789 = vadd.f32 0.0, %v3788
    %v3790 = vpop.f32.mrf.mxu0
    %3791 = vmatprep.mubr.f32.mxu0 0.0
    %3792 = vmatmul.mubr.f32.gmra.mxu0 %v3480
    %v3793 = vpop.f32.mrf.mxu0
    %v3794 = vadd.f32 0.0, %v3793
    %v3795 = vpop.f32.mrf.mxu0
    %3796 = vmatprep.mubr.f32.mxu0 0.0
    %3797 = vmatmul.mubr.f32.gmra.mxu0 %v3483
    %v3798 = vpop.f32.mrf.mxu0
    %v3799 = vadd.f32 0.0, %v3798
    %v3800 = vpop.f32.mrf.mxu0
    %3801 = vmatprep.mubr.f32.mxu0 0.0
    %3802 = vmatmul.mubr.f32.gmra.mxu0 %v3486
    %v3803 = vpop.f32.mrf.mxu0
    %v3804 = vadd.f32 0.0, %v3803
    %v3805 = vpop.f32.mrf.mxu0
    %3806 = vmatprep.mubr.f32.mxu0 0.0
    %3807 = vmatmul.mubr.f32.gmra.mxu0 %v3489
    %v3808 = vpop.f32.mrf.mxu0
    %v3809 = vadd.f32 0.0, %v3808
    %v3810 = vpop.f32.mrf.mxu0
    %3811 = vmatprep.mubr.f32.mxu0 0.0
    %3812 = vmatmul.mubr.f32.gmra.mxu0 %v3492
    %v3813 = vpop.f32.mrf.mxu0
    %v3814 = vadd.f32 0.0, %v3813
    %v3815 = vpop.f32.mrf.mxu0
    %3816 = vmatprep.mubr.f32.mxu0 0.0
    %3817 = vmatmul.mubr.f32.gmra.mxu0 %v3495
    %v3818 = vpop.f32.mrf.mxu0
    %v3819 = vadd.f32 0.0, %v3818
    %v3820 = vpop.f32.mrf.mxu0
    %3821 = vmatprep.mubr.f32.mxu0 0.0
    %3822 = vmatmul.mubr.f32.gmra.mxu0 %v3498
    %v3823 = vpop.f32.mrf.mxu0
    %v3824 = vadd.f32 0.0, %v3823
    %v3825 = vpop.f32.mrf.mxu0
    %3826 = vmatprep.mubr.f32.mxu0 0.0
    %3827 = vmatmul.mubr.f32.gmra.mxu0 %v3501
    %v3828 = vpop.f32.mrf.mxu0
    %v3829 = vadd.f32 0.0, %v3828
    %v3830 = vpop.f32.mrf.mxu0
    %3831 = vmatprep.mubr.f32.mxu0 0.0
    %3832 = vmatmul.mubr.f32.gmra.mxu0 %v3504
    %v3833 = vpop.f32.mrf.mxu0
    %v3834 = vadd.f32 0.0, %v3833
    %v3835 = vpop.f32.mrf.mxu0
    %3836 = vmatprep.mubr.f32.mxu0 0.0
    %3837 = vmatmul.mubr.f32.gmra.mxu0 %v3507
    %v3838 = vpop.f32.mrf.mxu0
    %v3839 = vadd.f32 0.0, %v3838
    %v3840 = vpop.f32.mrf.mxu0
    %3841 = vmatprep.mubr.f32.mxu0 0.0
    %3842 = vmatmul.mubr.f32.gmra.mxu0 %v3510
    %v3843 = vpop.f32.mrf.mxu0
    %v3844 = vadd.f32 0.0, %v3843
    %v3845 = vpop.f32.mrf.mxu0
    %3846 = vmatprep.mubr.f32.mxu0 0.0
    %3847 = vmatmul.mubr.f32.gmra.mxu0 %v3513
    %v3848 = vpop.f32.mrf.mxu0
    %v3849 = vadd.f32 0.0, %v3848
    %v3850 = vpop.f32.mrf.mxu0
    %3851 = vmatprep.mubr.f32.mxu0 0.0
    %3852 = vmatmul.mubr.f32.gmra.mxu0 %v3516
    %v3853 = vpop.f32.mrf.mxu0
    %v3854 = vadd.f32 0.0, %v3853
    %v3855 = vpop.f32.mrf.mxu0
    %3856 = vmatprep.mubr.f32.mxu0 0.0
    %3857 = vmatmul.mubr.f32.gmra.mxu0 %v3519
    %v3858 = vpop.f32.mrf.mxu0
    %v3859 = vadd.f32 0.0, %v3858
    %v3860 = vpop.f32.mrf.mxu0
    %3861 = vmatprep.mubr.f32.mxu0 0.0
    %3862 = vmatmul.mubr.f32.gmra.mxu0 %v3522
    %v3863 = vpop.f32.mrf.mxu0
    %v3864 = vadd.f32 0.0, %v3863
    %v3865 = vpop.f32.mrf.mxu0
    %3866 = vmatprep.mubr.f32.mxu0 0.0
    %3867 = vmatmul.mubr.f32.gmra.mxu0 %v3525
    %v3868 = vpop.f32.mrf.mxu0
    %v3869 = vadd.f32 0.0, %v3868
    %v3870 = vpop.f32.mrf.mxu0
    %3871 = vmatprep.mubr.f32.mxu0 0.0
    %3872 = vmatmul.mubr.f32.gmra.mxu0 %v3528
    %v3873 = vpop.f32.mrf.mxu0
    %v3874 = vadd.f32 0.0, %v3873
    %v3875 = vpop.f32.mrf.mxu0
    %3876 = vmatprep.mubr.f32.mxu0 0.0
    %3877 = vmatmul.mubr.f32.gmra.mxu0 %v3531
    %v3878 = vpop.f32.mrf.mxu0
    %v3879 = vadd.f32 0.0, %v3878
    %v3880 = vpop.f32.mrf.mxu0
    %3881 = vmatprep.mubr.f32.mxu0 0.0
    %3882 = vmatmul.mubr.f32.gmra.mxu0 %v3534
    %v3883 = vpop.f32.mrf.mxu0
    %v3884 = vadd.f32 0.0, %v3883
    %v3885 = vpop.f32.mrf.mxu0
    %3886 = vmatprep.mubr.f32.mxu0 0.0
    %3887 = vmatmul.mubr.f32.gmra.mxu0 %v3537
    %v3888 = vpop.f32.mrf.mxu0
    %v3889 = vadd.f32 0.0, %v3888
    %v3890 = vpop.f32.mrf.mxu0
    %3891 = vmatprep.mubr.f32.mxu0 0.0
    %3892 = vmatmul.mubr.f32.gmra.mxu0 %v3540
    %v3893 = vpop.f32.mrf.mxu0
    %v3894 = vadd.f32 0.0, %v3893
    %v3895 = vpop.f32.mrf.mxu0
    %3896 = vmatprep.mubr.f32.mxu0 0.0
    %3897 = vmatmul.mubr.f32.gmra.mxu0 %v3543
    %v3898 = vpop.f32.mrf.mxu0
    %v3899 = vadd.f32 0.0, %v3898
    %v3900 = vpop.f32.mrf.mxu0
    %3901 = vmatprep.mubr.f32.mxu0 0.0
    %3902 = vmatmul.mubr.f32.gmra.mxu0 %v3546
    %v3903 = vpop.f32.mrf.mxu0
    %v3904 = vadd.f32 0.0, %v3903
    %v3905 = vpop.f32.mrf.mxu0
    %3906 = vmatprep.mubr.f32.mxu0 0.0
    %3907 = vmatmul.mubr.f32.gmra.mxu0 %v3549
    %v3908 = vpop.f32.mrf.mxu0
    %v3909 = vadd.f32 0.0, %v3908
    %v3910 = vpop.f32.mrf.mxu0
    %3911 = vmatprep.mubr.f32.mxu0 0.0
    %3912 = vmatmul.mubr.f32.gmra.mxu0 %v3552
    %v3913 = vpop.f32.mrf.mxu0
    %v3914 = vadd.f32 0.0, %v3913
    %v3915 = vpop.f32.mrf.mxu0
    %3916 = vmatprep.mubr.f32.mxu0 0.0
    %3917 = vmatmul.mubr.f32.gmra.mxu0 %v3555
    %v3918 = vpop.f32.mrf.mxu0
    %v3919 = vadd.f32 0.0, %v3918
    %v3920 = vpop.f32.mrf.mxu0
    %3921 = vmatprep.mubr.f32.mxu0 0.0
    %3922 = vmatmul.mubr.f32.gmra.mxu0 %v3558
    %v3923 = vpop.f32.mrf.mxu0
    %v3924 = vadd.f32 0.0, %v3923
    %v3925 = vpop.f32.mrf.mxu0
    %3926 = vmatprep.mubr.f32.mxu0 0.0
    %3927 = vmatmul.mubr.f32.gmra.mxu0 %v3561
    %v3928 = vpop.f32.mrf.mxu0
    %v3929 = vadd.f32 0.0, %v3928
    %v3930 = vpop.f32.mrf.mxu0
    %3931 = vmatprep.mubr.f32.mxu0 0.0
    %3932 = vmatmul.mubr.f32.gmra.mxu0 %v3564
    %v3933 = vpop.f32.mrf.mxu0
    %v3934 = vadd.f32 0.0, %v3933
    %v3935 = vpop.f32.mrf.mxu0
    %3936 = vmatprep.mubr.f32.mxu0 0.0
    %3937 = vmatmul.mubr.f32.gmra.mxu0 %v3567
    %v3938 = vpop.f32.mrf.mxu0
    %v3939 = vadd.f32 0.0, %v3938
    %v3940 = vpop.f32.mrf.mxu0
    %3941 = vmatprep.mubr.f32.mxu0 0.0
    %3942 = vmatmul.mubr.f32.gmra.mxu0 %v3570
    %v3943 = vpop.f32.mrf.mxu0
    %v3944 = vadd.f32 0.0, %v3943
    %v3945 = vpop.f32.mrf.mxu0
    %3946 = vmatprep.mubr.f32.mxu0 0.0
    %3947 = vmatmul.mubr.f32.gmra.mxu0 %v3573
    %v3948 = vpop.f32.mrf.mxu0
    %v3949 = vadd.f32 0.0, %v3948
    %v3950 = vpop.f32.mrf.mxu0
    %3951 = vmatprep.mubr.f32.mxu0 0.0
    %3952 = vmatmul.mubr.f32.gmra.mxu0 %v3576
    %v3953 = vpop.f32.mrf.mxu0
    %v3954 = vadd.f32 0.0, %v3953
    %v3955 = vpop.f32.mrf.mxu0
    %3956 = vmatprep.mubr.f32.mxu0 0.0
    %3957 = vmatmul.mubr.f32.gmra.mxu0 %v3579
    %v3958 = vpop.f32.mrf.mxu0
    %v3959 = vadd.f32 0.0, %v3958
    %v3960 = vpop.f32.mrf.mxu0
    %3961 = vmatprep.mubr.f32.mxu0 0.0
    %3962 = vmatmul.mubr.f32.gmra.mxu0 %v3582
    %v3963 = vpop.f32.mrf.mxu0
    %v3964 = vadd.f32 0.0, %v3963
    %v3965 = vpop.f32.mrf.mxu0
    %3966 = vmatprep.mubr.f32.mxu0 0.0
    %3967 = vmatmul.mubr.f32.gmra.mxu0 %v3585
    %v3968 = vpop.f32.mrf.mxu0
    %v3969 = vadd.f32 0.0, %v3968
    %v3970 = vpop.f32.mrf.mxu0
    %3971 = vmatprep.mubr.f32.mxu0 0.0
    %3972 = vmatmul.mubr.f32.gmra.mxu0 %v3588
    %v3973 = vpop.f32.mrf.mxu0
    %v3974 = vadd.f32 0.0, %v3973
    %v3975 = vpop.f32.mrf.mxu0
    %3976 = vmatprep.mubr.f32.mxu0 0.0
    %3977 = vmatmul.mubr.f32.gmra.mxu0 %v3591
    %v3978 = vpop.f32.mrf.mxu0
    %v3979 = vadd.f32 0.0, %v3978
    %v3980 = vpop.f32.mrf.mxu0
    %3981 = vdwg.mxu0
    %v3982 = vadd.f32 %v3664, %v3669
    %v3983 = vadd.f32 %v3982, %v3674
    %v3984 = vadd.f32 %v3983, %v3679
    %v3985 = vadd.f32 %v3984, %v3684
    %v3986 = vadd.f32 %v3985, %v3689
    %v3987 = vadd.f32 %v3986, %v3694
    %v3988 = vadd.f32 %v3987, %v3699
    %v3989 = vadd.f32 %v3988, %v3704
    %v3990 = vadd.f32 %v3989, %v3709
    %v3991 = vadd.f32 %v3990, %v3714
    %v3992 = vadd.f32 %v3991, %v3719
    %v3993 = vadd.f32 %v3992, %v3724
    %v3994 = vadd.f32 %v3993, %v3729
    %v3995 = vadd.f32 %v3994, %v3734
    %v3996 = vadd.f32 %v3995, %v3739
    %v3997 = vadd.f32 %v3996, %v3744
    %v3998 = vadd.f32 %v3997, %v3749
    %v3999 = vadd.f32 %v3998, %v3754
    %v4000 = vadd.f32 %v3999, %v3759
    %v4001 = vadd.f32 %v4000, %v3764
    %v4002 = vadd.f32 %v4001, %v3769
    %v4003 = vadd.f32 %v4002, %v3774
    %v4004 = vadd.f32 %v4003, %v3779
    %v4005 = vadd.f32 %v4004, %v3784
    %v4006 = vadd.f32 %v4005, %v3789
    %v4007 = vadd.f32 %v4006, %v3794
    %v4008 = vadd.f32 %v4007, %v3799
    %v4009 = vadd.f32 %v4008, %v3804
    %v4010 = vadd.f32 %v4009, %v3809
    %v4011 = vadd.f32 %v4010, %v3814
    %v4012 = vadd.f32 %v4011, %v3819
    %v4013 = vrot.slane %v4012, 4
    %v4014 = vadd.f32 %v4012, %v4013
    %v4015 = vrot.slane %v4014, 2
    %v4016 = vadd.f32 %v4014, %v4015
    %v4017 = vrot.slane %v4016, 1
    %v4018 = vadd.f32 %v4016, %v4017
    %v4019 = vadd.f32 %v3824, %v3829
    %v4020 = vadd.f32 %v4019, %v3834
    %v4021 = vadd.f32 %v4020, %v3839
    %v4022 = vadd.f32 %v4021, %v3844
    %v4023 = vadd.f32 %v4022, %v3849
    %v4024 = vadd.f32 %v4023, %v3854
    %v4025 = vadd.f32 %v4024, %v3859
    %v4026 = vadd.f32 %v4025, %v3864
    %v4027 = vadd.f32 %v4026, %v3869
    %v4028 = vadd.f32 %v4027, %v3874
    %v4029 = vadd.f32 %v4028, %v3879
    %v4030 = vadd.f32 %v4029, %v3884
    %v4031 = vadd.f32 %v4030, %v3889
    %v4032 = vadd.f32 %v4031, %v3894
    %v4033 = vadd.f32 %v4032, %v3899
    %v4034 = vadd.f32 %v4033, %v3904
    %v4035 = vadd.f32 %v4034, %v3909
    %v4036 = vadd.f32 %v4035, %v3914
    %v4037 = vadd.f32 %v4036, %v3919
    %v4038 = vadd.f32 %v4037, %v3924
    %v4039 = vadd.f32 %v4038, %v3929
    %v4040 = vadd.f32 %v4039, %v3934
    %v4041 = vadd.f32 %v4040, %v3939
    %v4042 = vadd.f32 %v4041, %v3944
    %v4043 = vadd.f32 %v4042, %v3949
    %v4044 = vadd.f32 %v4043, %v3954
    %v4045 = vadd.f32 %v4044, %v3959
    %v4046 = vadd.f32 %v4045, %v3964
    %v4047 = vadd.f32 %v4046, %v3969
    %v4048 = vadd.f32 %v4047, %v3974
    %v4049 = vadd.f32 %v4048, %v3979
    %v4050 = vrot.slane %v4049, 4
    %v4051 = vadd.f32 %v4049, %v4050
    %v4052 = vrot.slane %v4051, 2
    %v4053 = vadd.f32 %v4051, %v4052
    %v4054 = vrot.slane %v4053, 1
    %v4055 = vadd.f32 %v4053, %v4054
    %v4056 = vrcp.pop 256.0
    %v4057 = vmul.f32 %v4018, %v4056
    %v4058 = vmul.f32 %v4055, %v4056
    %v4059 = vsub.f32 %v3664, %v4057
    %v4060 = vsub.f32 %v3669, %v4057
    %v4061 = vsub.f32 %v3674, %v4057
    %v4062 = vsub.f32 %v3679, %v4057
    %v4063 = vsub.f32 %v3684, %v4057
    %v4064 = vsub.f32 %v3689, %v4057
    %v4065 = vsub.f32 %v3694, %v4057
    %v4066 = vsub.f32 %v3699, %v4057
    %v4067 = vsub.f32 %v3704, %v4057
    %v4068 = vsub.f32 %v3709, %v4057
    %v4069 = vsub.f32 %v3714, %v4057
    %v4070 = vsub.f32 %v3719, %v4057
    %v4071 = vsub.f32 %v3724, %v4057
    %v4072 = vsub.f32 %v3729, %v4057
    %v4073 = vsub.f32 %v3734, %v4057
    %v4074 = vsub.f32 %v3739, %v4057
    %v4075 = vsub.f32 %v3744, %v4057
    %v4076 = vsub.f32 %v3749, %v4057
    %v4077 = vsub.f32 %v3754, %v4057
    %v4078 = vsub.f32 %v3759, %v4057
    %v4079 = vsub.f32 %v3764, %v4057
    %v4080 = vsub.f32 %v3769, %v4057
    %v4081 = vsub.f32 %v3774, %v4057
    %v4082 = vsub.f32 %v3779, %v4057
    %v4083 = vsub.f32 %v3784, %v4057
    %v4084 = vsub.f32 %v3789, %v4057
    %v4085 = vsub.f32 %v3794, %v4057
    %v4086 = vsub.f32 %v3799, %v4057
    %v4087 = vsub.f32 %v3804, %v4057
    %v4088 = vsub.f32 %v3809, %v4057
    %v4089 = vsub.f32 %v3814, %v4057
    %v4090 = vsub.f32 %v3819, %v4057
    %v4091 = vsub.f32 %v3824, %v4058
    %v4092 = vsub.f32 %v3829, %v4058
    %v4093 = vsub.f32 %v3834, %v4058
    %v4094 = vsub.f32 %v3839, %v4058
    %v4095 = vsub.f32 %v3844, %v4058
    %v4096 = vsub.f32 %v3849, %v4058
    %v4097 = vsub.f32 %v3854, %v4058
    %v4098 = vsub.f32 %v3859, %v4058
    %v4099 = vsub.f32 %v3864, %v4058
    %v4100 = vsub.f32 %v3869, %v4058
    %v4101 = vsub.f32 %v3874, %v4058
    %v4102 = vsub.f32 %v3879, %v4058
    %v4103 = vsub.f32 %v3884, %v4058
    %v4104 = vsub.f32 %v3889, %v4058
    %v4105 = vsub.f32 %v3894, %v4058
    %v4106 = vsub.f32 %v3899, %v4058
    %v4107 = vsub.f32 %v3904, %v4058
    %v4108 = vsub.f32 %v3909, %v4058
    %v4109 = vsub.f32 %v3914, %v4058
    %v4110 = vsub.f32 %v3919, %v4058
    %v4111 = vsub.f32 %v3924, %v4058
    %v4112 = vsub.f32 %v3929, %v4058
    %v4113 = vsub.f32 %v3934, %v4058
    %v4114 = vsub.f32 %v3939, %v4058
    %v4115 = vsub.f32 %v3944, %v4058
    %v4116 = vsub.f32 %v3949, %v4058
    %v4117 = vsub.f32 %v3954, %v4058
    %v4118 = vsub.f32 %v3959, %v4058
    %v4119 = vsub.f32 %v3964, %v4058
    %v4120 = vsub.f32 %v3969, %v4058
    %v4121 = vsub.f32 %v3974, %v4058
    %v4122 = vsub.f32 %v3979, %v4058
    %v4123 = vmul.f32 %v4059, %v4059
    %v4124 = vmul.f32 %v4060, %v4060
    %v4125 = vmul.f32 %v4061, %v4061
    %v4126 = vmul.f32 %v4062, %v4062
    %v4127 = vmul.f32 %v4063, %v4063
    %v4128 = vmul.f32 %v4064, %v4064
    %v4129 = vmul.f32 %v4065, %v4065
    %v4130 = vmul.f32 %v4066, %v4066
    %v4131 = vmul.f32 %v4067, %v4067
    %v4132 = vmul.f32 %v4068, %v4068
    %v4133 = vmul.f32 %v4069, %v4069
    %v4134 = vmul.f32 %v4070, %v4070
    %v4135 = vmul.f32 %v4071, %v4071
    %v4136 = vmul.f32 %v4072, %v4072
    %v4137 = vmul.f32 %v4073, %v4073
    %v4138 = vmul.f32 %v4074, %v4074
    %v4139 = vmul.f32 %v4075, %v4075
    %v4140 = vmul.f32 %v4076, %v4076
    %v4141 = vmul.f32 %v4077, %v4077
    %v4142 = vmul.f32 %v4078, %v4078
    %v4143 = vmul.f32 %v4079, %v4079
    %v4144 = vmul.f32 %v4080, %v4080
    %v4145 = vmul.f32 %v4081, %v4081
    %v4146 = vmul.f32 %v4082, %v4082
    %v4147 = vmul.f32 %v4083, %v4083
    %v4148 = vmul.f32 %v4084, %v4084
    %v4149 = vmul.f32 %v4085, %v4085
    %v4150 = vmul.f32 %v4086, %v4086
    %v4151 = vmul.f32 %v4087, %v4087
    %v4152 = vmul.f32 %v4088, %v4088
    %v4153 = vmul.f32 %v4089, %v4089
    %v4154 = vmul.f32 %v4090, %v4090
    %v4155 = vmul.f32 %v4091, %v4091
    %v4156 = vmul.f32 %v4092, %v4092
    %v4157 = vmul.f32 %v4093, %v4093
    %v4158 = vmul.f32 %v4094, %v4094
    %v4159 = vmul.f32 %v4095, %v4095
    %v4160 = vmul.f32 %v4096, %v4096
    %v4161 = vmul.f32 %v4097, %v4097
    %v4162 = vmul.f32 %v4098, %v4098
    %v4163 = vmul.f32 %v4099, %v4099
    %v4164 = vmul.f32 %v4100, %v4100
    %v4165 = vmul.f32 %v4101, %v4101
    %v4166 = vmul.f32 %v4102, %v4102
    %v4167 = vmul.f32 %v4103, %v4103
    %v4168 = vmul.f32 %v4104, %v4104
    %v4169 = vmul.f32 %v4105, %v4105
    %v4170 = vmul.f32 %v4106, %v4106
    %v4171 = vmul.f32 %v4107, %v4107
    %v4172 = vmul.f32 %v4108, %v4108
    %v4173 = vmul.f32 %v4109, %v4109
    %v4174 = vmul.f32 %v4110, %v4110
    %v4175 = vmul.f32 %v4111, %v4111
    %v4176 = vmul.f32 %v4112, %v4112
    %v4177 = vmul.f32 %v4113, %v4113
    %v4178 = vmul.f32 %v4114, %v4114
    %v4179 = vmul.f32 %v4115, %v4115
    %v4180 = vmul.f32 %v4116, %v4116
    %v4181 = vmul.f32 %v4117, %v4117
    %v4182 = vmul.f32 %v4118, %v4118
    %v4183 = vmul.f32 %v4119, %v4119
    %v4184 = vmul.f32 %v4120, %v4120
    %v4185 = vmul.f32 %v4121, %v4121
    %v4186 = vmul.f32 %v4122, %v4122
    %v4187 = vadd.f32 %v4123, %v4124
    %v4188 = vadd.f32 %v4187, %v4125
    %v4189 = vadd.f32 %v4188, %v4126
    %v4190 = vadd.f32 %v4189, %v4127
    %v4191 = vadd.f32 %v4190, %v4128
    %v4192 = vadd.f32 %v4191, %v4129
    %v4193 = vadd.f32 %v4192, %v4130
    %v4194 = vadd.f32 %v4193, %v4131
    %v4195 = vadd.f32 %v4194, %v4132
    %v4196 = vadd.f32 %v4195, %v4133
    %v4197 = vadd.f32 %v4196, %v4134
    %v4198 = vadd.f32 %v4197, %v4135
    %v4199 = vadd.f32 %v4198, %v4136
    %v4200 = vadd.f32 %v4199, %v4137
    %v4201 = vadd.f32 %v4200, %v4138
    %v4202 = vadd.f32 %v4201, %v4139
    %v4203 = vadd.f32 %v4202, %v4140
    %v4204 = vadd.f32 %v4203, %v4141
    %v4205 = vadd.f32 %v4204, %v4142
    %v4206 = vadd.f32 %v4205, %v4143
    %v4207 = vadd.f32 %v4206, %v4144
    %v4208 = vadd.f32 %v4207, %v4145
    %v4209 = vadd.f32 %v4208, %v4146
    %v4210 = vadd.f32 %v4209, %v4147
    %v4211 = vadd.f32 %v4210, %v4148
    %v4212 = vadd.f32 %v4211, %v4149
    %v4213 = vadd.f32 %v4212, %v4150
    %v4214 = vadd.f32 %v4213, %v4151
    %v4215 = vadd.f32 %v4214, %v4152
    %v4216 = vadd.f32 %v4215, %v4153
    %v4217 = vadd.f32 %v4216, %v4154
    %v4218 = vrot.slane %v4217, 4
    %v4219 = vadd.f32 %v4217, %v4218
    %v4220 = vrot.slane %v4219, 2
    %v4221 = vadd.f32 %v4219, %v4220
    %v4222 = vrot.slane %v4221, 1
    %v4223 = vadd.f32 %v4221, %v4222
    %v4224 = vadd.f32 %v4155, %v4156
    %v4225 = vadd.f32 %v4224, %v4157
    %v4226 = vadd.f32 %v4225, %v4158
    %v4227 = vadd.f32 %v4226, %v4159
    %v4228 = vadd.f32 %v4227, %v4160
    %v4229 = vadd.f32 %v4228, %v4161
    %v4230 = vadd.f32 %v4229, %v4162
    %v4231 = vadd.f32 %v4230, %v4163
    %v4232 = vadd.f32 %v4231, %v4164
    %v4233 = vadd.f32 %v4232, %v4165
    %v4234 = vadd.f32 %v4233, %v4166
    %v4235 = vadd.f32 %v4234, %v4167
    %v4236 = vadd.f32 %v4235, %v4168
    %v4237 = vadd.f32 %v4236, %v4169
    %v4238 = vadd.f32 %v4237, %v4170
    %v4239 = vadd.f32 %v4238, %v4171
    %v4240 = vadd.f32 %v4239, %v4172
    %v4241 = vadd.f32 %v4240, %v4173
    %v4242 = vadd.f32 %v4241, %v4174
    %v4243 = vadd.f32 %v4242, %v4175
    %v4244 = vadd.f32 %v4243, %v4176
    %v4245 = vadd.f32 %v4244, %v4177
    %v4246 = vadd.f32 %v4245, %v4178
    %v4247 = vadd.f32 %v4246, %v4179
    %v4248 = vadd.f32 %v4247, %v4180
    %v4249 = vadd.f32 %v4248, %v4181
    %v4250 = vadd.f32 %v4249, %v4182
    %v4251 = vadd.f32 %v4250, %v4183
    %v4252 = vadd.f32 %v4251, %v4184
    %v4253 = vadd.f32 %v4252, %v4185
    %v4254 = vadd.f32 %v4253, %v4186
    %v4255 = vrot.slane %v4254, 4
    %v4256 = vadd.f32 %v4254, %v4255
    %v4257 = vrot.slane %v4256, 2
    %v4258 = vadd.f32 %v4256, %v4257
    %v4259 = vrot.slane %v4258, 1
    %v4260 = vadd.f32 %v4258, %v4259
    %v4261 = vmul.f32 %v4223, %v4056
    %v4262 = vmul.f32 %v4260, %v4056
    %v4263 = vadd.f32 %v4261, 1e-05
    %v4264 = vadd.f32 %v4262, 1e-05
    %v4265 = vrsqrt.pop %v4263
    %v4266 = vrsqrt.pop %v4264
    %v4267 = vmul.f32 %v4059, %v4265
    %v4268 = vmul.f32 %v4060, %v4265
    %v4269 = vmul.f32 %v4061, %v4265
    %v4270 = vmul.f32 %v4062, %v4265
    %v4271 = vmul.f32 %v4063, %v4265
    %v4272 = vmul.f32 %v4064, %v4265
    %v4273 = vmul.f32 %v4065, %v4265
    %v4274 = vmul.f32 %v4066, %v4265
    %v4275 = vmul.f32 %v4067, %v4265
    %v4276 = vmul.f32 %v4068, %v4265
    %v4277 = vmul.f32 %v4069, %v4265
    %v4278 = vmul.f32 %v4070, %v4265
    %v4279 = vmul.f32 %v4071, %v4265
    %v4280 = vmul.f32 %v4072, %v4265
    %v4281 = vmul.f32 %v4073, %v4265
    %v4282 = vmul.f32 %v4074, %v4265
    %v4283 = vmul.f32 %v4075, %v4265
    %v4284 = vmul.f32 %v4076, %v4265
    %v4285 = vmul.f32 %v4077, %v4265
    %v4286 = vmul.f32 %v4078, %v4265
    %v4287 = vmul.f32 %v4079, %v4265
    %v4288 = vmul.f32 %v4080, %v4265
    %v4289 = vmul.f32 %v4081, %v4265
    %v4290 = vmul.f32 %v4082, %v4265
    %v4291 = vmul.f32 %v4083, %v4265
    %v4292 = vmul.f32 %v4084, %v4265
    %v4293 = vmul.f32 %v4085, %v4265
    %v4294 = vmul.f32 %v4086, %v4265
    %v4295 = vmul.f32 %v4087, %v4265
    %v4296 = vmul.f32 %v4088, %v4265
    %v4297 = vmul.f32 %v4089, %v4265
    %v4298 = vmul.f32 %v4090, %v4265
    %v4299 = vmul.f32 %v4091, %v4266
    %v4300 = vmul.f32 %v4092, %v4266
    %v4301 = vmul.f32 %v4093, %v4266
    %v4302 = vmul.f32 %v4094, %v4266
    %v4303 = vmul.f32 %v4095, %v4266
    %v4304 = vmul.f32 %v4096, %v4266
    %v4305 = vmul.f32 %v4097, %v4266
    %v4306 = vmul.f32 %v4098, %v4266
    %v4307 = vmul.f32 %v4099, %v4266
    %v4308 = vmul.f32 %v4100, %v4266
    %v4309 = vmul.f32 %v4101, %v4266
    %v4310 = vmul.f32 %v4102, %v4266
    %v4311 = vmul.f32 %v4103, %v4266
    %v4312 = vmul.f32 %v4104, %v4266
    %v4313 = vmul.f32 %v4105, %v4266
    %v4314 = vmul.f32 %v4106, %v4266
    %v4315 = vmul.f32 %v4107, %v4266
    %v4316 = vmul.f32 %v4108, %v4266
    %v4317 = vmul.f32 %v4109, %v4266
    %v4318 = vmul.f32 %v4110, %v4266
    %v4319 = vmul.f32 %v4111, %v4266
    %v4320 = vmul.f32 %v4112, %v4266
    %v4321 = vmul.f32 %v4113, %v4266
    %v4322 = vmul.f32 %v4114, %v4266
    %v4323 = vmul.f32 %v4115, %v4266
    %v4324 = vmul.f32 %v4116, %v4266
    %v4325 = vmul.f32 %v4117, %v4266
    %v4326 = vmul.f32 %v4118, %v4266
    %v4327 = vmul.f32 %v4119, %v4266
    %v4328 = vmul.f32 %v4120, %v4266
    %v4329 = vmul.f32 %v4121, %v4266
    %v4330 = vmul.f32 %v4122, %v4266
    %vm4331 = vcmp.gt.f32.partialorder %v4267, 0.0
    %vm4332 = vcmp.gt.f32.partialorder %v4268, 0.0
    %vm4333 = vcmp.gt.f32.partialorder %v4269, 0.0
    %vm4334 = vcmp.gt.f32.partialorder %v4270, 0.0
    %vm4335 = vcmp.gt.f32.partialorder %v4271, 0.0
    %vm4336 = vcmp.gt.f32.partialorder %v4272, 0.0
    %vm4337 = vcmp.gt.f32.partialorder %v4273, 0.0
    %vm4338 = vcmp.gt.f32.partialorder %v4274, 0.0
    %vm4339 = vcmp.gt.f32.partialorder %v4275, 0.0
    %vm4340 = vcmp.gt.f32.partialorder %v4276, 0.0
    %vm4341 = vcmp.gt.f32.partialorder %v4277, 0.0
    %vm4342 = vcmp.gt.f32.partialorder %v4278, 0.0
    %vm4343 = vcmp.gt.f32.partialorder %v4279, 0.0
    %vm4344 = vcmp.gt.f32.partialorder %v4280, 0.0
    %vm4345 = vcmp.gt.f32.partialorder %v4281, 0.0
    %vm4346 = vcmp.gt.f32.partialorder %v4282, 0.0
    %vm4347 = vcmp.gt.f32.partialorder %v4283, 0.0
    %vm4348 = vcmp.gt.f32.partialorder %v4284, 0.0
    %vm4349 = vcmp.gt.f32.partialorder %v4285, 0.0
    %vm4350 = vcmp.gt.f32.partialorder %v4286, 0.0
    %vm4351 = vcmp.gt.f32.partialorder %v4287, 0.0
    %vm4352 = vcmp.gt.f32.partialorder %v4288, 0.0
    %vm4353 = vcmp.gt.f32.partialorder %v4289, 0.0
    %vm4354 = vcmp.gt.f32.partialorder %v4290, 0.0
    %vm4355 = vcmp.gt.f32.partialorder %v4291, 0.0
    %vm4356 = vcmp.gt.f32.partialorder %v4292, 0.0
    %vm4357 = vcmp.gt.f32.partialorder %v4293, 0.0
    %vm4358 = vcmp.gt.f32.partialorder %v4294, 0.0
    %vm4359 = vcmp.gt.f32.partialorder %v4295, 0.0
    %vm4360 = vcmp.gt.f32.partialorder %v4296, 0.0
    %vm4361 = vcmp.gt.f32.partialorder %v4297, 0.0
    %vm4362 = vcmp.gt.f32.partialorder %v4298, 0.0
    %vm4363 = vcmp.gt.f32.partialorder %v4299, 0.0
    %vm4364 = vcmp.gt.f32.partialorder %v4300, 0.0
    %vm4365 = vcmp.gt.f32.partialorder %v4301, 0.0
    %vm4366 = vcmp.gt.f32.partialorder %v4302, 0.0
    %vm4367 = vcmp.gt.f32.partialorder %v4303, 0.0
    %vm4368 = vcmp.gt.f32.partialorder %v4304, 0.0
    %vm4369 = vcmp.gt.f32.partialorder %v4305, 0.0
    %vm4370 = vcmp.gt.f32.partialorder %v4306, 0.0
    %vm4371 = vcmp.gt.f32.partialorder %v4307, 0.0
    %vm4372 = vcmp.gt.f32.partialorder %v4308, 0.0
    %vm4373 = vcmp.gt.f32.partialorder %v4309, 0.0
    %vm4374 = vcmp.gt.f32.partialorder %v4310, 0.0
    %vm4375 = vcmp.gt.f32.partialorder %v4311, 0.0
    %vm4376 = vcmp.gt.f32.partialorder %v4312, 0.0
    %vm4377 = vcmp.gt.f32.partialorder %v4313, 0.0
    %vm4378 = vcmp.gt.f32.partialorder %v4314, 0.0
    %vm4379 = vcmp.gt.f32.partialorder %v4315, 0.0
    %vm4380 = vcmp.gt.f32.partialorder %v4316, 0.0
    %vm4381 = vcmp.gt.f32.partialorder %v4317, 0.0
    %vm4382 = vcmp.gt.f32.partialorder %v4318, 0.0
    %vm4383 = vcmp.gt.f32.partialorder %v4319, 0.0
    %vm4384 = vcmp.gt.f32.partialorder %v4320, 0.0
    %vm4385 = vcmp.gt.f32.partialorder %v4321, 0.0
    %vm4386 = vcmp.gt.f32.partialorder %v4322, 0.0
    %vm4387 = vcmp.gt.f32.partialorder %v4323, 0.0
    %vm4388 = vcmp.gt.f32.partialorder %v4324, 0.0
    %vm4389 = vcmp.gt.f32.partialorder %v4325, 0.0
    %vm4390 = vcmp.gt.f32.partialorder %v4326, 0.0
    %vm4391 = vcmp.gt.f32.partialorder %v4327, 0.0
    %vm4392 = vcmp.gt.f32.partialorder %v4328, 0.0
    %vm4393 = vcmp.gt.f32.partialorder %v4329, 0.0
    %vm4394 = vcmp.gt.f32.partialorder %v4330, 0.0
    %v4395 = vmul.f32 %v4267, 0.2
    %v4396 = vmul.f32 %v4268, 0.2
    %v4397 = vmul.f32 %v4269, 0.2
    %v4398 = vmul.f32 %v4270, 0.2
    %v4399 = vmul.f32 %v4271, 0.2
    %v4400 = vmul.f32 %v4272, 0.2
    %v4401 = vmul.f32 %v4273, 0.2
    %v4402 = vmul.f32 %v4274, 0.2
    %v4403 = vmul.f32 %v4275, 0.2
    %v4404 = vmul.f32 %v4276, 0.2
    %v4405 = vmul.f32 %v4277, 0.2
    %v4406 = vmul.f32 %v4278, 0.2
    %v4407 = vmul.f32 %v4279, 0.2
    %v4408 = vmul.f32 %v4280, 0.2
    %v4409 = vmul.f32 %v4281, 0.2
    %v4410 = vmul.f32 %v4282, 0.2
    %v4411 = vmul.f32 %v4283, 0.2
    %v4412 = vmul.f32 %v4284, 0.2
    %v4413 = vmul.f32 %v4285, 0.2
    %v4414 = vmul.f32 %v4286, 0.2
    %v4415 = vmul.f32 %v4287, 0.2
    %v4416 = vmul.f32 %v4288, 0.2
    %v4417 = vmul.f32 %v4289, 0.2
    %v4418 = vmul.f32 %v4290, 0.2
    %v4419 = vmul.f32 %v4291, 0.2
    %v4420 = vmul.f32 %v4292, 0.2
    %v4421 = vmul.f32 %v4293, 0.2
    %v4422 = vmul.f32 %v4294, 0.2
    %v4423 = vmul.f32 %v4295, 0.2
    %v4424 = vmul.f32 %v4296, 0.2
    %v4425 = vmul.f32 %v4297, 0.2
    %v4426 = vmul.f32 %v4298, 0.2
    %v4427 = vmul.f32 %v4299, 0.2
    %v4428 = vmul.f32 %v4300, 0.2
    %v4429 = vmul.f32 %v4301, 0.2
    %v4430 = vmul.f32 %v4302, 0.2
    %v4431 = vmul.f32 %v4303, 0.2
    %v4432 = vmul.f32 %v4304, 0.2
    %v4433 = vmul.f32 %v4305, 0.2
    %v4434 = vmul.f32 %v4306, 0.2
    %v4435 = vmul.f32 %v4307, 0.2
    %v4436 = vmul.f32 %v4308, 0.2
    %v4437 = vmul.f32 %v4309, 0.2
    %v4438 = vmul.f32 %v4310, 0.2
    %v4439 = vmul.f32 %v4311, 0.2
    %v4440 = vmul.f32 %v4312, 0.2
    %v4441 = vmul.f32 %v4313, 0.2
    %v4442 = vmul.f32 %v4314, 0.2
    %v4443 = vmul.f32 %v4315, 0.2
    %v4444 = vmul.f32 %v4316, 0.2
    %v4445 = vmul.f32 %v4317, 0.2
    %v4446 = vmul.f32 %v4318, 0.2
    %v4447 = vmul.f32 %v4319, 0.2
    %v4448 = vmul.f32 %v4320, 0.2
    %v4449 = vmul.f32 %v4321, 0.2
    %v4450 = vmul.f32 %v4322, 0.2
    %v4451 = vmul.f32 %v4323, 0.2
    %v4452 = vmul.f32 %v4324, 0.2
    %v4453 = vmul.f32 %v4325, 0.2
    %v4454 = vmul.f32 %v4326, 0.2
    %v4455 = vmul.f32 %v4327, 0.2
    %v4456 = vmul.f32 %v4328, 0.2
    %v4457 = vmul.f32 %v4329, 0.2
    %v4458 = vmul.f32 %v4330, 0.2
    %v4459 = vsel %vm4331, %v4267, %v4395
    %v4460 = vsel %vm4332, %v4268, %v4396
    %v4461 = vsel %vm4333, %v4269, %v4397
    %v4462 = vsel %vm4334, %v4270, %v4398
    %v4463 = vsel %vm4335, %v4271, %v4399
    %v4464 = vsel %vm4336, %v4272, %v4400
    %v4465 = vsel %vm4337, %v4273, %v4401
    %v4466 = vsel %vm4338, %v4274, %v4402
    %v4467 = vsel %vm4339, %v4275, %v4403
    %v4468 = vsel %vm4340, %v4276, %v4404
    %v4469 = vsel %vm4341, %v4277, %v4405
    %v4470 = vsel %vm4342, %v4278, %v4406
    %v4471 = vsel %vm4343, %v4279, %v4407
    %v4472 = vsel %vm4344, %v4280, %v4408
    %v4473 = vsel %vm4345, %v4281, %v4409
    %v4474 = vsel %vm4346, %v4282, %v4410
    %v4475 = vsel %vm4347, %v4283, %v4411
    %v4476 = vsel %vm4348, %v4284, %v4412
    %v4477 = vsel %vm4349, %v4285, %v4413
    %v4478 = vsel %vm4350, %v4286, %v4414
    %v4479 = vsel %vm4351, %v4287, %v4415
    %v4480 = vsel %vm4352, %v4288, %v4416
    %v4481 = vsel %vm4353, %v4289, %v4417
    %v4482 = vsel %vm4354, %v4290, %v4418
    %v4483 = vsel %vm4355, %v4291, %v4419
    %v4484 = vsel %vm4356, %v4292, %v4420
    %v4485 = vsel %vm4357, %v4293, %v4421
    %v4486 = vsel %vm4358, %v4294, %v4422
    %v4487 = vsel %vm4359, %v4295, %v4423
    %v4488 = vsel %vm4360, %v4296, %v4424
    %v4489 = vsel %vm4361, %v4297, %v4425
    %v4490 = vsel %vm4362, %v4298, %v4426
    %v4491 = vsel %vm4363, %v4299, %v4427
    %v4492 = vsel %vm4364, %v4300, %v4428
    %v4493 = vsel %vm4365, %v4301, %v4429
    %v4494 = vsel %vm4366, %v4302, %v4430
    %v4495 = vsel %vm4367, %v4303, %v4431
    %v4496 = vsel %vm4368, %v4304, %v4432
    %v4497 = vsel %vm4369, %v4305, %v4433
    %v4498 = vsel %vm4370, %v4306, %v4434
    %v4499 = vsel %vm4371, %v4307, %v4435
    %v4500 = vsel %vm4372, %v4308, %v4436
    %v4501 = vsel %vm4373, %v4309, %v4437
    %v4502 = vsel %vm4374, %v4310, %v4438
    %v4503 = vsel %vm4375, %v4311, %v4439
    %v4504 = vsel %vm4376, %v4312, %v4440
    %v4505 = vsel %vm4377, %v4313, %v4441
    %v4506 = vsel %vm4378, %v4314, %v4442
    %v4507 = vsel %vm4379, %v4315, %v4443
    %v4508 = vsel %vm4380, %v4316, %v4444
    %v4509 = vsel %vm4381, %v4317, %v4445
    %v4510 = vsel %vm4382, %v4318, %v4446
    %v4511 = vsel %vm4383, %v4319, %v4447
    %v4512 = vsel %vm4384, %v4320, %v4448
    %v4513 = vsel %vm4385, %v4321, %v4449
    %v4514 = vsel %vm4386, %v4322, %v4450
    %v4515 = vsel %vm4387, %v4323, %v4451
    %v4516 = vsel %vm4388, %v4324, %v4452
    %v4517 = vsel %vm4389, %v4325, %v4453
    %v4518 = vsel %vm4390, %v4326, %v4454
    %v4519 = vsel %vm4391, %v4327, %v4455
    %v4520 = vsel %vm4392, %v4328, %v4456
    %v4521 = vsel %vm4393, %v4329, %v4457
    %v4522 = vsel %vm4394, %v4330, %v4458
    %4523 = vst [vmem:[#allocation3] sm:$0xff] %v4459
    %4524 = vst [vmem:[#allocation3 + $0x8] sm:$0xff] %v4460
    %4525 = vst [vmem:[#allocation3 + $0x10] sm:$0xff] %v4461
    %4526 = vst [vmem:[#allocation3 + $0x18] sm:$0xff] %v4462
    %4527 = vst [vmem:[#allocation3 + $0x20] sm:$0xff] %v4463
    %4528 = vst [vmem:[#allocation3 + $0x28] sm:$0xff] %v4464
    %4529 = vst [vmem:[#allocation3 + $0x30] sm:$0xff] %v4465
    %4530 = vst [vmem:[#allocation3 + $0x38] sm:$0xff] %v4466
    %4531 = vst [vmem:[#allocation3 + $0x40] sm:$0xff] %v4467
    %4532 = vst [vmem:[#allocation3 + $0x48] sm:$0xff] %v4468
    %4533 = vst [vmem:[#allocation3 + $0x50] sm:$0xff] %v4469
    %4534 = vst [vmem:[#allocation3 + $0x58] sm:$0xff] %v4470
    %4535 = vst [vmem:[#allocation3 + $0x60] sm:$0xff] %v4471
    %4536 = vst [vmem:[#allocation3 + $0x68] sm:$0xff] %v4472
    %4537 = vst [vmem:[#allocation3 + $0x70] sm:$0xff] %v4473
    %4538 = vst [vmem:[#allocation3 + $0x78] sm:$0xff] %v4474
    %4539 = vst [vmem:[#allocation3 + $0x80] sm:$0xff] %v4475
    %4540 = vst [vmem:[#allocation3 + $0x88] sm:$0xff] %v4476
    %4541 = vst [vmem:[#allocation3 + $0x90] sm:$0xff] %v4477
    %4542 = vst [vmem:[#allocation3 + $0x98] sm:$0xff] %v4478
    %4543 = vst [vmem:[#allocation3 + $0xa0] sm:$0xff] %v4479
    %4544 = vst [vmem:[#allocation3 + $0xa8] sm:$0xff] %v4480
    %4545 = vst [vmem:[#allocation3 + $0xb0] sm:$0xff] %v4481
    %4546 = vst [vmem:[#allocation3 + $0xb8] sm:$0xff] %v4482
    %4547 = vst [vmem:[#allocation3 + $0xc0] sm:$0xff] %v4483
    %4548 = vst [vmem:[#allocation3 + $0xc8] sm:$0xff] %v4484
    %4549 = vst [vmem:[#allocation3 + $0xd0] sm:$0xff] %v4485
    %4550 = vst [vmem:[#allocation3 + $0xd8] sm:$0xff] %v4486
    %4551 = vst [vmem:[#allocation3 + $0xe0] sm:$0xff] %v4487
    %4552 = vst [vmem:[#allocation3 + $0xe8] sm:$0xff] %v4488
    %4553 = vst [vmem:[#allocation3 + $0xf0] sm:$0xff] %v4489
    %4554 = vst [vmem:[#allocation3 + $0xf8] sm:$0xff] %v4490
    %4555 = vst [vmem:[#allocation3 + $0x100] sm:$0xff] %v4491
    %4556 = vst [vmem:[#allocation3 + $0x108] sm:$0xff] %v4492
    %4557 = vst [vmem:[#allocation3 + $0x110] sm:$0xff] %v4493
    %4558 = vst [vmem:[#allocation3 + $0x118] sm:$0xff] %v4494
    %4559 = vst [vmem:[#allocation3 + $0x120] sm:$0xff] %v4495
    %4560 = vst [vmem:[#allocation3 + $0x128] sm:$0xff] %v4496
    %4561 = vst [vmem:[#allocation3 + $0x130] sm:$0xff] %v4497
    %4562 = vst [vmem:[#allocation3 + $0x138] sm:$0xff] %v4498
    %4563 = vst [vmem:[#allocation3 + $0x140] sm:$0xff] %v4499
    %4564 = vst [vmem:[#allocation3 + $0x148] sm:$0xff] %v4500
    %4565 = vst [vmem:[#allocation3 + $0x150] sm:$0xff] %v4501
    %4566 = vst [vmem:[#allocation3 + $0x158] sm:$0xff] %v4502
    %4567 = vst [vmem:[#allocation3 + $0x160] sm:$0xff] %v4503
    %4568 = vst [vmem:[#allocation3 + $0x168] sm:$0xff] %v4504
    %4569 = vst [vmem:[#allocation3 + $0x170] sm:$0xff] %v4505
    %4570 = vst [vmem:[#allocation3 + $0x178] sm:$0xff] %v4506
    %4571 = vst [vmem:[#allocation3 + $0x180] sm:$0xff] %v4507
    %4572 = vst [vmem:[#allocation3 + $0x188] sm:$0xff] %v4508
    %4573 = vst [vmem:[#allocation3 + $0x190] sm:$0xff] %v4509
    %4574 = vst [vmem:[#allocation3 + $0x198] sm:$0xff] %v4510
    %4575 = vst [vmem:[#allocation3 + $0x1a0] sm:$0xff] %v4511
    %4576 = vst [vmem:[#allocation3 + $0x1a8] sm:$0xff] %v4512
    %4577 = vst [vmem:[#allocation3 + $0x1b0] sm:$0xff] %v4513
    %4578 = vst [vmem:[#allocation3 + $0x1b8] sm:$0xff] %v4514
    %4579 = vst [vmem:[#allocation3 + $0x1c0] sm:$0xff] %v4515
    %4580 = vst [vmem:[#allocation3 + $0x1c8] sm:$0xff] %v4516
    %4581 = vst [vmem:[#allocation3 + $0x1d0] sm:$0xff] %v4517
    %4582 = vst [vmem:[#allocation3 + $0x1d8] sm:$0xff] %v4518
    %4583 = vst [vmem:[#allocation3 + $0x1e0] sm:$0xff] %v4519
    %4584 = vst [vmem:[#allocation3 + $0x1e8] sm:$0xff] %v4520
    %4585 = vst [vmem:[#allocation3 + $0x1f0] sm:$0xff] %v4521
    %4586 = vst [vmem:[#allocation3 + $0x1f8] sm:$0xff] %v4522
    // Predicated region
    $region10: #{tpu_custom_call.1} parent=1 // pred_check
      _
    $region11: #{tpu_custom_call.1} parent=1 // pred_check_branch
      %4588 = sbr.rel (0) target = $region13
    $region12: #{tpu_custom_call.1} parent=1 // pred_region
      %s4590 = ssub.s32 8192, 8192
      %4591 = vsyncadd [#allocation4], %s4590
      %s4592 = sshll.u32 [#allocation3], 4
      %s4593 = int_to_ptr.vmem [resolvable:$true] %s4592
      %4598 = dma.vmem_to_hbm [thread:$0]  %s4593, 8192, %s2, [#allocation4], 128, 128, 8
    $region13: #{tpu_custom_call.1} parent=1 // pred_fallthru
      _
    // Predicated region
    $region14: #{tpu_custom_call.1} parent=1 // pred_check
      _
    $region15: #{tpu_custom_call.1} parent=1 // pred_check_branch
      %4600 = sbr.rel (0) target = $region17
    $region16: #{tpu_custom_call.1} parent=1 // pred_region
      %4601 = dma.done [#allocation4], 8192
    $region17: #{tpu_custom_call.1} parent=1 // pred_fallthru
      _
    %4602 = vsyncpa [#allocation4], 1

</llo_original>
